<compile_context>
chip_gen: v7x
topology: tpu7x:2x2x1
jax: 0.10.0
libtpu: 0.0.40
codegen_flags: <defaults>
</compile_context>

<pallas_src>
import functools

import jax
import jax.numpy as jnp
from jax.experimental import pallas as pl
from jax.experimental.pallas import tpu as pltpu


# ----------------------------------------------------------------------------
# Fused Pallas kernel: conv votes (MXU) + dynamic routing, lane-dense layout
# ----------------------------------------------------------------------------
def _capsule_votes_routing_kernel(a_ref, wt_ref, bias_ref, out_ref, *, routings):
    # a_ref   : (in_cap, K, tile_n)  bf16   im2col patches, spatial on lanes
    # wt_ref  : (C*A, K)             bf16   conv weight, already transposed
    # bias_ref: (C, A)               f32    routing bias (the module's self.b)
    # out_ref : (C*A, tile_n)        f32    squashed activation (lane-dense)
    in_cap, _, tile_n = a_ref.shape
    num_cap, num_atom = bias_ref.shape
    ca = num_cap * num_atom

    wt = wt_ref[...]
    # Votes per input capsule: (C*A, K) @ (K, tile_n) on the MXU, f32 accum.
    votes = []
    for k in range(in_cap):
        vk = jnp.dot(wt, a_ref[k], preferred_element_type=jnp.float32)
        votes.append(vk.reshape(num_cap, num_atom, tile_n))          # (C, A, T)

    bias = bias_ref[...][:, :, None]                                 # (C, A, 1)
    logits = [jnp.zeros((num_cap, tile_n), jnp.float32) for _ in range(in_cap)]

    act = jnp.zeros((num_cap, num_atom, tile_n), jnp.float32)
    for it in range(routings):
        # softmax over the output-capsule axis, per input capsule, then
        # route-weighted vote sum  (exactly the PyTorch routing loop)
        pre = jnp.zeros((num_cap, num_atom, tile_n), jnp.float32)
        for k in range(in_cap):
            l = logits[k]                                            # (C, T)
            m = jnp.max(l, axis=0, keepdims=True)
            e = jnp.exp(l - m)
            r = e * pl.reciprocal(jnp.sum(e, axis=0, keepdims=True),
                                  approx=True)                       # (C, T)
            pre = pre + r[:, None, :] * votes[k]                     # (C, A, T)
        pre = pre + bias
        # squash over the atom axis:  pre/norm * ns/(1+ns)  ==  pre*norm/(1+ns)
        ns = jnp.sum(pre * pre, axis=1, keepdims=True)               # (C, 1, T)
        norm = jnp.sqrt(ns)
        act = pre * (norm * pl.reciprocal(1.0 + ns, approx=True))
        if it < routings - 1:
            for k in range(in_cap):
                # agreement: sum over atoms
                logits[k] = logits[k] + jnp.sum(votes[k] * act, axis=1)

    out_ref[...] = act.reshape(ca, tile_n)


# ----------------------------------------------------------------------------
# JAX glue: im2col patch extraction (pure reshapes/slices)
# ----------------------------------------------------------------------------
def _im2col_3d(x, ksizes, stride, padding, dilation):
    """x: (N, Cin, D, H, W) -> (N, Cin*K^3, od*oh*ow), Cin-major feature order."""
    n, cin, d, h, w = x.shape
    kd, kh, kw = ksizes
    xp = jnp.pad(x, ((0, 0), (0, 0),
                     (padding, padding), (padding, padding), (padding, padding)))
    od = (d + 2 * padding - dilation * (kd - 1) - 1) // stride + 1
    oh = (h + 2 * padding - dilation * (kh - 1) - 1) // stride + 1
    ow = (w + 2 * padding - dilation * (kw - 1) - 1) // stride + 1

    cols = []
    for id_ in range(kd):
        for ih in range(kh):
            for iw in range(kw):
                d0, h0, w0 = id_ * dilation, ih * dilation, iw * dilation
                cols.append(xp[:, :,
                               d0:d0 + (od - 1) * stride + 1:stride,
                               h0:h0 + (oh - 1) * stride + 1:stride,
                               w0:w0 + (ow - 1) * stride + 1:stride])
    col = jnp.stack(cols, axis=2)                       # (N, Cin, K^3, od, oh, ow)
    col = col.reshape(n, cin * kd * kh * kw, od * oh * ow)
    return col, (od, oh, ow)


def _round_up(x, m):
    return (x + m - 1) // m * m


# ----------------------------------------------------------------------------
# ConvCapsuleLayer forward
# ----------------------------------------------------------------------------
def conv_capsule_layer_forward(x, w_conv, b_param, *, strides=1, padding=0,
                               dilation=1, routings=3, max_tile_n=512):
    """x: (B, D, H, W, in_cap, in_atom); w_conv: (C*A, in_atom, k, k, k);
    b_param: (C, A).  Returns (B, od, oh, ow, C, A)."""
    b, d, h, w, in_cap, in_atom = x.shape
    ca_out, cin, kd, kh, kw = w_conv.shape
    num_cap, num_atom = b_param.shape
    assert cin == in_atom and ca_out == num_cap * num_atom
    feat_k = in_atom * kd * kh * kw
    ca = num_cap * num_atom

    # PyTorch: permute(4,0,5,1,2,3).view(B*in_cap, in_atom, D, H, W)
    # (cap-major flatten of the leading dim — reproduced exactly)
    inp_t = jnp.transpose(x, (4, 0, 5, 1, 2, 3)).reshape(
        in_cap * b, in_atom, d, h, w)

    patches, (od, oh, ow) = _im2col_3d(
        inp_t, (kd, kh, kw), strides, padding, dilation)   # (in_cap*B, K, S)
    spatial = od * oh * ow

    # PyTorch then does .view(batch, in_cap, ...) on the cap-major flattened
    # dim — reproduce that reinterpretation exactly.
    patches = patches.reshape(b, in_cap, feat_k, spatial)
    # Lane-dense layout for the kernel: (in_cap, K, B*S) with B*S last.
    patches_t = jnp.transpose(patches, (1, 2, 0, 3)).reshape(
        in_cap, feat_k, b * spatial)

    n_total = b * spatial
    tile_n = min(max_tile_n, _round_up(n_total, 128))       # multiple of 128
    n_pad = _round_up(n_total, tile_n)
    if n_pad != n_total:
        patches_t = jnp.pad(patches_t, ((0, 0), (0, 0), (0, n_pad - n_total)))

    # bf16 MXU operands, f32 accumulation inside the kernel.
    a_bf = patches_t.astype(jnp.bfloat16)
    wt_bf = w_conv.reshape(ca, feat_k).astype(jnp.bfloat16)
    bias = b_param.astype(jnp.float32)

    kern = functools.partial(_capsule_votes_routing_kernel, routings=routings)
    act = pl.pallas_call(
        kern,
        out_shape=jax.ShapeDtypeStruct((ca, n_pad), jnp.float32),
        grid=(n_pad // tile_n,),
        in_specs=[
            pl.BlockSpec((in_cap, feat_k, tile_n), lambda i: (0, 0, i)),
            pl.BlockSpec((ca, feat_k), lambda i: (0, 0)),
            pl.BlockSpec((num_cap, num_atom), lambda i: (0, 0)),
        ],
        out_specs=pl.BlockSpec((ca, tile_n), lambda i: (0, i)),
        compiler_params=pltpu.CompilerParams(
            dimension_semantics=("parallel",)),
    )(a_bf, wt_bf, bias)

    act = act[:, :n_total]                                   # (C*A, B*S)
    act = jnp.transpose(act, (1, 0)).reshape(b, od, oh, ow, num_cap, num_atom)
    return act


# ----------------------------------------------------------------------------
# Main
# ----------------------------------------------------------------------------
if __name__ == "__main__":
    # ConvCapsuleLayer hyper-parameters
    INPUT_NUM_CAP, INPUT_NUM_ATOM = 2, 8
    NUM_CAP, NUM_ATOM = 4, 8
    KERNEL, STRIDE, PAD, DIL, ROUTINGS = 3, 1, 1, 1, 3
    B, D, H, W = 2, 8, 8, 8

    key = jax.random.PRNGKey(0)
    k_x, k_w = jax.random.split(key)

    # Conv3d weight (kaiming normal, no bias) and routing bias (0.1 fill)
    fan_in = INPUT_NUM_ATOM * KERNEL ** 3
    w_conv = (jax.random.normal(
        k_w, (NUM_CAP * NUM_ATOM, INPUT_NUM_ATOM, KERNEL, KERNEL, KERNEL),
        dtype=jnp.float32) * jnp.sqrt(2.0 / fan_in))
    b_param = jnp.full((NUM_CAP, NUM_ATOM), 0.1, dtype=jnp.float32)

    x = jax.random.normal(
        k_x, (B, D, H, W, INPUT_NUM_CAP, INPUT_NUM_ATOM), dtype=jnp.float32)

    fwd = jax.jit(functools.partial(
        conv_capsule_layer_forward,
        strides=STRIDE, padding=PAD, dilation=DIL, routings=ROUTINGS))

    out = jax.block_until_ready(fwd(x, w_conv, b_param))

    assert out.shape == (B, D, H, W, NUM_CAP, NUM_ATOM), out.shape
    assert bool(jnp.all(jnp.isfinite(out)))
    print("KERNEL_OK")
</pallas_src>

<mosaic_0001>
module attributes {stable_mosaic.version = 11 : i64} {
  func.func @_capsule_votes_routing_kernel(%arg0: i32, %arg1: memref<2x216x512xbf16, #tpu.memory_space<vmem>>, %arg2: memref<32x216xbf16, #tpu.memory_space<vmem>>, %arg3: memref<4x8xf32, #tpu.memory_space<vmem>>, %arg4: memref<32x512xf32, #tpu.memory_space<vmem>>) attributes {dimension_semantics = [#tpu.dimension_semantics<parallel>], iteration_bounds = array<i64: 2>, scalar_prefetch = 0 : i64, scratch_operands = 0 : i64, tpu.core_type = #tpu.core_type<tc>, window_params = [{transform_indices = @transform_0, window_bounds = array<i64: 2, 216, 512>}, {pipeline_mode = #tpu.pipeline_mode<synchronous>, transform_indices = @transform_1, window_bounds = array<i64: 32, 216>}, {pipeline_mode = #tpu.pipeline_mode<synchronous>, transform_indices = @transform_2, window_bounds = array<i64: 4, 8>}, {transform_indices = @transform_3, window_bounds = array<i64: 32, 512>}]} {
    %c0 = arith.constant 0 : index
    %c0_0 = arith.constant 0 : index
    %0 = vector.load %arg2[%c0, %c0_0] : memref<32x216xbf16, #tpu.memory_space<vmem>>, vector<32x216xbf16>
    %c0_1 = arith.constant 0 : index
    %c0_2 = arith.constant 0 : index
    %c0_3 = arith.constant 0 : index
    %1 = vector.load %arg1[%c0_1, %c0_2, %c0_3] : memref<2x216x512xbf16, #tpu.memory_space<vmem>>, vector<1x216x512xbf16>
    %2 = vector.shape_cast %1 : vector<1x216x512xbf16> to vector<216x512xbf16>
    %cst = arith.constant dense<0.000000e+00> : vector<32x512xf32>
    %3 = tpu.matmul %0, %2, %cst {dimension_numbers = #tpu.dot_dimension_numbers<[1], [0], [0], [1], [0, 0, 1, 1], [], []>} : vector<32x216xbf16>, vector<216x512xbf16>, vector<32x512xf32> -> vector<32x512xf32>
    %4 = vector.shape_cast %3 : vector<32x512xf32> to vector<4x8x512xf32>
    %c1 = arith.constant 1 : index
    %c0_4 = arith.constant 0 : index
    %c0_5 = arith.constant 0 : index
    %5 = vector.load %arg1[%c1, %c0_4, %c0_5] : memref<2x216x512xbf16, #tpu.memory_space<vmem>>, vector<1x216x512xbf16>
    %6 = vector.shape_cast %5 : vector<1x216x512xbf16> to vector<216x512xbf16>
    %cst_6 = arith.constant dense<0.000000e+00> : vector<32x512xf32>
    %7 = tpu.matmul %0, %6, %cst_6 {dimension_numbers = #tpu.dot_dimension_numbers<[1], [0], [0], [1], [0, 0, 1, 1], [], []>} : vector<32x216xbf16>, vector<216x512xbf16>, vector<32x512xf32> -> vector<32x512xf32>
    %8 = vector.shape_cast %7 : vector<32x512xf32> to vector<4x8x512xf32>
    %c0_7 = arith.constant 0 : index
    %c0_8 = arith.constant 0 : index
    %9 = vector.load %arg3[%c0_7, %c0_8] : memref<4x8xf32, #tpu.memory_space<vmem>>, vector<4x8xf32>
    %10 = vector.shape_cast %9 : vector<4x8xf32> to vector<4x8x1xf32>
    %cst_9 = arith.constant 0.000000e+00 : f32
    %11 = vector.broadcast %cst_9 : f32 to vector<4x512xf32>
    %cst_10 = arith.constant 0.000000e+00 : f32
    %12 = vector.broadcast %cst_10 : f32 to vector<4x512xf32>
    %cst_11 = arith.constant 0.000000e+00 : f32
    %13 = vector.broadcast %cst_11 : f32 to vector<4x8x512xf32>
    %cst_12 = arith.constant dense<0xFF800000> : vector<512xf32>
    %14 = vector.multi_reduction <maximumf>, %11, %cst_12 [0] : vector<4x512xf32> to vector<512xf32>
    %15 = vector.shape_cast %14 : vector<512xf32> to vector<1x512xf32>
    %16 = vector.broadcast %15 : vector<1x512xf32> to vector<4x512xf32>
    %17 = arith.subf %11, %16 : vector<4x512xf32>
    %18 = math.exp %17 : vector<4x512xf32>
    %cst_13 = arith.constant dense<0.000000e+00> : vector<512xf32>
    %19 = vector.multi_reduction <add>, %18, %cst_13 [0] : vector<4x512xf32> to vector<512xf32>
    %20 = vector.shape_cast %19 : vector<512xf32> to vector<1x512xf32>
    %21 = tpu.reciprocal %20 {approx = true} : vector<1x512xf32> -> vector<1x512xf32>
    %22 = vector.broadcast %21 : vector<1x512xf32> to vector<4x512xf32>
    %23 = arith.mulf %18, %22 : vector<4x512xf32>
    %24 = vector.shape_cast %23 : vector<4x512xf32> to vector<4x1x512xf32>
    %25 = vector.broadcast %24 : vector<4x1x512xf32> to vector<4x8x512xf32>
    %26 = arith.mulf %25, %4 : vector<4x8x512xf32>
    %27 = arith.addf %13, %26 : vector<4x8x512xf32>
    %cst_14 = arith.constant dense<0xFF800000> : vector<512xf32>
    %28 = vector.multi_reduction <maximumf>, %12, %cst_14 [0] : vector<4x512xf32> to vector<512xf32>
    %29 = vector.shape_cast %28 : vector<512xf32> to vector<1x512xf32>
    %30 = vector.broadcast %29 : vector<1x512xf32> to vector<4x512xf32>
    %31 = arith.subf %12, %30 : vector<4x512xf32>
    %32 = math.exp %31 : vector<4x512xf32>
    %cst_15 = arith.constant dense<0.000000e+00> : vector<512xf32>
    %33 = vector.multi_reduction <add>, %32, %cst_15 [0] : vector<4x512xf32> to vector<512xf32>
    %34 = vector.shape_cast %33 : vector<512xf32> to vector<1x512xf32>
    %35 = tpu.reciprocal %34 {approx = true} : vector<1x512xf32> -> vector<1x512xf32>
    %36 = vector.broadcast %35 : vector<1x512xf32> to vector<4x512xf32>
    %37 = arith.mulf %32, %36 : vector<4x512xf32>
    %38 = vector.shape_cast %37 : vector<4x512xf32> to vector<4x1x512xf32>
    %39 = vector.broadcast %38 : vector<4x1x512xf32> to vector<4x8x512xf32>
    %40 = arith.mulf %39, %8 : vector<4x8x512xf32>
    %41 = arith.addf %27, %40 : vector<4x8x512xf32>
    %42 = vector.broadcast %10 : vector<4x8x1xf32> to vector<4x8x512xf32>
    %43 = arith.addf %41, %42 : vector<4x8x512xf32>
    %44 = arith.mulf %43, %43 : vector<4x8x512xf32>
    %cst_16 = arith.constant dense<0.000000e+00> : vector<4x512xf32>
    %45 = vector.multi_reduction <add>, %44, %cst_16 [1] : vector<4x8x512xf32> to vector<4x512xf32>
    %46 = vector.shape_cast %45 : vector<4x512xf32> to vector<4x1x512xf32>
    %47 = math.sqrt %46 : vector<4x1x512xf32>
    %cst_17 = arith.constant 1.000000e+00 : f32
    %48 = vector.broadcast %cst_17 : f32 to vector<4x1x512xf32>
    %49 = arith.addf %48, %46 : vector<4x1x512xf32>
    %50 = tpu.reciprocal %49 {approx = true} : vector<4x1x512xf32> -> vector<4x1x512xf32>
    %51 = arith.mulf %47, %50 : vector<4x1x512xf32>
    %52 = vector.broadcast %51 : vector<4x1x512xf32> to vector<4x8x512xf32>
    %53 = arith.mulf %43, %52 : vector<4x8x512xf32>
    %54 = arith.mulf %4, %53 : vector<4x8x512xf32>
    %cst_18 = arith.constant dense<0.000000e+00> : vector<4x512xf32>
    %55 = vector.multi_reduction <add>, %54, %cst_18 [1] : vector<4x8x512xf32> to vector<4x512xf32>
    %56 = arith.addf %11, %55 : vector<4x512xf32>
    %57 = arith.mulf %8, %53 : vector<4x8x512xf32>
    %cst_19 = arith.constant dense<0.000000e+00> : vector<4x512xf32>
    %58 = vector.multi_reduction <add>, %57, %cst_19 [1] : vector<4x8x512xf32> to vector<4x512xf32>
    %59 = arith.addf %12, %58 : vector<4x512xf32>
    %cst_20 = arith.constant 0.000000e+00 : f32
    %60 = vector.broadcast %cst_20 : f32 to vector<4x8x512xf32>
    %cst_21 = arith.constant dense<0xFF800000> : vector<512xf32>
    %61 = vector.multi_reduction <maximumf>, %56, %cst_21 [0] : vector<4x512xf32> to vector<512xf32>
    %62 = vector.shape_cast %61 : vector<512xf32> to vector<1x512xf32>
    %63 = vector.broadcast %62 : vector<1x512xf32> to vector<4x512xf32>
    %64 = arith.subf %56, %63 : vector<4x512xf32>
    %65 = math.exp %64 : vector<4x512xf32>
    %cst_22 = arith.constant dense<0.000000e+00> : vector<512xf32>
    %66 = vector.multi_reduction <add>, %65, %cst_22 [0] : vector<4x512xf32> to vector<512xf32>
    %67 = vector.shape_cast %66 : vector<512xf32> to vector<1x512xf32>
    %68 = tpu.reciprocal %67 {approx = true} : vector<1x512xf32> -> vector<1x512xf32>
    %69 = vector.broadcast %68 : vector<1x512xf32> to vector<4x512xf32>
    %70 = arith.mulf %65, %69 : vector<4x512xf32>
    %71 = vector.shape_cast %70 : vector<4x512xf32> to vector<4x1x512xf32>
    %72 = vector.broadcast %71 : vector<4x1x512xf32> to vector<4x8x512xf32>
    %73 = arith.mulf %72, %4 : vector<4x8x512xf32>
    %74 = arith.addf %60, %73 : vector<4x8x512xf32>
    %cst_23 = arith.constant dense<0xFF800000> : vector<512xf32>
    %75 = vector.multi_reduction <maximumf>, %59, %cst_23 [0] : vector<4x512xf32> to vector<512xf32>
    %76 = vector.shape_cast %75 : vector<512xf32> to vector<1x512xf32>
    %77 = vector.broadcast %76 : vector<1x512xf32> to vector<4x512xf32>
    %78 = arith.subf %59, %77 : vector<4x512xf32>
    %79 = math.exp %78 : vector<4x512xf32>
    %cst_24 = arith.constant dense<0.000000e+00> : vector<512xf32>
    %80 = vector.multi_reduction <add>, %79, %cst_24 [0] : vector<4x512xf32> to vector<512xf32>
    %81 = vector.shape_cast %80 : vector<512xf32> to vector<1x512xf32>
    %82 = tpu.reciprocal %81 {approx = true} : vector<1x512xf32> -> vector<1x512xf32>
    %83 = vector.broadcast %82 : vector<1x512xf32> to vector<4x512xf32>
    %84 = arith.mulf %79, %83 : vector<4x512xf32>
    %85 = vector.shape_cast %84 : vector<4x512xf32> to vector<4x1x512xf32>
    %86 = vector.broadcast %85 : vector<4x1x512xf32> to vector<4x8x512xf32>
    %87 = arith.mulf %86, %8 : vector<4x8x512xf32>
    %88 = arith.addf %74, %87 : vector<4x8x512xf32>
    %89 = vector.broadcast %10 : vector<4x8x1xf32> to vector<4x8x512xf32>
    %90 = arith.addf %88, %89 : vector<4x8x512xf32>
    %91 = arith.mulf %90, %90 : vector<4x8x512xf32>
    %cst_25 = arith.constant dense<0.000000e+00> : vector<4x512xf32>
    %92 = vector.multi_reduction <add>, %91, %cst_25 [1] : vector<4x8x512xf32> to vector<4x512xf32>
    %93 = vector.shape_cast %92 : vector<4x512xf32> to vector<4x1x512xf32>
    %94 = math.sqrt %93 : vector<4x1x512xf32>
    %cst_26 = arith.constant 1.000000e+00 : f32
    %95 = vector.broadcast %cst_26 : f32 to vector<4x1x512xf32>
    %96 = arith.addf %95, %93 : vector<4x1x512xf32>
    %97 = tpu.reciprocal %96 {approx = true} : vector<4x1x512xf32> -> vector<4x1x512xf32>
    %98 = arith.mulf %94, %97 : vector<4x1x512xf32>
    %99 = vector.broadcast %98 : vector<4x1x512xf32> to vector<4x8x512xf32>
    %100 = arith.mulf %90, %99 : vector<4x8x512xf32>
    %101 = arith.mulf %4, %100 : vector<4x8x512xf32>
    %cst_27 = arith.constant dense<0.000000e+00> : vector<4x512xf32>
    %102 = vector.multi_reduction <add>, %101, %cst_27 [1] : vector<4x8x512xf32> to vector<4x512xf32>
    %103 = arith.addf %56, %102 : vector<4x512xf32>
    %104 = arith.mulf %8, %100 : vector<4x8x512xf32>
    %cst_28 = arith.constant dense<0.000000e+00> : vector<4x512xf32>
    %105 = vector.multi_reduction <add>, %104, %cst_28 [1] : vector<4x8x512xf32> to vector<4x512xf32>
    %106 = arith.addf %59, %105 : vector<4x512xf32>
    %cst_29 = arith.constant 0.000000e+00 : f32
    %107 = vector.broadcast %cst_29 : f32 to vector<4x8x512xf32>
    %cst_30 = arith.constant dense<0xFF800000> : vector<512xf32>
    %108 = vector.multi_reduction <maximumf>, %103, %cst_30 [0] : vector<4x512xf32> to vector<512xf32>
    %109 = vector.shape_cast %108 : vector<512xf32> to vector<1x512xf32>
    %110 = vector.broadcast %109 : vector<1x512xf32> to vector<4x512xf32>
    %111 = arith.subf %103, %110 : vector<4x512xf32>
    %112 = math.exp %111 : vector<4x512xf32>
    %cst_31 = arith.constant dense<0.000000e+00> : vector<512xf32>
    %113 = vector.multi_reduction <add>, %112, %cst_31 [0] : vector<4x512xf32> to vector<512xf32>
    %114 = vector.shape_cast %113 : vector<512xf32> to vector<1x512xf32>
    %115 = tpu.reciprocal %114 {approx = true} : vector<1x512xf32> -> vector<1x512xf32>
    %116 = vector.broadcast %115 : vector<1x512xf32> to vector<4x512xf32>
    %117 = arith.mulf %112, %116 : vector<4x512xf32>
    %118 = vector.shape_cast %117 : vector<4x512xf32> to vector<4x1x512xf32>
    %119 = vector.broadcast %118 : vector<4x1x512xf32> to vector<4x8x512xf32>
    %120 = arith.mulf %119, %4 : vector<4x8x512xf32>
    %121 = arith.addf %107, %120 : vector<4x8x512xf32>
    %cst_32 = arith.constant dense<0xFF800000> : vector<512xf32>
    %122 = vector.multi_reduction <maximumf>, %106, %cst_32 [0] : vector<4x512xf32> to vector<512xf32>
    %123 = vector.shape_cast %122 : vector<512xf32> to vector<1x512xf32>
    %124 = vector.broadcast %123 : vector<1x512xf32> to vector<4x512xf32>
    %125 = arith.subf %106, %124 : vector<4x512xf32>
    %126 = math.exp %125 : vector<4x512xf32>
    %cst_33 = arith.constant dense<0.000000e+00> : vector<512xf32>
    %127 = vector.multi_reduction <add>, %126, %cst_33 [0] : vector<4x512xf32> to vector<512xf32>
    %128 = vector.shape_cast %127 : vector<512xf32> to vector<1x512xf32>
    %129 = tpu.reciprocal %128 {approx = true} : vector<1x512xf32> -> vector<1x512xf32>
    %130 = vector.broadcast %129 : vector<1x512xf32> to vector<4x512xf32>
    %131 = arith.mulf %126, %130 : vector<4x512xf32>
    %132 = vector.shape_cast %131 : vector<4x512xf32> to vector<4x1x512xf32>
    %133 = vector.broadcast %132 : vector<4x1x512xf32> to vector<4x8x512xf32>
    %134 = arith.mulf %133, %8 : vector<4x8x512xf32>
    %135 = arith.addf %121, %134 : vector<4x8x512xf32>
    %136 = vector.broadcast %10 : vector<4x8x1xf32> to vector<4x8x512xf32>
    %137 = arith.addf %135, %136 : vector<4x8x512xf32>
    %138 = arith.mulf %137, %137 : vector<4x8x512xf32>
    %cst_34 = arith.constant dense<0.000000e+00> : vector<4x512xf32>
    %139 = vector.multi_reduction <add>, %138, %cst_34 [1] : vector<4x8x512xf32> to vector<4x512xf32>
    %140 = vector.shape_cast %139 : vector<4x512xf32> to vector<4x1x512xf32>
    %141 = math.sqrt %140 : vector<4x1x512xf32>
    %cst_35 = arith.constant 1.000000e+00 : f32
    %142 = vector.broadcast %cst_35 : f32 to vector<4x1x512xf32>
    %143 = arith.addf %142, %140 : vector<4x1x512xf32>
    %144 = tpu.reciprocal %143 {approx = true} : vector<4x1x512xf32> -> vector<4x1x512xf32>
    %145 = arith.mulf %141, %144 : vector<4x1x512xf32>
    %146 = vector.broadcast %145 : vector<4x1x512xf32> to vector<4x8x512xf32>
    %147 = arith.mulf %137, %146 : vector<4x8x512xf32>
    %148 = vector.shape_cast %147 : vector<4x8x512xf32> to vector<32x512xf32>
    %c0_36 = arith.constant 0 : index
    %c0_37 = arith.constant 0 : index
    %149 = vector.load %arg4[%c0_36, %c0_37] : memref<32x512xf32, #tpu.memory_space<vmem>>, vector<32x512xf32>
    tpu.vector_store %arg4[%c0_36, %c0_37], %148 {strides = array<i32>} : memref<32x512xf32, #tpu.memory_space<vmem>>, vector<32x512xf32>,
    return
  }
  func.func @transform_0(%arg0: i32) -> (i32, i32, i32) {
    %c0_i32 = arith.constant 0 : i32
    %c0_i32_0 = arith.constant 0 : i32
    %c0_i32_1 = arith.constant 0 : i32
    return %c0_i32, %c0_i32_0, %arg0 : i32, i32, i32
  }
  func.func @transform_1(%arg0: i32) -> (i32, i32) {
    %c0_i32 = arith.constant 0 : i32
    %c0_i32_0 = arith.constant 0 : i32
    %c0_i32_1 = arith.constant 0 : i32
    return %c0_i32, %c0_i32_0 : i32, i32
  }
  func.func @transform_2(%arg0: i32) -> (i32, i32) {
    %c0_i32 = arith.constant 0 : i32
    %c0_i32_0 = arith.constant 0 : i32
    %c0_i32_1 = arith.constant 0 : i32
    return %c0_i32, %c0_i32_0 : i32, i32
  }
  func.func @transform_3(%arg0: i32) -> (i32, i32) {
    %c0_i32 = arith.constant 0 : i32
    %c0_i32_0 = arith.constant 0 : i32
    return %c0_i32, %arg0 : i32, i32
  }
}

</mosaic_0001>

<llo_original>
// kernel: conv_capsule_layer_forward.1
$region0: #{conv_capsule_layer_forward.1}
  #allocation0 [shape = 'u32[]', space=smem, size = 0x4, offset = 0x4, fixed_abs, tag = 'smem constant byte address 0x4 - core index']
  #allocation1 [shape = 'u32[144,128]{1,0:T(1,128)}', space=vmem, size = 0x12000, scoped, tag = 'internal scratch']
  %s0 = inlined_call_operand.vmem [shape: bf16[2,216,1024], index: 0, kind: input, shape index: {}]
  %s1 = inlined_call_operand.vmem [shape: bf16[32,216], index: 1, kind: input, shape index: {}]
  %s2 = inlined_call_operand.vmem [shape: f32[4,8], index: 2, kind: input, shape index: {}]
  %s3 = inlined_call_operand.vmem [shape: f32[32,1024], index: 3, kind: output, shape index: {}]
  %s4 = sld [smem:[#allocation0]]
  $region87: #{conv_capsule_layer_forward.1} parent=0
    _
  %s6 = ssub.s32 1, %s4
  %s7 = scalar_select 0, %s6, %s4
  $region1: #{conv_capsule_layer_forward.1} parent=0
    #allocation2 [shape = 'u8[884736]{0}', space=vmem, size = 0xd8000, scoped, tag = 'input window, operand 0']
    #allocation3 [shape = 'u8[131072]{0}', space=vmem, size = 0x20000, scoped, tag = 'output window, operand 0']
    loop: start=0, step=1, limit=4
    $region2: #{conv_capsule_layer_forward.1} parent=1 // loop_pre_header
      _
    $region3: #{conv_capsule_layer_forward.1} parent=1 // loop_header
      %s9 = sphi 0, %s13
      %p10 = scmp.ge.s32.totalorder %s9, 4
      %s19 = sphi 0, %s21
      %s22 = sphi 0, %s19
      %s23 = sphi 0, %s22
      %s39 = sphi 0, %s23
      %s43 = sphi 0, %s43
      %s45 = sphi 0, %s43
      %s46 = sphi 0, %s45
      %s60 = sphi 0, %s46
      %s64 = sphi 0, %s64
      %s66 = sphi 0, %s64
      %s67 = sphi 0, %s66
      %s81 = sphi 0, %s67
      %s87 = sphi 0, %s89
      %s90 = sphi 0, %s87
      %s91 = sphi 0, %s90
      %s107 = sphi 0, %s91
    $region4: #{conv_capsule_layer_forward.1} parent=1 // loop_header_branch
      %12 = sbr.rel (%p10) target = $region8
    $region5: #{conv_capsule_layer_forward.1} parent=1 // loop_body
      %s14 = ssub.s32 %s9, 1
      %s15 = ssub.s32 %s9, 2
      %s16 = sadd.s32 %s9, 1
      %s17 = ssub.s32 %s9, %s16
      %p18 = scmp.eq.s32.totalorder %s17, 0
      %s20 = sadd.s32 %s19, 1
      %s21 = scalar_select %p18, %s19, %s20
      %p24 = pneg %p18
      %p25 = scmp.eq.s32.totalorder %s9, 1
      %p26 = por %p24, %p25
      %p27 = scmp.ne.s32.totalorder %s19, %s22
      %p28 = scmp.eq.s32.totalorder %s9, 0
      %p29 = por %p27, %p28
      %p30 = scmp.ne.s32.totalorder %s19, %s22
      %p31 = scmp.eq.s32.totalorder %s14, 1
      %p32 = por %p30, %p31
      %p33 = scmp.ne.s32.totalorder %s22, %s23
      %p34 = scmp.eq.s32.totalorder %s14, 0
      %p35 = por %p33, %p34
      %p36 = scmp.ne.s32.totalorder %s22, %s23
      %p37 = scmp.eq.s32.totalorder %s15, 1
      %p38 = por %p36, %p37
      %p40 = scmp.ne.s32.totalorder %s23, %s39
      %p41 = scmp.eq.s32.totalorder %s15, 0
      %p42 = por %p40, %p41
      %s44 = sadd.s32 %s43, 1
      %p47 = scmp.eq.s32.totalorder %s9, 1
      %p48 = scmp.ne.s32.totalorder %s43, %s45
      %p49 = scmp.eq.s32.totalorder %s9, 0
      %p50 = por %p48, %p49
      %p51 = scmp.ne.s32.totalorder %s43, %s45
      %p52 = scmp.eq.s32.totalorder %s14, 1
      %p53 = por %p51, %p52
      %p54 = scmp.ne.s32.totalorder %s45, %s46
      %p55 = scmp.eq.s32.totalorder %s14, 0
      %p56 = por %p54, %p55
      %p57 = scmp.ne.s32.totalorder %s45, %s46
      %p58 = scmp.eq.s32.totalorder %s15, 1
      %p59 = por %p57, %p58
      %p61 = scmp.ne.s32.totalorder %s46, %s60
      %p62 = scmp.eq.s32.totalorder %s15, 0
      %p63 = por %p61, %p62
      %s65 = sadd.s32 %s64, 1
      %p68 = scmp.eq.s32.totalorder %s9, 1
      %p69 = scmp.ne.s32.totalorder %s64, %s66
      %p70 = scmp.eq.s32.totalorder %s9, 0
      %p71 = por %p69, %p70
      %p72 = scmp.ne.s32.totalorder %s64, %s66
      %p73 = scmp.eq.s32.totalorder %s14, 1
      %p74 = por %p72, %p73
      %p75 = scmp.ne.s32.totalorder %s66, %s67
      %p76 = scmp.eq.s32.totalorder %s14, 0
      %p77 = por %p75, %p76
      %p78 = scmp.ne.s32.totalorder %s66, %s67
      %p79 = scmp.eq.s32.totalorder %s15, 1
      %p80 = por %p78, %p79
      %p82 = scmp.ne.s32.totalorder %s67, %s81
      %p83 = scmp.eq.s32.totalorder %s15, 0
      %p84 = por %p82, %p83
      %s85 = ssub.s32 %s9, %s16
      %p86 = scmp.eq.s32.totalorder %s85, 0
      %s88 = sadd.s32 %s87, 1
      %s89 = scalar_select %p86, %s87, %s88
      %p92 = pneg %p86
      %p93 = scmp.eq.s32.totalorder %s9, 1
      %p94 = por %p92, %p93
      %p95 = scmp.ne.s32.totalorder %s87, %s90
      %p96 = scmp.eq.s32.totalorder %s9, 0
      %p97 = por %p95, %p96
      %p98 = scmp.ne.s32.totalorder %s87, %s90
      %p99 = scmp.eq.s32.totalorder %s14, 1
      %p100 = por %p98, %p99
      %p101 = scmp.ne.s32.totalorder %s90, %s91
      %p102 = scmp.eq.s32.totalorder %s14, 0
      %p103 = por %p101, %p102
      %p104 = scmp.ne.s32.totalorder %s90, %s91
      %p105 = scmp.eq.s32.totalorder %s15, 1
      %p106 = por %p104, %p105
      %p108 = scmp.ne.s32.totalorder %s91, %s107
      %p109 = scmp.eq.s32.totalorder %s15, 0
      %p110 = por %p108, %p109
      %p111 = scmp.le.s32.totalorder 1, %s9
      %p112 = scmp.lt.s32.totalorder %s9, 3
      %p113 = pnand %p111, %p112
      %p114 = pneg %p113
      // Predicated region
      $region9: #{conv_capsule_layer_forward.1} parent=5 // pred_check
        _
      $region10: #{conv_capsule_layer_forward.1} parent=5 // pred_check_branch
        %116 = sbr.rel (%p113) target = $region12
      $region11: #{conv_capsule_layer_forward.1} parent=5 // pred_region
        %s117 = ssub.s32 %s9, 1
        // Predicated region
        $region13: #{conv_capsule_layer_forward.1} parent=11 // pred_check
          %p118 = pneg %p56
        $region14: #{conv_capsule_layer_forward.1} parent=11 // pred_check_branch
          %120 = sbr.rel (%p118) target = $region16
        $region15: #{conv_capsule_layer_forward.1} parent=11 // pred_region
          _
        $region16: #{conv_capsule_layer_forward.1} parent=11 // pred_fallthru
          _
        // Predicated region
        $region17: #{conv_capsule_layer_forward.1} parent=11 // pred_check
          %p121 = pneg %p77
        $region18: #{conv_capsule_layer_forward.1} parent=11 // pred_check_branch
          %123 = sbr.rel (%p121) target = $region20
        $region19: #{conv_capsule_layer_forward.1} parent=11 // pred_region
          _
        $region20: #{conv_capsule_layer_forward.1} parent=11 // pred_fallthru
          _
      $region12: #{conv_capsule_layer_forward.1} parent=5 // pred_fallthru
        _
      %p124 = scmp.lt.s32.totalorder %s9, 2
      // Predicated region
      $region21: #{conv_capsule_layer_forward.1} parent=5 // pred_check
        %p125 = pneg %p124
      $region22: #{conv_capsule_layer_forward.1} parent=5 // pred_check_branch
        %127 = sbr.rel (%p125) target = $region24
      $region23: #{conv_capsule_layer_forward.1} parent=5 // pred_region
        // Predicated region
        $region25: #{conv_capsule_layer_forward.1} parent=23 // pred_check
          %p128 = pneg %p29
        $region26: #{conv_capsule_layer_forward.1} parent=23 // pred_check_branch
          %130 = sbr.rel (%p128) target = $region28
        $region27: #{conv_capsule_layer_forward.1} parent=23 // pred_region
          %s131 = sand.u32 %s19, 1
          %s132 = sand.u32 %s19, 1
          %s133 = smul.addr %s132, 864
          %s134 = scalar_lea.vmem [#allocation2], %s133
          %s135 = smul.u32 4, %s9
          %s136 = smul.addr %s135, 4
          %s137 = scalar_lea.vmem %s0, %s136
          // Predicated region
          $region29: #{conv_capsule_layer_forward.1} parent=27 // pred_check
            _
          $region30: #{conv_capsule_layer_forward.1} parent=27 // pred_check_branch
            %139 = sbr.rel (0) target = $region32
          $region31: #{conv_capsule_layer_forward.1} parent=27 // pred_region
            // Predicated region
            $region33: #{conv_capsule_layer_forward.1} parent=31 // pred_check
              _
            $region34: #{conv_capsule_layer_forward.1} parent=31 // pred_check_branch
              %141 = sbr.rel (0) target = $region36
            $region35: #{conv_capsule_layer_forward.1} parent=31 // pred_region
              loop: start=0, step=1, limit=1
              $region37: #{conv_capsule_layer_forward.1} parent=35 // loop_pre_header
                _
              $region38: #{conv_capsule_layer_forward.1} parent=35 // loop_header
                %s143 = sphi 0, %s147
                %p144 = scmp.ge.s32.totalorder %s143, 1
                %s148 = sphi %s137, %s137
                %s149 = sphi %s134, %s134
              $region39: #{conv_capsule_layer_forward.1} parent=35 // loop_header_branch
                %146 = sbr.rel (%p144) target = $region43
              $region40: #{conv_capsule_layer_forward.1} parent=35 // loop_body
                %v150 = vld [vmem:[%s148] sm:$0xff]
                %151 = vst [vmem:[%s149] sm:$0xff] %v150
                %v152 = vld [vmem:[%s148 + $0x8] sm:$0xff]
                %153 = vst [vmem:[%s149 + $0x8] sm:$0xff] %v152
                %v154 = vld [vmem:[%s148 + $0x20] sm:$0xff]
                %155 = vst [vmem:[%s149 + $0x10] sm:$0xff] %v154
                %v156 = vld [vmem:[%s148 + $0x28] sm:$0xff]
                %157 = vst [vmem:[%s149 + $0x18] sm:$0xff] %v156
                %v158 = vld [vmem:[%s148 + $0x40] sm:$0xff]
                %159 = vst [vmem:[%s149 + $0x20] sm:$0xff] %v158
                %v160 = vld [vmem:[%s148 + $0x48] sm:$0xff]
                %161 = vst [vmem:[%s149 + $0x28] sm:$0xff] %v160
                %v162 = vld [vmem:[%s148 + $0x60] sm:$0xff]
                %163 = vst [vmem:[%s149 + $0x30] sm:$0xff] %v162
                %v164 = vld [vmem:[%s148 + $0x68] sm:$0xff]
                %165 = vst [vmem:[%s149 + $0x38] sm:$0xff] %v164
                %v166 = vld [vmem:[%s148 + $0x80] sm:$0xff]
                %167 = vst [vmem:[%s149 + $0x40] sm:$0xff] %v166
                %v168 = vld [vmem:[%s148 + $0x88] sm:$0xff]
                %169 = vst [vmem:[%s149 + $0x48] sm:$0xff] %v168
                %v170 = vld [vmem:[%s148 + $0xa0] sm:$0xff]
                %171 = vst [vmem:[%s149 + $0x50] sm:$0xff] %v170
                %v172 = vld [vmem:[%s148 + $0xa8] sm:$0xff]
                %173 = vst [vmem:[%s149 + $0x58] sm:$0xff] %v172
                %v174 = vld [vmem:[%s148 + $0xc0] sm:$0xff]
                %175 = vst [vmem:[%s149 + $0x60] sm:$0xff] %v174
                %v176 = vld [vmem:[%s148 + $0xc8] sm:$0xff]
                %177 = vst [vmem:[%s149 + $0x68] sm:$0xff] %v176
                %v178 = vld [vmem:[%s148 + $0xe0] sm:$0xff]
                %179 = vst [vmem:[%s149 + $0x70] sm:$0xff] %v178
                %v180 = vld [vmem:[%s148 + $0xe8] sm:$0xff]
                %181 = vst [vmem:[%s149 + $0x78] sm:$0xff] %v180
                %v182 = vld [vmem:[%s148 + $0x100] sm:$0xff]
                %183 = vst [vmem:[%s149 + $0x80] sm:$0xff] %v182
                %v184 = vld [vmem:[%s148 + $0x108] sm:$0xff]
                %185 = vst [vmem:[%s149 + $0x88] sm:$0xff] %v184
                %v186 = vld [vmem:[%s148 + $0x120] sm:$0xff]
                %187 = vst [vmem:[%s149 + $0x90] sm:$0xff] %v186
                %v188 = vld [vmem:[%s148 + $0x128] sm:$0xff]
                %189 = vst [vmem:[%s149 + $0x98] sm:$0xff] %v188
                %v190 = vld [vmem:[%s148 + $0x140] sm:$0xff]
                %191 = vst [vmem:[%s149 + $0xa0] sm:$0xff] %v190
                %v192 = vld [vmem:[%s148 + $0x148] sm:$0xff]
                %193 = vst [vmem:[%s149 + $0xa8] sm:$0xff] %v192
                %v194 = vld [vmem:[%s148 + $0x160] sm:$0xff]
                %195 = vst [vmem:[%s149 + $0xb0] sm:$0xff] %v194
                %v196 = vld [vmem:[%s148 + $0x168] sm:$0xff]
                %197 = vst [vmem:[%s149 + $0xb8] sm:$0xff] %v196
                %v198 = vld [vmem:[%s148 + $0x180] sm:$0xff]
                %199 = vst [vmem:[%s149 + $0xc0] sm:$0xff] %v198
                %v200 = vld [vmem:[%s148 + $0x188] sm:$0xff]
                %201 = vst [vmem:[%s149 + $0xc8] sm:$0xff] %v200
                %v202 = vld [vmem:[%s148 + $0x1a0] sm:$0xff]
                %203 = vst [vmem:[%s149 + $0xd0] sm:$0xff] %v202
                %v204 = vld [vmem:[%s148 + $0x1a8] sm:$0xff]
                %205 = vst [vmem:[%s149 + $0xd8] sm:$0xff] %v204
                %v206 = vld [vmem:[%s148 + $0x1c0] sm:$0xff]
                %207 = vst [vmem:[%s149 + $0xe0] sm:$0xff] %v206
                %v208 = vld [vmem:[%s148 + $0x1c8] sm:$0xff]
                %209 = vst [vmem:[%s149 + $0xe8] sm:$0xff] %v208
                %v210 = vld [vmem:[%s148 + $0x1e0] sm:$0xff]
                %211 = vst [vmem:[%s149 + $0xf0] sm:$0xff] %v210
                %v212 = vld [vmem:[%s148 + $0x1e8] sm:$0xff]
                %213 = vst [vmem:[%s149 + $0xf8] sm:$0xff] %v212
                %v214 = vld [vmem:[%s148 + $0x200] sm:$0xff]
                %215 = vst [vmem:[%s149 + $0x100] sm:$0xff] %v214
                %v216 = vld [vmem:[%s148 + $0x208] sm:$0xff]
                %217 = vst [vmem:[%s149 + $0x108] sm:$0xff] %v216
                %v218 = vld [vmem:[%s148 + $0x220] sm:$0xff]
                %219 = vst [vmem:[%s149 + $0x110] sm:$0xff] %v218
                %v220 = vld [vmem:[%s148 + $0x228] sm:$0xff]
                %221 = vst [vmem:[%s149 + $0x118] sm:$0xff] %v220
                %v222 = vld [vmem:[%s148 + $0x240] sm:$0xff]
                %223 = vst [vmem:[%s149 + $0x120] sm:$0xff] %v222
                %v224 = vld [vmem:[%s148 + $0x248] sm:$0xff]
                %225 = vst [vmem:[%s149 + $0x128] sm:$0xff] %v224
                %v226 = vld [vmem:[%s148 + $0x260] sm:$0xff]
                %227 = vst [vmem:[%s149 + $0x130] sm:$0xff] %v226
                %v228 = vld [vmem:[%s148 + $0x268] sm:$0xff]
                %229 = vst [vmem:[%s149 + $0x138] sm:$0xff] %v228
                %v230 = vld [vmem:[%s148 + $0x280] sm:$0xff]
                %231 = vst [vmem:[%s149 + $0x140] sm:$0xff] %v230
                %v232 = vld [vmem:[%s148 + $0x288] sm:$0xff]
                %233 = vst [vmem:[%s149 + $0x148] sm:$0xff] %v232
                %v234 = vld [vmem:[%s148 + $0x2a0] sm:$0xff]
                %235 = vst [vmem:[%s149 + $0x150] sm:$0xff] %v234
                %v236 = vld [vmem:[%s148 + $0x2a8] sm:$0xff]
                %237 = vst [vmem:[%s149 + $0x158] sm:$0xff] %v236
                %v238 = vld [vmem:[%s148 + $0x2c0] sm:$0xff]
                %239 = vst [vmem:[%s149 + $0x160] sm:$0xff] %v238
                %v240 = vld [vmem:[%s148 + $0x2c8] sm:$0xff]
                %241 = vst [vmem:[%s149 + $0x168] sm:$0xff] %v240
                %v242 = vld [vmem:[%s148 + $0x2e0] sm:$0xff]
                %243 = vst [vmem:[%s149 + $0x170] sm:$0xff] %v242
                %v244 = vld [vmem:[%s148 + $0x2e8] sm:$0xff]
                %245 = vst [vmem:[%s149 + $0x178] sm:$0xff] %v244
                %v246 = vld [vmem:[%s148 + $0x300] sm:$0xff]
                %247 = vst [vmem:[%s149 + $0x180] sm:$0xff] %v246
                %v248 = vld [vmem:[%s148 + $0x308] sm:$0xff]
                %249 = vst [vmem:[%s149 + $0x188] sm:$0xff] %v248
                %v250 = vld [vmem:[%s148 + $0x320] sm:$0xff]
                %251 = vst [vmem:[%s149 + $0x190] sm:$0xff] %v250
                %v252 = vld [vmem:[%s148 + $0x328] sm:$0xff]
                %253 = vst [vmem:[%s149 + $0x198] sm:$0xff] %v252
                %v254 = vld [vmem:[%s148 + $0x340] sm:$0xff]
                %255 = vst [vmem:[%s149 + $0x1a0] sm:$0xff] %v254
                %v256 = vld [vmem:[%s148 + $0x348] sm:$0xff]
                %257 = vst [vmem:[%s149 + $0x1a8] sm:$0xff] %v256
                %v258 = vld [vmem:[%s148 + $0x360] sm:$0xff]
                %259 = vst [vmem:[%s149 + $0x1b0] sm:$0xff] %v258
                %v260 = vld [vmem:[%s148 + $0x368] sm:$0xff]
                %261 = vst [vmem:[%s149 + $0x1b8] sm:$0xff] %v260
                %v262 = vld [vmem:[%s148 + $0x380] sm:$0xff]
                %263 = vst [vmem:[%s149 + $0x1c0] sm:$0xff] %v262
                %v264 = vld [vmem:[%s148 + $0x388] sm:$0xff]
                %265 = vst [vmem:[%s149 + $0x1c8] sm:$0xff] %v264
                %v266 = vld [vmem:[%s148 + $0x3a0] sm:$0xff]
                %267 = vst [vmem:[%s149 + $0x1d0] sm:$0xff] %v266
                %v268 = vld [vmem:[%s148 + $0x3a8] sm:$0xff]
                %269 = vst [vmem:[%s149 + $0x1d8] sm:$0xff] %v268
                %v270 = vld [vmem:[%s148 + $0x3c0] sm:$0xff]
                %271 = vst [vmem:[%s149 + $0x1e0] sm:$0xff] %v270
                %v272 = vld [vmem:[%s148 + $0x3c8] sm:$0xff]
                %273 = vst [vmem:[%s149 + $0x1e8] sm:$0xff] %v272
                %v274 = vld [vmem:[%s148 + $0x3e0] sm:$0xff]
                %275 = vst [vmem:[%s149 + $0x1f0] sm:$0xff] %v274
                %v276 = vld [vmem:[%s148 + $0x3e8] sm:$0xff]
                %277 = vst [vmem:[%s149 + $0x1f8] sm:$0xff] %v276
                %v278 = vld [vmem:[%s148 + $0x400] sm:$0xff]
                %279 = vst [vmem:[%s149 + $0x200] sm:$0xff] %v278
                %v280 = vld [vmem:[%s148 + $0x408] sm:$0xff]
                %281 = vst [vmem:[%s149 + $0x208] sm:$0xff] %v280
                %v282 = vld [vmem:[%s148 + $0x420] sm:$0xff]
                %283 = vst [vmem:[%s149 + $0x210] sm:$0xff] %v282
                %v284 = vld [vmem:[%s148 + $0x428] sm:$0xff]
                %285 = vst [vmem:[%s149 + $0x218] sm:$0xff] %v284
                %v286 = vld [vmem:[%s148 + $0x440] sm:$0xff]
                %287 = vst [vmem:[%s149 + $0x220] sm:$0xff] %v286
                %v288 = vld [vmem:[%s148 + $0x448] sm:$0xff]
                %289 = vst [vmem:[%s149 + $0x228] sm:$0xff] %v288
                %v290 = vld [vmem:[%s148 + $0x460] sm:$0xff]
                %291 = vst [vmem:[%s149 + $0x230] sm:$0xff] %v290
                %v292 = vld [vmem:[%s148 + $0x468] sm:$0xff]
                %293 = vst [vmem:[%s149 + $0x238] sm:$0xff] %v292
                %v294 = vld [vmem:[%s148 + $0x480] sm:$0xff]
                %295 = vst [vmem:[%s149 + $0x240] sm:$0xff] %v294
                %v296 = vld [vmem:[%s148 + $0x488] sm:$0xff]
                %297 = vst [vmem:[%s149 + $0x248] sm:$0xff] %v296
                %v298 = vld [vmem:[%s148 + $0x4a0] sm:$0xff]
                %299 = vst [vmem:[%s149 + $0x250] sm:$0xff] %v298
                %v300 = vld [vmem:[%s148 + $0x4a8] sm:$0xff]
                %301 = vst [vmem:[%s149 + $0x258] sm:$0xff] %v300
                %v302 = vld [vmem:[%s148 + $0x4c0] sm:$0xff]
                %303 = vst [vmem:[%s149 + $0x260] sm:$0xff] %v302
                %v304 = vld [vmem:[%s148 + $0x4c8] sm:$0xff]
                %305 = vst [vmem:[%s149 + $0x268] sm:$0xff] %v304
                %v306 = vld [vmem:[%s148 + $0x4e0] sm:$0xff]
                %307 = vst [vmem:[%s149 + $0x270] sm:$0xff] %v306
                %v308 = vld [vmem:[%s148 + $0x4e8] sm:$0xff]
                %309 = vst [vmem:[%s149 + $0x278] sm:$0xff] %v308
                %v310 = vld [vmem:[%s148 + $0x500] sm:$0xff]
                %311 = vst [vmem:[%s149 + $0x280] sm:$0xff] %v310
                %v312 = vld [vmem:[%s148 + $0x508] sm:$0xff]
                %313 = vst [vmem:[%s149 + $0x288] sm:$0xff] %v312
                %v314 = vld [vmem:[%s148 + $0x520] sm:$0xff]
                %315 = vst [vmem:[%s149 + $0x290] sm:$0xff] %v314
                %v316 = vld [vmem:[%s148 + $0x528] sm:$0xff]
                %317 = vst [vmem:[%s149 + $0x298] sm:$0xff] %v316
                %v318 = vld [vmem:[%s148 + $0x540] sm:$0xff]
                %319 = vst [vmem:[%s149 + $0x2a0] sm:$0xff] %v318
                %v320 = vld [vmem:[%s148 + $0x548] sm:$0xff]
                %321 = vst [vmem:[%s149 + $0x2a8] sm:$0xff] %v320
                %v322 = vld [vmem:[%s148 + $0x560] sm:$0xff]
                %323 = vst [vmem:[%s149 + $0x2b0] sm:$0xff] %v322
                %v324 = vld [vmem:[%s148 + $0x568] sm:$0xff]
                %325 = vst [vmem:[%s149 + $0x2b8] sm:$0xff] %v324
                %v326 = vld [vmem:[%s148 + $0x580] sm:$0xff]
                %327 = vst [vmem:[%s149 + $0x2c0] sm:$0xff] %v326
                %v328 = vld [vmem:[%s148 + $0x588] sm:$0xff]
                %329 = vst [vmem:[%s149 + $0x2c8] sm:$0xff] %v328
                %v330 = vld [vmem:[%s148 + $0x5a0] sm:$0xff]
                %331 = vst [vmem:[%s149 + $0x2d0] sm:$0xff] %v330
                %v332 = vld [vmem:[%s148 + $0x5a8] sm:$0xff]
                %333 = vst [vmem:[%s149 + $0x2d8] sm:$0xff] %v332
                %v334 = vld [vmem:[%s148 + $0x5c0] sm:$0xff]
                %335 = vst [vmem:[%s149 + $0x2e0] sm:$0xff] %v334
                %v336 = vld [vmem:[%s148 + $0x5c8] sm:$0xff]
                %337 = vst [vmem:[%s149 + $0x2e8] sm:$0xff] %v336
                %v338 = vld [vmem:[%s148 + $0x5e0] sm:$0xff]
                %339 = vst [vmem:[%s149 + $0x2f0] sm:$0xff] %v338
                %v340 = vld [vmem:[%s148 + $0x5e8] sm:$0xff]
                %341 = vst [vmem:[%s149 + $0x2f8] sm:$0xff] %v340
                %v342 = vld [vmem:[%s148 + $0x600] sm:$0xff]
                %343 = vst [vmem:[%s149 + $0x300] sm:$0xff] %v342
                %v344 = vld [vmem:[%s148 + $0x608] sm:$0xff]
                %345 = vst [vmem:[%s149 + $0x308] sm:$0xff] %v344
                %v346 = vld [vmem:[%s148 + $0x620] sm:$0xff]
                %347 = vst [vmem:[%s149 + $0x310] sm:$0xff] %v346
                %v348 = vld [vmem:[%s148 + $0x628] sm:$0xff]
                %349 = vst [vmem:[%s149 + $0x318] sm:$0xff] %v348
                %v350 = vld [vmem:[%s148 + $0x640] sm:$0xff]
                %351 = vst [vmem:[%s149 + $0x320] sm:$0xff] %v350
                %v352 = vld [vmem:[%s148 + $0x648] sm:$0xff]
                %353 = vst [vmem:[%s149 + $0x328] sm:$0xff] %v352
                %v354 = vld [vmem:[%s148 + $0x660] sm:$0xff]
                %355 = vst [vmem:[%s149 + $0x330] sm:$0xff] %v354
                %v356 = vld [vmem:[%s148 + $0x668] sm:$0xff]
                %357 = vst [vmem:[%s149 + $0x338] sm:$0xff] %v356
                %v358 = vld [vmem:[%s148 + $0x680] sm:$0xff]
                %359 = vst [vmem:[%s149 + $0x340] sm:$0xff] %v358
                %v360 = vld [vmem:[%s148 + $0x688] sm:$0xff]
                %361 = vst [vmem:[%s149 + $0x348] sm:$0xff] %v360
                %v362 = vld [vmem:[%s148 + $0x6a0] sm:$0xff]
                %363 = vst [vmem:[%s149 + $0x350] sm:$0xff] %v362
                %v364 = vld [vmem:[%s148 + $0x6a8] sm:$0xff]
                %365 = vst [vmem:[%s149 + $0x358] sm:$0xff] %v364
              $region41: #{conv_capsule_layer_forward.1} parent=35 // loop_footer
                %s147 = sadd.s32 1, %s143
              $region42: #{conv_capsule_layer_forward.1} parent=35 // loop_footer_branch
                %142 = sbr.rel target = $region38
              $region43: #{conv_capsule_layer_forward.1} parent=35 // loop_exit
                _
            $region36: #{conv_capsule_layer_forward.1} parent=31 // pred_fallthru
              _
            // Predicated region
            $region44: #{conv_capsule_layer_forward.1} parent=31 // pred_check
              _
            $region45: #{conv_capsule_layer_forward.1} parent=31 // pred_check_branch
              %367 = sbr.rel target = $region47
            $region46: #{conv_capsule_layer_forward.1} parent=31 // pred_region
              _
            $region47: #{conv_capsule_layer_forward.1} parent=31 // pred_fallthru
              _
          $region32: #{conv_capsule_layer_forward.1} parent=27 // pred_fallthru
            _
          %368 = vnop
        $region28: #{conv_capsule_layer_forward.1} parent=23 // pred_fallthru
          _
      $region24: #{conv_capsule_layer_forward.1} parent=5 // pred_fallthru
        _
      %p369 = scmp.le.s32.totalorder 1, %s9
      %p370 = scmp.lt.s32.totalorder %s9, 3
      %p371 = pnand %p369, %p370
      %p372 = pneg %p371
      // Predicated region
      $region48: #{conv_capsule_layer_forward.1} parent=5 // pred_check
        _
      $region49: #{conv_capsule_layer_forward.1} parent=5 // pred_check_branch
        %374 = sbr.rel (%p371) target = $region51
      $region50: #{conv_capsule_layer_forward.1} parent=5 // pred_region
        %s375 = ssub.s32 %s9, 1
        %s376 = sand.u32 %s22, 1
        %s377 = sand.u32 %s22, 1
        %s378 = smul.addr %s377, 864
        %s379 = scalar_lea.vmem [#allocation2], %s378
        // Predicated region
        $region52: #{conv_capsule_layer_forward.1} parent=50 // pred_check
          %p380 = pneg %p35
        $region53: #{conv_capsule_layer_forward.1} parent=50 // pred_check_branch
          %382 = sbr.rel (%p380) target = $region55
        $region54: #{conv_capsule_layer_forward.1} parent=50 // pred_region
          _
        $region55: #{conv_capsule_layer_forward.1} parent=50 // pred_fallthru
          _
        %s383 = sand.u32 %s22, 1
        %s384 = sand.u32 %s22, 1
        %s385 = smul.addr %s384, 864
        %s386 = scalar_lea.vmem [#allocation2], %s385
        %p387 = pneg %p35
        %p388 = pneg %p32
        %p389 = pneg %p56
        %p390 = pneg %p53
        %p391 = pneg %p77
        %p392 = pneg %p74
        %p393 = pneg %p103
        %p394 = pneg %p100
        %s395 = sand.u32 %s90, 1
        %s396 = sand.u32 %s90, 1
        %s397 = smul.addr %s396, 128
        %s398 = scalar_lea.vmem [#allocation3], %s397
        %s399 = smul.u32 4, %s14
        %s400 = smul.u32 4, %s14
        %v402 = vld [vmem:[%s1] sm:$0xff]
        %v403 = vld [vmem:[%s1 + $0x8] sm:$0xff]
        %v404 = vld [vmem:[%s1 + $0x10] sm:$0xff]
        %v405 = vld [vmem:[%s1 + $0x18] sm:$0xff]
        %v406 = vld [vmem:[%s379] sm:$0xff]
        %v407 = vld [vmem:[%s379 + $0x8] sm:$0xff]
        %v408 = vld [vmem:[%s379 + $0x10] sm:$0xff]
        %v409 = vld [vmem:[%s379 + $0x18] sm:$0xff]
        %v410 = vld [vmem:[%s379 + $0x20] sm:$0xff]
        %v411 = vld [vmem:[%s379 + $0x28] sm:$0xff]
        %v412 = vld [vmem:[%s379 + $0x30] sm:$0xff]
        %v413 = vld [vmem:[%s379 + $0x38] sm:$0xff]
        %v414 = vld [vmem:[%s379 + $0x40] sm:$0xff]
        %v415 = vld [vmem:[%s379 + $0x48] sm:$0xff]
        %v416 = vld [vmem:[%s379 + $0x50] sm:$0xff]
        %v417 = vld [vmem:[%s379 + $0x58] sm:$0xff]
        %v418 = vld [vmem:[%s379 + $0x60] sm:$0xff]
        %v419 = vld [vmem:[%s379 + $0x68] sm:$0xff]
        %v420 = vld [vmem:[%s379 + $0x70] sm:$0xff]
        %v421 = vld [vmem:[%s379 + $0x78] sm:$0xff]
        %v422 = vld [vmem:[%s379 + $0x80] sm:$0xff]
        %v423 = vld [vmem:[%s379 + $0x88] sm:$0xff]
        %v424 = vld [vmem:[%s379 + $0x90] sm:$0xff]
        %v425 = vld [vmem:[%s379 + $0x98] sm:$0xff]
        %v426 = vld [vmem:[%s379 + $0xa0] sm:$0xff]
        %v427 = vld [vmem:[%s379 + $0xa8] sm:$0xff]
        %v428 = vld [vmem:[%s379 + $0xb0] sm:$0xff]
        %v429 = vld [vmem:[%s379 + $0xb8] sm:$0xff]
        %v430 = vld [vmem:[%s379 + $0xc0] sm:$0xff]
        %v431 = vld [vmem:[%s379 + $0xc8] sm:$0xff]
        %v432 = vld [vmem:[%s379 + $0xd0] sm:$0xff]
        %v433 = vld [vmem:[%s379 + $0xd8] sm:$0xff]
        %v434 = vld [vmem:[%s379 + $0xe0] sm:$0xff]
        %v435 = vld [vmem:[%s379 + $0xe8] sm:$0xff]
        %v436 = vld [vmem:[%s379 + $0xf0] sm:$0xff]
        %v437 = vld [vmem:[%s379 + $0xf8] sm:$0xff]
        %v438 = vld [vmem:[%s379 + $0x100] sm:$0xff]
        %v439 = vld [vmem:[%s379 + $0x108] sm:$0xff]
        %v440 = vld [vmem:[%s379 + $0x110] sm:$0xff]
        %v441 = vld [vmem:[%s379 + $0x118] sm:$0xff]
        %v442 = vld [vmem:[%s379 + $0x120] sm:$0xff]
        %v443 = vld [vmem:[%s379 + $0x128] sm:$0xff]
        %v444 = vld [vmem:[%s379 + $0x130] sm:$0xff]
        %v445 = vld [vmem:[%s379 + $0x138] sm:$0xff]
        %v446 = vld [vmem:[%s379 + $0x140] sm:$0xff]
        %v447 = vld [vmem:[%s379 + $0x148] sm:$0xff]
        %v448 = vld [vmem:[%s379 + $0x150] sm:$0xff]
        %v449 = vld [vmem:[%s379 + $0x158] sm:$0xff]
        %v450 = vld [vmem:[%s379 + $0x160] sm:$0xff]
        %v451 = vld [vmem:[%s379 + $0x168] sm:$0xff]
        %v452 = vld [vmem:[%s379 + $0x170] sm:$0xff]
        %v453 = vld [vmem:[%s379 + $0x178] sm:$0xff]
        %v454 = vld [vmem:[%s379 + $0x180] sm:$0xff]
        %v455 = vld [vmem:[%s379 + $0x188] sm:$0xff]
        %v456 = vld [vmem:[%s379 + $0x190] sm:$0xff]
        %v457 = vld [vmem:[%s379 + $0x198] sm:$0xff]
        %v458 = vld [vmem:[%s379 + $0x1a0] sm:$0xff]
        %v459 = vld [vmem:[%s379 + $0x1a8] sm:$0xff]
        %v464 = vunpack.c.l.b16 %v402
        %v465 = vunpack.c.h.b16 %v402
        %v466 = vunpack.c.l.b16 %v403
        %v467 = vunpack.c.h.b16 %v403
        %v468 = vunpack.c.l.b16 %v404
        %v469 = vunpack.c.h.b16 %v404
        %v470 = vunpack.c.l.b16 %v405
        %v471 = vunpack.c.h.b16 %v405
        %v472 = vpack.c.b16 %v466, %v464
        %v473 = vpack.c.b16 %v467, %v465
        %v474 = vpack.c.b16 %v470, %v468
        %v475 = vpack.c.b16 %v471, %v469
        %v532 = vunpack.c.l.b16 %v406
        %v533 = vunpack.c.h.b16 %v406
        %v534 = vunpack.c.l.b16 %v407
        %v535 = vunpack.c.h.b16 %v407
        %v536 = vunpack.c.l.b16 %v408
        %v537 = vunpack.c.h.b16 %v408
        %v538 = vunpack.c.l.b16 %v409
        %v539 = vunpack.c.h.b16 %v409
        %v540 = vunpack.c.l.b16 %v410
        %v541 = vunpack.c.h.b16 %v410
        %v542 = vunpack.c.l.b16 %v411
        %v543 = vunpack.c.h.b16 %v411
        %v544 = vunpack.c.l.b16 %v412
        %v545 = vunpack.c.h.b16 %v412
        %v546 = vunpack.c.l.b16 %v413
        %v547 = vunpack.c.h.b16 %v413
        %v548 = vunpack.c.l.b16 %v414
        %v549 = vunpack.c.h.b16 %v414
        %v550 = vunpack.c.l.b16 %v415
        %v551 = vunpack.c.h.b16 %v415
        %v552 = vunpack.c.l.b16 %v416
        %v553 = vunpack.c.h.b16 %v416
        %v554 = vunpack.c.l.b16 %v417
        %v555 = vunpack.c.h.b16 %v417
        %v556 = vunpack.c.l.b16 %v418
        %v557 = vunpack.c.h.b16 %v418
        %v558 = vunpack.c.l.b16 %v419
        %v559 = vunpack.c.h.b16 %v419
        %v560 = vunpack.c.l.b16 %v420
        %v561 = vunpack.c.h.b16 %v420
        %v562 = vunpack.c.l.b16 %v421
        %v563 = vunpack.c.h.b16 %v421
        %v564 = vunpack.c.l.b16 %v422
        %v565 = vunpack.c.h.b16 %v422
        %v566 = vunpack.c.l.b16 %v423
        %v567 = vunpack.c.h.b16 %v423
        %v568 = vunpack.c.l.b16 %v424
        %v569 = vunpack.c.h.b16 %v424
        %v570 = vunpack.c.l.b16 %v425
        %v571 = vunpack.c.h.b16 %v425
        %v572 = vunpack.c.l.b16 %v426
        %v573 = vunpack.c.h.b16 %v426
        %v574 = vunpack.c.l.b16 %v427
        %v575 = vunpack.c.h.b16 %v427
        %v576 = vunpack.c.l.b16 %v428
        %v577 = vunpack.c.h.b16 %v428
        %v578 = vunpack.c.l.b16 %v429
        %v579 = vunpack.c.h.b16 %v429
        %v580 = vunpack.c.l.b16 %v430
        %v581 = vunpack.c.h.b16 %v430
        %v582 = vunpack.c.l.b16 %v431
        %v583 = vunpack.c.h.b16 %v431
        %v584 = vunpack.c.l.b16 %v432
        %v585 = vunpack.c.h.b16 %v432
        %v586 = vunpack.c.l.b16 %v433
        %v587 = vunpack.c.h.b16 %v433
        %v588 = vunpack.c.l.b16 %v434
        %v589 = vunpack.c.h.b16 %v434
        %v590 = vunpack.c.l.b16 %v435
        %v591 = vunpack.c.h.b16 %v435
        %v592 = vunpack.c.l.b16 %v436
        %v593 = vunpack.c.h.b16 %v436
        %v594 = vunpack.c.l.b16 %v437
        %v595 = vunpack.c.h.b16 %v437
        %v596 = vunpack.c.l.b16 %v438
        %v597 = vunpack.c.h.b16 %v438
        %v598 = vunpack.c.l.b16 %v439
        %v599 = vunpack.c.h.b16 %v439
        %v600 = vunpack.c.l.b16 %v440
        %v601 = vunpack.c.h.b16 %v440
        %v602 = vunpack.c.l.b16 %v441
        %v603 = vunpack.c.h.b16 %v441
        %v604 = vunpack.c.l.b16 %v442
        %v605 = vunpack.c.h.b16 %v442
        %v606 = vunpack.c.l.b16 %v443
        %v607 = vunpack.c.h.b16 %v443
        %v608 = vunpack.c.l.b16 %v444
        %v609 = vunpack.c.h.b16 %v444
        %v610 = vunpack.c.l.b16 %v445
        %v611 = vunpack.c.h.b16 %v445
        %v612 = vunpack.c.l.b16 %v446
        %v613 = vunpack.c.h.b16 %v446
        %v614 = vunpack.c.l.b16 %v447
        %v615 = vunpack.c.h.b16 %v447
        %v616 = vunpack.c.l.b16 %v448
        %v617 = vunpack.c.h.b16 %v448
        %v618 = vunpack.c.l.b16 %v449
        %v619 = vunpack.c.h.b16 %v449
        %v620 = vunpack.c.l.b16 %v450
        %v621 = vunpack.c.h.b16 %v450
        %v622 = vunpack.c.l.b16 %v451
        %v623 = vunpack.c.h.b16 %v451
        %v624 = vunpack.c.l.b16 %v452
        %v625 = vunpack.c.h.b16 %v452
        %v626 = vunpack.c.l.b16 %v453
        %v627 = vunpack.c.h.b16 %v453
        %v628 = vunpack.c.l.b16 %v454
        %v629 = vunpack.c.h.b16 %v454
        %v630 = vunpack.c.l.b16 %v455
        %v631 = vunpack.c.h.b16 %v455
        %v632 = vunpack.c.l.b16 %v456
        %v633 = vunpack.c.h.b16 %v456
        %v634 = vunpack.c.l.b16 %v457
        %v635 = vunpack.c.h.b16 %v457
        %v636 = vunpack.c.l.b16 %v458
        %v637 = vunpack.c.h.b16 %v458
        %v638 = vunpack.c.l.b16 %v459
        %v639 = vunpack.c.h.b16 %v459
        %v640 = vpack.c.b16 %v536, %v532
        %v641 = vpack.c.b16 %v537, %v533
        %v642 = vpack.c.b16 %v538, %v534
        %v643 = vpack.c.b16 %v539, %v535
        %v644 = vpack.c.b16 %v544, %v540
        %v645 = vpack.c.b16 %v545, %v541
        %v646 = vpack.c.b16 %v546, %v542
        %v647 = vpack.c.b16 %v547, %v543
        %v648 = vpack.c.b16 %v552, %v548
        %v649 = vpack.c.b16 %v553, %v549
        %v650 = vpack.c.b16 %v554, %v550
        %v651 = vpack.c.b16 %v555, %v551
        %v652 = vpack.c.b16 %v560, %v556
        %v653 = vpack.c.b16 %v561, %v557
        %v654 = vpack.c.b16 %v562, %v558
        %v655 = vpack.c.b16 %v563, %v559
        %v656 = vpack.c.b16 %v568, %v564
        %v657 = vpack.c.b16 %v569, %v565
        %v658 = vpack.c.b16 %v570, %v566
        %v659 = vpack.c.b16 %v571, %v567
        %v660 = vpack.c.b16 %v576, %v572
        %v661 = vpack.c.b16 %v577, %v573
        %v662 = vpack.c.b16 %v578, %v574
        %v663 = vpack.c.b16 %v579, %v575
        %v664 = vpack.c.b16 %v584, %v580
        %v665 = vpack.c.b16 %v585, %v581
        %v666 = vpack.c.b16 %v586, %v582
        %v667 = vpack.c.b16 %v587, %v583
        %v668 = vpack.c.b16 %v592, %v588
        %v669 = vpack.c.b16 %v593, %v589
        %v670 = vpack.c.b16 %v594, %v590
        %v671 = vpack.c.b16 %v595, %v591
        %v672 = vpack.c.b16 %v600, %v596
        %v673 = vpack.c.b16 %v601, %v597
        %v674 = vpack.c.b16 %v602, %v598
        %v675 = vpack.c.b16 %v603, %v599
        %v676 = vpack.c.b16 %v608, %v604
        %v677 = vpack.c.b16 %v609, %v605
        %v678 = vpack.c.b16 %v610, %v606
        %v679 = vpack.c.b16 %v611, %v607
        %v680 = vpack.c.b16 %v616, %v612
        %v681 = vpack.c.b16 %v617, %v613
        %v682 = vpack.c.b16 %v618, %v614
        %v683 = vpack.c.b16 %v619, %v615
        %v684 = vpack.c.b16 %v624, %v620
        %v685 = vpack.c.b16 %v625, %v621
        %v686 = vpack.c.b16 %v626, %v622
        %v687 = vpack.c.b16 %v627, %v623
        %v688 = vpack.c.b16 %v632, %v628
        %v689 = vpack.c.b16 %v633, %v629
        %v690 = vpack.c.b16 %v634, %v630
        %v691 = vpack.c.b16 %v635, %v631
        %v692 = vpack.c.b16 %v636, %v636
        %v693 = vpack.c.b16 %v637, %v637
        %v694 = vpack.c.b16 %v638, %v638
        %v695 = vpack.c.b16 %v639, %v639
        %vm748 = vcmask 719872
        %v750 = vsel %vm748, %v473, 0
        %v753 = vsel %vm748, %v475, 0
        %vm755 = vcmask 1043456
        %v757 = vsel %vm755, %v692, 0
        %v760 = vsel %vm755, %v693, 0
        %v763 = vsel %vm755, %v694, 0
        %v766 = vsel %vm755, %v695, 0
        %768 = vmatprep.subr.bf16.mxu0 %v641
        %769 = vmatpush1.bf16.msra.mxu0 %v640
        %770 = vmatprep.subr.bf16.mxu0 %v645
        %771 = vmatpush1.bf16.msra.mxu0 %v644
        %772 = vmatprep.subr.bf16.mxu0 %v649
        %773 = vmatpush1.bf16.msra.mxu0 %v648
        %774 = vmatprep.subr.bf16.mxu0 %v653
        %775 = vmatpush1.bf16.msra.mxu0 %v652
        %776 = vmatprep.subr.bf16.mxu0 %v657
        %777 = vmatpush1.bf16.msra.mxu0 %v656
        %778 = vmatprep.subr.bf16.mxu0 %v661
        %779 = vmatpush1.bf16.msra.mxu0 %v660
        %780 = vmatprep.subr.bf16.mxu0 %v665
        %781 = vmatpush1.bf16.msra.mxu0 %v664
        %782 = vmatprep.subr.bf16.mxu0 %v669
        %783 = vmatpush1.bf16.msra.mxu0 %v668
        %784 = vmatprep.subr.bf16.mxu0 %v673
        %785 = vmatpush1.bf16.msra.mxu0 %v672
        %786 = vmatprep.subr.bf16.mxu0 %v677
        %787 = vmatpush1.bf16.msra.mxu0 %v676
        %788 = vmatprep.subr.bf16.mxu0 %v681
        %789 = vmatpush1.bf16.msra.mxu0 %v680
        %790 = vmatprep.subr.bf16.mxu0 %v685
        %791 = vmatpush1.bf16.msra.mxu0 %v684
        %792 = vmatprep.subr.bf16.mxu0 %v689
        %793 = vmatpush1.bf16.msra.mxu0 %v688
        %794 = vmatprep.subr.bf16.mxu0 %v760
        %795 = vmatpush1.bf16.msra.mxu0 %v757
        %796 = vmatprep.subr.bf16.mxu0 0
        %797 = vmatpush1.bf16.msra.mxu0 0
        %798 = vmatprep.subr.bf16.mxu0 0
        %799 = vmatpush1.bf16.msra.mxu0 0
        %800 = vmatprep.mubr.bf16.mxu0 %v750
        %801 = vmatmul.mubr.bf16.gmra.mrb[0].mxu0 %v472
        %v802 = vpop.f32.mrb[0].mxu0
        %v803 = vadd.f32 0.0, %v802
        %v804 = vpop.f32.mrb[0].mxu0
        %v805 = vadd.f32 0.0, %v804
        %v806 = vpop.f32.mrb[0].mxu0
        %v807 = vadd.f32 0.0, %v806
        %v808 = vpop.f32.mrb[0].mxu0
        %v809 = vadd.f32 0.0, %v808
        %810 = vmatprep.mubr.bf16.mxu0 %v753
        %811 = vmatmul.mubr.bf16.gmra.mrb[0].mxu0 %v474
        %v812 = vpop.f32.mrb[0].mxu0
        %v813 = vadd.f32 0.0, %v812
        %v814 = vpop.f32.mrb[0].mxu0
        %v815 = vadd.f32 0.0, %v814
        %v816 = vpop.f32.mrb[0].mxu0
        %v817 = vadd.f32 0.0, %v816
        %v818 = vpop.f32.mrb[0].mxu0
        %v819 = vadd.f32 0.0, %v818
        %820 = vdwg.mxu0
        %821 = vmatprep.subr.bf16.mxu0 %v643
        %822 = vmatpush1.bf16.msra.mxu0 %v642
        %823 = vmatprep.subr.bf16.mxu0 %v647
        %824 = vmatpush1.bf16.msra.mxu0 %v646
        %825 = vmatprep.subr.bf16.mxu0 %v651
        %826 = vmatpush1.bf16.msra.mxu0 %v650
        %827 = vmatprep.subr.bf16.mxu0 %v655
        %828 = vmatpush1.bf16.msra.mxu0 %v654
        %829 = vmatprep.subr.bf16.mxu0 %v659
        %830 = vmatpush1.bf16.msra.mxu0 %v658
        %831 = vmatprep.subr.bf16.mxu0 %v663
        %832 = vmatpush1.bf16.msra.mxu0 %v662
        %833 = vmatprep.subr.bf16.mxu0 %v667
        %834 = vmatpush1.bf16.msra.mxu0 %v666
        %835 = vmatprep.subr.bf16.mxu0 %v671
        %836 = vmatpush1.bf16.msra.mxu0 %v670
        %837 = vmatprep.subr.bf16.mxu0 %v675
        %838 = vmatpush1.bf16.msra.mxu0 %v674
        %839 = vmatprep.subr.bf16.mxu0 %v679
        %840 = vmatpush1.bf16.msra.mxu0 %v678
        %841 = vmatprep.subr.bf16.mxu0 %v683
        %842 = vmatpush1.bf16.msra.mxu0 %v682
        %843 = vmatprep.subr.bf16.mxu0 %v687
        %844 = vmatpush1.bf16.msra.mxu0 %v686
        %845 = vmatprep.subr.bf16.mxu0 %v691
        %846 = vmatpush1.bf16.msra.mxu0 %v690
        %847 = vmatprep.subr.bf16.mxu0 %v766
        %848 = vmatpush1.bf16.msra.mxu0 %v763
        %849 = vmatprep.subr.bf16.mxu0 0
        %850 = vmatpush1.bf16.msra.mxu0 0
        %851 = vmatprep.subr.bf16.mxu0 0
        %852 = vmatpush1.bf16.msra.mxu0 0
        %853 = vmatprep.mubr.bf16.mxu0 %v750
        %854 = vmatmul.mubr.bf16.gmra.mrb[0].mxu0 %v472
        %v855 = vpop.f32.mrb[0].mxu0
        %v856 = vadd.f32 0.0, %v855
        %v857 = vpop.f32.mrb[0].mxu0
        %v858 = vadd.f32 0.0, %v857
        %v859 = vpop.f32.mrb[0].mxu0
        %v860 = vadd.f32 0.0, %v859
        %v861 = vpop.f32.mrb[0].mxu0
        %v862 = vadd.f32 0.0, %v861
        %863 = vmatprep.mubr.bf16.mxu0 %v753
        %864 = vmatmul.mubr.bf16.gmra.mrb[0].mxu0 %v474
        %v865 = vpop.f32.mrb[0].mxu0
        %v866 = vadd.f32 0.0, %v865
        %v867 = vpop.f32.mrb[0].mxu0
        %v868 = vadd.f32 0.0, %v867
        %v869 = vpop.f32.mrb[0].mxu0
        %v870 = vadd.f32 0.0, %v869
        %v871 = vpop.f32.mrb[0].mxu0
        %v872 = vadd.f32 0.0, %v871
        %873 = vdwg.mxu0
        %s874 = scalar_lea.vmem %s379, 432 [#allocation2]
        %v875 = vld [vmem:[%s874] sm:$0xff]
        %v876 = vld [vmem:[%s874 + $0x8] sm:$0xff]
        %v877 = vld [vmem:[%s874 + $0x10] sm:$0xff]
        %v878 = vld [vmem:[%s874 + $0x18] sm:$0xff]
        %v879 = vld [vmem:[%s874 + $0x20] sm:$0xff]
        %v880 = vld [vmem:[%s874 + $0x28] sm:$0xff]
        %v881 = vld [vmem:[%s874 + $0x30] sm:$0xff]
        %v882 = vld [vmem:[%s874 + $0x38] sm:$0xff]
        %v883 = vld [vmem:[%s874 + $0x40] sm:$0xff]
        %v884 = vld [vmem:[%s874 + $0x48] sm:$0xff]
        %v885 = vld [vmem:[%s874 + $0x50] sm:$0xff]
        %v886 = vld [vmem:[%s874 + $0x58] sm:$0xff]
        %v887 = vld [vmem:[%s874 + $0x60] sm:$0xff]
        %v888 = vld [vmem:[%s874 + $0x68] sm:$0xff]
        %v889 = vld [vmem:[%s874 + $0x70] sm:$0xff]
        %v890 = vld [vmem:[%s874 + $0x78] sm:$0xff]
        %v891 = vld [vmem:[%s874 + $0x80] sm:$0xff]
        %v892 = vld [vmem:[%s874 + $0x88] sm:$0xff]
        %v893 = vld [vmem:[%s874 + $0x90] sm:$0xff]
        %v894 = vld [vmem:[%s874 + $0x98] sm:$0xff]
        %v895 = vld [vmem:[%s874 + $0xa0] sm:$0xff]
        %v896 = vld [vmem:[%s874 + $0xa8] sm:$0xff]
        %v897 = vld [vmem:[%s874 + $0xb0] sm:$0xff]
        %v898 = vld [vmem:[%s874 + $0xb8] sm:$0xff]
        %v899 = vld [vmem:[%s874 + $0xc0] sm:$0xff]
        %v900 = vld [vmem:[%s874 + $0xc8] sm:$0xff]
        %v901 = vld [vmem:[%s874 + $0xd0] sm:$0xff]
        %v902 = vld [vmem:[%s874 + $0xd8] sm:$0xff]
        %v903 = vld [vmem:[%s874 + $0xe0] sm:$0xff]
        %v904 = vld [vmem:[%s874 + $0xe8] sm:$0xff]
        %v905 = vld [vmem:[%s874 + $0xf0] sm:$0xff]
        %v906 = vld [vmem:[%s874 + $0xf8] sm:$0xff]
        %v907 = vld [vmem:[%s874 + $0x100] sm:$0xff]
        %v908 = vld [vmem:[%s874 + $0x108] sm:$0xff]
        %v909 = vld [vmem:[%s874 + $0x110] sm:$0xff]
        %v910 = vld [vmem:[%s874 + $0x118] sm:$0xff]
        %v911 = vld [vmem:[%s874 + $0x120] sm:$0xff]
        %v912 = vld [vmem:[%s874 + $0x128] sm:$0xff]
        %v913 = vld [vmem:[%s874 + $0x130] sm:$0xff]
        %v914 = vld [vmem:[%s874 + $0x138] sm:$0xff]
        %v915 = vld [vmem:[%s874 + $0x140] sm:$0xff]
        %v916 = vld [vmem:[%s874 + $0x148] sm:$0xff]
        %v917 = vld [vmem:[%s874 + $0x150] sm:$0xff]
        %v918 = vld [vmem:[%s874 + $0x158] sm:$0xff]
        %v919 = vld [vmem:[%s874 + $0x160] sm:$0xff]
        %v920 = vld [vmem:[%s874 + $0x168] sm:$0xff]
        %v921 = vld [vmem:[%s874 + $0x170] sm:$0xff]
        %v922 = vld [vmem:[%s874 + $0x178] sm:$0xff]
        %v923 = vld [vmem:[%s874 + $0x180] sm:$0xff]
        %v924 = vld [vmem:[%s874 + $0x188] sm:$0xff]
        %v925 = vld [vmem:[%s874 + $0x190] sm:$0xff]
        %v926 = vld [vmem:[%s874 + $0x198] sm:$0xff]
        %v927 = vld [vmem:[%s874 + $0x1a0] sm:$0xff]
        %v928 = vld [vmem:[%s874 + $0x1a8] sm:$0xff]
        %v983 = vunpack.c.l.b16 %v875
        %v984 = vunpack.c.h.b16 %v875
        %v985 = vunpack.c.l.b16 %v876
        %v986 = vunpack.c.h.b16 %v876
        %v987 = vunpack.c.l.b16 %v877
        %v988 = vunpack.c.h.b16 %v877
        %v989 = vunpack.c.l.b16 %v878
        %v990 = vunpack.c.h.b16 %v878
        %v991 = vunpack.c.l.b16 %v879
        %v992 = vunpack.c.h.b16 %v879
        %v993 = vunpack.c.l.b16 %v880
        %v994 = vunpack.c.h.b16 %v880
        %v995 = vunpack.c.l.b16 %v881
        %v996 = vunpack.c.h.b16 %v881
        %v997 = vunpack.c.l.b16 %v882
        %v998 = vunpack.c.h.b16 %v882
        %v999 = vunpack.c.l.b16 %v883
        %v1000 = vunpack.c.h.b16 %v883
        %v1001 = vunpack.c.l.b16 %v884
        %v1002 = vunpack.c.h.b16 %v884
        %v1003 = vunpack.c.l.b16 %v885
        %v1004 = vunpack.c.h.b16 %v885
        %v1005 = vunpack.c.l.b16 %v886
        %v1006 = vunpack.c.h.b16 %v886
        %v1007 = vunpack.c.l.b16 %v887
        %v1008 = vunpack.c.h.b16 %v887
        %v1009 = vunpack.c.l.b16 %v888
        %v1010 = vunpack.c.h.b16 %v888
        %v1011 = vunpack.c.l.b16 %v889
        %v1012 = vunpack.c.h.b16 %v889
        %v1013 = vunpack.c.l.b16 %v890
        %v1014 = vunpack.c.h.b16 %v890
        %v1015 = vunpack.c.l.b16 %v891
        %v1016 = vunpack.c.h.b16 %v891
        %v1017 = vunpack.c.l.b16 %v892
        %v1018 = vunpack.c.h.b16 %v892
        %v1019 = vunpack.c.l.b16 %v893
        %v1020 = vunpack.c.h.b16 %v893
        %v1021 = vunpack.c.l.b16 %v894
        %v1022 = vunpack.c.h.b16 %v894
        %v1023 = vunpack.c.l.b16 %v895
        %v1024 = vunpack.c.h.b16 %v895
        %v1025 = vunpack.c.l.b16 %v896
        %v1026 = vunpack.c.h.b16 %v896
        %v1027 = vunpack.c.l.b16 %v897
        %v1028 = vunpack.c.h.b16 %v897
        %v1029 = vunpack.c.l.b16 %v898
        %v1030 = vunpack.c.h.b16 %v898
        %v1031 = vunpack.c.l.b16 %v899
        %v1032 = vunpack.c.h.b16 %v899
        %v1033 = vunpack.c.l.b16 %v900
        %v1034 = vunpack.c.h.b16 %v900
        %v1035 = vunpack.c.l.b16 %v901
        %v1036 = vunpack.c.h.b16 %v901
        %v1037 = vunpack.c.l.b16 %v902
        %v1038 = vunpack.c.h.b16 %v902
        %v1039 = vunpack.c.l.b16 %v903
        %v1040 = vunpack.c.h.b16 %v903
        %v1041 = vunpack.c.l.b16 %v904
        %v1042 = vunpack.c.h.b16 %v904
        %v1043 = vunpack.c.l.b16 %v905
        %v1044 = vunpack.c.h.b16 %v905
        %v1045 = vunpack.c.l.b16 %v906
        %v1046 = vunpack.c.h.b16 %v906
        %v1047 = vunpack.c.l.b16 %v907
        %v1048 = vunpack.c.h.b16 %v907
        %v1049 = vunpack.c.l.b16 %v908
        %v1050 = vunpack.c.h.b16 %v908
        %v1051 = vunpack.c.l.b16 %v909
        %v1052 = vunpack.c.h.b16 %v909
        %v1053 = vunpack.c.l.b16 %v910
        %v1054 = vunpack.c.h.b16 %v910
        %v1055 = vunpack.c.l.b16 %v911
        %v1056 = vunpack.c.h.b16 %v911
        %v1057 = vunpack.c.l.b16 %v912
        %v1058 = vunpack.c.h.b16 %v912
        %v1059 = vunpack.c.l.b16 %v913
        %v1060 = vunpack.c.h.b16 %v913
        %v1061 = vunpack.c.l.b16 %v914
        %v1062 = vunpack.c.h.b16 %v914
        %v1063 = vunpack.c.l.b16 %v915
        %v1064 = vunpack.c.h.b16 %v915
        %v1065 = vunpack.c.l.b16 %v916
        %v1066 = vunpack.c.h.b16 %v916
        %v1067 = vunpack.c.l.b16 %v917
        %v1068 = vunpack.c.h.b16 %v917
        %v1069 = vunpack.c.l.b16 %v918
        %v1070 = vunpack.c.h.b16 %v918
        %v1071 = vunpack.c.l.b16 %v919
        %v1072 = vunpack.c.h.b16 %v919
        %v1073 = vunpack.c.l.b16 %v920
        %v1074 = vunpack.c.h.b16 %v920
        %v1075 = vunpack.c.l.b16 %v921
        %v1076 = vunpack.c.h.b16 %v921
        %v1077 = vunpack.c.l.b16 %v922
        %v1078 = vunpack.c.h.b16 %v922
        %v1079 = vunpack.c.l.b16 %v923
        %v1080 = vunpack.c.h.b16 %v923
        %v1081 = vunpack.c.l.b16 %v924
        %v1082 = vunpack.c.h.b16 %v924
        %v1083 = vunpack.c.l.b16 %v925
        %v1084 = vunpack.c.h.b16 %v925
        %v1085 = vunpack.c.l.b16 %v926
        %v1086 = vunpack.c.h.b16 %v926
        %v1087 = vunpack.c.l.b16 %v927
        %v1088 = vunpack.c.h.b16 %v927
        %v1089 = vunpack.c.l.b16 %v928
        %v1090 = vunpack.c.h.b16 %v928
        %v1091 = vpack.c.b16 %v987, %v983
        %v1092 = vpack.c.b16 %v988, %v984
        %v1093 = vpack.c.b16 %v989, %v985
        %v1094 = vpack.c.b16 %v990, %v986
        %v1095 = vpack.c.b16 %v995, %v991
        %v1096 = vpack.c.b16 %v996, %v992
        %v1097 = vpack.c.b16 %v997, %v993
        %v1098 = vpack.c.b16 %v998, %v994
        %v1099 = vpack.c.b16 %v1003, %v999
        %v1100 = vpack.c.b16 %v1004, %v1000
        %v1101 = vpack.c.b16 %v1005, %v1001
        %v1102 = vpack.c.b16 %v1006, %v1002
        %v1103 = vpack.c.b16 %v1011, %v1007
        %v1104 = vpack.c.b16 %v1012, %v1008
        %v1105 = vpack.c.b16 %v1013, %v1009
        %v1106 = vpack.c.b16 %v1014, %v1010
        %v1107 = vpack.c.b16 %v1019, %v1015
        %v1108 = vpack.c.b16 %v1020, %v1016
        %v1109 = vpack.c.b16 %v1021, %v1017
        %v1110 = vpack.c.b16 %v1022, %v1018
        %v1111 = vpack.c.b16 %v1027, %v1023
        %v1112 = vpack.c.b16 %v1028, %v1024
        %v1113 = vpack.c.b16 %v1029, %v1025
        %v1114 = vpack.c.b16 %v1030, %v1026
        %v1115 = vpack.c.b16 %v1035, %v1031
        %v1116 = vpack.c.b16 %v1036, %v1032
        %v1117 = vpack.c.b16 %v1037, %v1033
        %v1118 = vpack.c.b16 %v1038, %v1034
        %v1119 = vpack.c.b16 %v1043, %v1039
        %v1120 = vpack.c.b16 %v1044, %v1040
        %v1121 = vpack.c.b16 %v1045, %v1041
        %v1122 = vpack.c.b16 %v1046, %v1042
        %v1123 = vpack.c.b16 %v1051, %v1047
        %v1124 = vpack.c.b16 %v1052, %v1048
        %v1125 = vpack.c.b16 %v1053, %v1049
        %v1126 = vpack.c.b16 %v1054, %v1050
        %v1127 = vpack.c.b16 %v1059, %v1055
        %v1128 = vpack.c.b16 %v1060, %v1056
        %v1129 = vpack.c.b16 %v1061, %v1057
        %v1130 = vpack.c.b16 %v1062, %v1058
        %v1131 = vpack.c.b16 %v1067, %v1063
        %v1132 = vpack.c.b16 %v1068, %v1064
        %v1133 = vpack.c.b16 %v1069, %v1065
        %v1134 = vpack.c.b16 %v1070, %v1066
        %v1135 = vpack.c.b16 %v1075, %v1071
        %v1136 = vpack.c.b16 %v1076, %v1072
        %v1137 = vpack.c.b16 %v1077, %v1073
        %v1138 = vpack.c.b16 %v1078, %v1074
        %v1139 = vpack.c.b16 %v1083, %v1079
        %v1140 = vpack.c.b16 %v1084, %v1080
        %v1141 = vpack.c.b16 %v1085, %v1081
        %v1142 = vpack.c.b16 %v1086, %v1082
        %v1143 = vpack.c.b16 %v1087, %v1087
        %v1144 = vpack.c.b16 %v1088, %v1088
        %v1145 = vpack.c.b16 %v1089, %v1089
        %v1146 = vpack.c.b16 %v1090, %v1090
        %v1200 = vsel %vm755, %v1143, 0
        %v1203 = vsel %vm755, %v1144, 0
        %v1206 = vsel %vm755, %v1145, 0
        %v1209 = vsel %vm755, %v1146, 0
        %1211 = vmatprep.subr.bf16.mxu0 %v1092
        %1212 = vmatpush1.bf16.msra.mxu0 %v1091
        %1213 = vmatprep.subr.bf16.mxu0 %v1096
        %1214 = vmatpush1.bf16.msra.mxu0 %v1095
        %1215 = vmatprep.subr.bf16.mxu0 %v1100
        %1216 = vmatpush1.bf16.msra.mxu0 %v1099
        %1217 = vmatprep.subr.bf16.mxu0 %v1104
        %1218 = vmatpush1.bf16.msra.mxu0 %v1103
        %1219 = vmatprep.subr.bf16.mxu0 %v1108
        %1220 = vmatpush1.bf16.msra.mxu0 %v1107
        %1221 = vmatprep.subr.bf16.mxu0 %v1112
        %1222 = vmatpush1.bf16.msra.mxu0 %v1111
        %1223 = vmatprep.subr.bf16.mxu0 %v1116
        %1224 = vmatpush1.bf16.msra.mxu0 %v1115
        %1225 = vmatprep.subr.bf16.mxu0 %v1120
        %1226 = vmatpush1.bf16.msra.mxu0 %v1119
        %1227 = vmatprep.subr.bf16.mxu0 %v1124
        %1228 = vmatpush1.bf16.msra.mxu0 %v1123
        %1229 = vmatprep.subr.bf16.mxu0 %v1128
        %1230 = vmatpush1.bf16.msra.mxu0 %v1127
        %1231 = vmatprep.subr.bf16.mxu0 %v1132
        %1232 = vmatpush1.bf16.msra.mxu0 %v1131
        %1233 = vmatprep.subr.bf16.mxu0 %v1136
        %1234 = vmatpush1.bf16.msra.mxu0 %v1135
        %1235 = vmatprep.subr.bf16.mxu0 %v1140
        %1236 = vmatpush1.bf16.msra.mxu0 %v1139
        %1237 = vmatprep.subr.bf16.mxu0 %v1203
        %1238 = vmatpush1.bf16.msra.mxu0 %v1200
        %1239 = vmatprep.subr.bf16.mxu0 0
        %1240 = vmatpush1.bf16.msra.mxu0 0
        %1241 = vmatprep.subr.bf16.mxu0 0
        %1242 = vmatpush1.bf16.msra.mxu0 0
        %1243 = vmatprep.mubr.bf16.mxu0 %v750
        %1244 = vmatmul.mubr.bf16.gmra.mrb[0].mxu0 %v472
        %v1245 = vpop.f32.mrb[0].mxu0
        %v1246 = vadd.f32 0.0, %v1245
        %v1247 = vpop.f32.mrb[0].mxu0
        %v1248 = vadd.f32 0.0, %v1247
        %v1249 = vpop.f32.mrb[0].mxu0
        %v1250 = vadd.f32 0.0, %v1249
        %v1251 = vpop.f32.mrb[0].mxu0
        %v1252 = vadd.f32 0.0, %v1251
        %1253 = vmatprep.mubr.bf16.mxu0 %v753
        %1254 = vmatmul.mubr.bf16.gmra.mrb[0].mxu0 %v474
        %v1255 = vpop.f32.mrb[0].mxu0
        %v1256 = vadd.f32 0.0, %v1255
        %v1257 = vpop.f32.mrb[0].mxu0
        %v1258 = vadd.f32 0.0, %v1257
        %v1259 = vpop.f32.mrb[0].mxu0
        %v1260 = vadd.f32 0.0, %v1259
        %v1261 = vpop.f32.mrb[0].mxu0
        %v1262 = vadd.f32 0.0, %v1261
        %1263 = vdwg.mxu0
        %1264 = vmatprep.subr.bf16.mxu0 %v1094
        %1265 = vmatpush1.bf16.msra.mxu0 %v1093
        %1266 = vmatprep.subr.bf16.mxu0 %v1098
        %1267 = vmatpush1.bf16.msra.mxu0 %v1097
        %1268 = vmatprep.subr.bf16.mxu0 %v1102
        %1269 = vmatpush1.bf16.msra.mxu0 %v1101
        %1270 = vmatprep.subr.bf16.mxu0 %v1106
        %1271 = vmatpush1.bf16.msra.mxu0 %v1105
        %1272 = vmatprep.subr.bf16.mxu0 %v1110
        %1273 = vmatpush1.bf16.msra.mxu0 %v1109
        %1274 = vmatprep.subr.bf16.mxu0 %v1114
        %1275 = vmatpush1.bf16.msra.mxu0 %v1113
        %1276 = vmatprep.subr.bf16.mxu0 %v1118
        %1277 = vmatpush1.bf16.msra.mxu0 %v1117
        %1278 = vmatprep.subr.bf16.mxu0 %v1122
        %1279 = vmatpush1.bf16.msra.mxu0 %v1121
        %1280 = vmatprep.subr.bf16.mxu0 %v1126
        %1281 = vmatpush1.bf16.msra.mxu0 %v1125
        %1282 = vmatprep.subr.bf16.mxu0 %v1130
        %1283 = vmatpush1.bf16.msra.mxu0 %v1129
        %1284 = vmatprep.subr.bf16.mxu0 %v1134
        %1285 = vmatpush1.bf16.msra.mxu0 %v1133
        %1286 = vmatprep.subr.bf16.mxu0 %v1138
        %1287 = vmatpush1.bf16.msra.mxu0 %v1137
        %1288 = vmatprep.subr.bf16.mxu0 %v1142
        %1289 = vmatpush1.bf16.msra.mxu0 %v1141
        %1290 = vmatprep.subr.bf16.mxu0 %v1209
        %1291 = vmatpush1.bf16.msra.mxu0 %v1206
        %1292 = vmatprep.subr.bf16.mxu0 0
        %1293 = vmatpush1.bf16.msra.mxu0 0
        %1294 = vmatprep.subr.bf16.mxu0 0
        %1295 = vmatpush1.bf16.msra.mxu0 0
        %1296 = vmatprep.mubr.bf16.mxu0 %v750
        %1297 = vmatmul.mubr.bf16.gmra.mrb[0].mxu0 %v472
        %v1298 = vpop.f32.mrb[0].mxu0
        %v1299 = vadd.f32 0.0, %v1298
        %v1300 = vpop.f32.mrb[0].mxu0
        %v1301 = vadd.f32 0.0, %v1300
        %v1302 = vpop.f32.mrb[0].mxu0
        %v1303 = vadd.f32 0.0, %v1302
        %v1304 = vpop.f32.mrb[0].mxu0
        %v1305 = vadd.f32 0.0, %v1304
        %1306 = vmatprep.mubr.bf16.mxu0 %v753
        %1307 = vmatmul.mubr.bf16.gmra.mrb[0].mxu0 %v474
        %v1308 = vpop.f32.mrb[0].mxu0
        %v1309 = vadd.f32 0.0, %v1308
        %v1310 = vpop.f32.mrb[0].mxu0
        %v1311 = vadd.f32 0.0, %v1310
        %v1312 = vpop.f32.mrb[0].mxu0
        %v1313 = vadd.f32 0.0, %v1312
        %v1314 = vpop.f32.mrb[0].mxu0
        %v1315 = vadd.f32 0.0, %v1314
        %1316 = vdwg.mxu0
        %v1317 = vld [vmem:[%s2] sm:$0xf]
        %v1318 = vlaneseq
        %v1319 = vshrl.u32 %v1318, 7
        %v1320 = vsub.s32 0, %v1319
        %v1321 = vrot.slane %v1317, %v1320
        %1323 = vbcast.lane.b32.xlu0 %v1321, 256
        %v1324 = vpop.permute.xlu0 %1323
        %v1325 = vlaneseq
        %v1326 = vshrl.u32 %v1325, 7
        %v1327 = vsub.s32 1, %v1326
        %v1328 = vrot.slane %v1317, %v1327
        %1330 = vbcast.lane.b32.xlu0 %v1328, 256
        %v1331 = vpop.permute.xlu0 %1330
        %v1332 = vlaneseq
        %v1333 = vshrl.u32 %v1332, 7
        %v1334 = vsub.s32 2, %v1333
        %v1335 = vrot.slane %v1317, %v1334
        %1337 = vbcast.lane.b32.xlu0 %v1335, 256
        %v1338 = vpop.permute.xlu0 %1337
        %v1339 = vlaneseq
        %v1340 = vshrl.u32 %v1339, 7
        %v1341 = vsub.s32 3, %v1340
        %v1342 = vrot.slane %v1317, %v1341
        %1344 = vbcast.lane.b32.xlu0 %v1342, 256
        %v1345 = vpop.permute.xlu0 %1344
        %v1346 = vsel %vm755, 1.0, 0.0
        %v1347 = vrot.slane %v1346, 4
        %v1348 = vadd.f32 %v1346, %v1347
        %v1349 = vrot.slane %v1348, 2
        %v1350 = vadd.f32 %v1348, %v1349
        %v1351 = vrot.slane %v1350, 1
        %v1352 = vadd.f32 %v1350, %v1351
        %v1353 = vrcp.pop %v1352
        %v1354 = vmul.f32 %v1353, %v803
        %v1355 = vmul.f32 %v1353, %v805
        %v1356 = vmul.f32 %v1353, %v856
        %v1357 = vmul.f32 %v1353, %v858
        %v1358 = vmul.f32 %v1353, %v807
        %v1359 = vmul.f32 %v1353, %v809
        %v1360 = vmul.f32 %v1353, %v860
        %v1361 = vmul.f32 %v1353, %v862
        %v1362 = vmul.f32 %v1353, %v813
        %v1363 = vmul.f32 %v1353, %v815
        %v1364 = vmul.f32 %v1353, %v866
        %v1365 = vmul.f32 %v1353, %v868
        %v1366 = vmul.f32 %v1353, %v817
        %v1367 = vmul.f32 %v1353, %v819
        %v1368 = vmul.f32 %v1353, %v870
        %v1369 = vmul.f32 %v1353, %v872
        %v1370 = vadd.f32 %v1354, 0.0
        %v1371 = vadd.f32 %v1355, 0.0
        %v1372 = vadd.f32 %v1356, 0.0
        %v1373 = vadd.f32 %v1357, 0.0
        %v1374 = vadd.f32 %v1358, 0.0
        %v1375 = vadd.f32 %v1359, 0.0
        %v1376 = vadd.f32 %v1360, 0.0
        %v1377 = vadd.f32 %v1361, 0.0
        %v1378 = vadd.f32 %v1362, 0.0
        %v1379 = vadd.f32 %v1363, 0.0
        %v1380 = vadd.f32 %v1364, 0.0
        %v1381 = vadd.f32 %v1365, 0.0
        %v1382 = vadd.f32 %v1366, 0.0
        %v1383 = vadd.f32 %v1367, 0.0
        %v1384 = vadd.f32 %v1368, 0.0
        %v1385 = vadd.f32 %v1369, 0.0
        %v1386 = vmul.f32 %v1353, %v1246
        %v1387 = vmul.f32 %v1353, %v1248
        %v1388 = vmul.f32 %v1353, %v1299
        %v1389 = vmul.f32 %v1353, %v1301
        %v1390 = vmul.f32 %v1353, %v1250
        %v1391 = vmul.f32 %v1353, %v1252
        %v1392 = vmul.f32 %v1353, %v1303
        %v1393 = vmul.f32 %v1353, %v1305
        %v1394 = vmul.f32 %v1353, %v1256
        %v1395 = vmul.f32 %v1353, %v1258
        %v1396 = vmul.f32 %v1353, %v1309
        %v1397 = vmul.f32 %v1353, %v1311
        %v1398 = vmul.f32 %v1353, %v1260
        %v1399 = vmul.f32 %v1353, %v1262
        %v1400 = vmul.f32 %v1353, %v1313
        %v1401 = vmul.f32 %v1353, %v1315
        %v1402 = vadd.f32 %v1370, %v1386
        %v1403 = vadd.f32 %v1371, %v1387
        %v1404 = vadd.f32 %v1372, %v1388
        %v1405 = vadd.f32 %v1373, %v1389
        %v1406 = vadd.f32 %v1374, %v1390
        %v1407 = vadd.f32 %v1375, %v1391
        %v1408 = vadd.f32 %v1376, %v1392
        %v1409 = vadd.f32 %v1377, %v1393
        %v1410 = vadd.f32 %v1378, %v1394
        %v1411 = vadd.f32 %v1379, %v1395
        %v1412 = vadd.f32 %v1380, %v1396
        %v1413 = vadd.f32 %v1381, %v1397
        %v1414 = vadd.f32 %v1382, %v1398
        %v1415 = vadd.f32 %v1383, %v1399
        %v1416 = vadd.f32 %v1384, %v1400
        %v1417 = vadd.f32 %v1385, %v1401
        %v1418 = vadd.f32 %v1402, %v1324
        %v1419 = vadd.f32 %v1403, %v1324
        %v1420 = vadd.f32 %v1404, %v1324
        %v1421 = vadd.f32 %v1405, %v1324
        %v1422 = vadd.f32 %v1406, %v1331
        %v1423 = vadd.f32 %v1407, %v1331
        %v1424 = vadd.f32 %v1408, %v1331
        %v1425 = vadd.f32 %v1409, %v1331
        %v1426 = vadd.f32 %v1410, %v1338
        %v1427 = vadd.f32 %v1411, %v1338
        %v1428 = vadd.f32 %v1412, %v1338
        %v1429 = vadd.f32 %v1413, %v1338
        %v1430 = vadd.f32 %v1414, %v1345
        %v1431 = vadd.f32 %v1415, %v1345
        %v1432 = vadd.f32 %v1416, %v1345
        %v1433 = vadd.f32 %v1417, %v1345
        %v1434 = vmul.f32 %v1418, %v1418
        %v1435 = vmul.f32 %v1419, %v1419
        %v1436 = vmul.f32 %v1420, %v1420
        %v1437 = vmul.f32 %v1421, %v1421
        %v1438 = vmul.f32 %v1422, %v1422
        %v1439 = vmul.f32 %v1423, %v1423
        %v1440 = vmul.f32 %v1424, %v1424
        %v1441 = vmul.f32 %v1425, %v1425
        %v1442 = vmul.f32 %v1426, %v1426
        %v1443 = vmul.f32 %v1427, %v1427
        %v1444 = vmul.f32 %v1428, %v1428
        %v1445 = vmul.f32 %v1429, %v1429
        %v1446 = vmul.f32 %v1430, %v1430
        %v1447 = vmul.f32 %v1431, %v1431
        %v1448 = vmul.f32 %v1432, %v1432
        %v1449 = vmul.f32 %v1433, %v1433
        %v1450 = vrot.slane %v1434, 4
        %v1451 = vadd.f32 %v1434, %v1450
        %v1452 = vrot.slane %v1451, 2
        %v1453 = vadd.f32 %v1451, %v1452
        %v1454 = vrot.slane %v1453, 1
        %v1455 = vadd.f32 %v1453, %v1454
        %v1456 = vrot.slane %v1435, 4
        %v1457 = vadd.f32 %v1435, %v1456
        %v1458 = vrot.slane %v1457, 2
        %v1459 = vadd.f32 %v1457, %v1458
        %v1460 = vrot.slane %v1459, 1
        %v1461 = vadd.f32 %v1459, %v1460
        %v1462 = vrot.slane %v1436, 4
        %v1463 = vadd.f32 %v1436, %v1462
        %v1464 = vrot.slane %v1463, 2
        %v1465 = vadd.f32 %v1463, %v1464
        %v1466 = vrot.slane %v1465, 1
        %v1467 = vadd.f32 %v1465, %v1466
        %v1468 = vrot.slane %v1437, 4
        %v1469 = vadd.f32 %v1437, %v1468
        %v1470 = vrot.slane %v1469, 2
        %v1471 = vadd.f32 %v1469, %v1470
        %v1472 = vrot.slane %v1471, 1
        %v1473 = vadd.f32 %v1471, %v1472
        %v1474 = vrot.slane %v1438, 4
        %v1475 = vadd.f32 %v1438, %v1474
        %v1476 = vrot.slane %v1475, 2
        %v1477 = vadd.f32 %v1475, %v1476
        %v1478 = vrot.slane %v1477, 1
        %v1479 = vadd.f32 %v1477, %v1478
        %v1480 = vrot.slane %v1439, 4
        %v1481 = vadd.f32 %v1439, %v1480
        %v1482 = vrot.slane %v1481, 2
        %v1483 = vadd.f32 %v1481, %v1482
        %v1484 = vrot.slane %v1483, 1
        %v1485 = vadd.f32 %v1483, %v1484
        %v1486 = vrot.slane %v1440, 4
        %v1487 = vadd.f32 %v1440, %v1486
        %v1488 = vrot.slane %v1487, 2
        %v1489 = vadd.f32 %v1487, %v1488
        %v1490 = vrot.slane %v1489, 1
        %v1491 = vadd.f32 %v1489, %v1490
        %v1492 = vrot.slane %v1441, 4
        %v1493 = vadd.f32 %v1441, %v1492
        %v1494 = vrot.slane %v1493, 2
        %v1495 = vadd.f32 %v1493, %v1494
        %v1496 = vrot.slane %v1495, 1
        %v1497 = vadd.f32 %v1495, %v1496
        %v1498 = vrot.slane %v1442, 4
        %v1499 = vadd.f32 %v1442, %v1498
        %v1500 = vrot.slane %v1499, 2
        %v1501 = vadd.f32 %v1499, %v1500
        %v1502 = vrot.slane %v1501, 1
        %v1503 = vadd.f32 %v1501, %v1502
        %v1504 = vrot.slane %v1443, 4
        %v1505 = vadd.f32 %v1443, %v1504
        %v1506 = vrot.slane %v1505, 2
        %v1507 = vadd.f32 %v1505, %v1506
        %v1508 = vrot.slane %v1507, 1
        %v1509 = vadd.f32 %v1507, %v1508
        %v1510 = vrot.slane %v1444, 4
        %v1511 = vadd.f32 %v1444, %v1510
        %v1512 = vrot.slane %v1511, 2
        %v1513 = vadd.f32 %v1511, %v1512
        %v1514 = vrot.slane %v1513, 1
        %v1515 = vadd.f32 %v1513, %v1514
        %v1516 = vrot.slane %v1445, 4
        %v1517 = vadd.f32 %v1445, %v1516
        %v1518 = vrot.slane %v1517, 2
        %v1519 = vadd.f32 %v1517, %v1518
        %v1520 = vrot.slane %v1519, 1
        %v1521 = vadd.f32 %v1519, %v1520
        %v1522 = vrot.slane %v1446, 4
        %v1523 = vadd.f32 %v1446, %v1522
        %v1524 = vrot.slane %v1523, 2
        %v1525 = vadd.f32 %v1523, %v1524
        %v1526 = vrot.slane %v1525, 1
        %v1527 = vadd.f32 %v1525, %v1526
        %v1528 = vrot.slane %v1447, 4
        %v1529 = vadd.f32 %v1447, %v1528
        %v1530 = vrot.slane %v1529, 2
        %v1531 = vadd.f32 %v1529, %v1530
        %v1532 = vrot.slane %v1531, 1
        %v1533 = vadd.f32 %v1531, %v1532
        %v1534 = vrot.slane %v1448, 4
        %v1535 = vadd.f32 %v1448, %v1534
        %v1536 = vrot.slane %v1535, 2
        %v1537 = vadd.f32 %v1535, %v1536
        %v1538 = vrot.slane %v1537, 1
        %v1539 = vadd.f32 %v1537, %v1538
        %v1540 = vrot.slane %v1449, 4
        %v1541 = vadd.f32 %v1449, %v1540
        %v1542 = vrot.slane %v1541, 2
        %v1543 = vadd.f32 %v1541, %v1542
        %v1544 = vrot.slane %v1543, 1
        %v1545 = vadd.f32 %v1543, %v1544
        %v1546 = vrsqrt.pop %v1455
        %v1547 = vmul.f32 %v1455, %v1546
        %vm1548 = vcmp.eq.f32.partialorder %v1455, inf
        %v1549 = vsel %vm1548, %v1455, %v1547
        %vm1550 = vcmp.eq.f32.partialorder %v1455, 0.0
        %v1551 = vand.u32 %v1455, 2147483648
        %v1552 = vsel %vm1550, %v1551, %v1549
        %v1553 = vrsqrt.pop %v1461
        %v1554 = vmul.f32 %v1461, %v1553
        %vm1555 = vcmp.eq.f32.partialorder %v1461, inf
        %v1556 = vsel %vm1555, %v1461, %v1554
        %vm1557 = vcmp.eq.f32.partialorder %v1461, 0.0
        %v1558 = vand.u32 %v1461, 2147483648
        %v1559 = vsel %vm1557, %v1558, %v1556
        %v1560 = vrsqrt.pop %v1467
        %v1561 = vmul.f32 %v1467, %v1560
        %vm1562 = vcmp.eq.f32.partialorder %v1467, inf
        %v1563 = vsel %vm1562, %v1467, %v1561
        %vm1564 = vcmp.eq.f32.partialorder %v1467, 0.0
        %v1565 = vand.u32 %v1467, 2147483648
        %v1566 = vsel %vm1564, %v1565, %v1563
        %v1567 = vrsqrt.pop %v1473
        %v1568 = vmul.f32 %v1473, %v1567
        %vm1569 = vcmp.eq.f32.partialorder %v1473, inf
        %v1570 = vsel %vm1569, %v1473, %v1568
        %vm1571 = vcmp.eq.f32.partialorder %v1473, 0.0
        %v1572 = vand.u32 %v1473, 2147483648
        %v1573 = vsel %vm1571, %v1572, %v1570
        %v1574 = vrsqrt.pop %v1479
        %v1575 = vmul.f32 %v1479, %v1574
        %vm1576 = vcmp.eq.f32.partialorder %v1479, inf
        %v1577 = vsel %vm1576, %v1479, %v1575
        %vm1578 = vcmp.eq.f32.partialorder %v1479, 0.0
        %v1579 = vand.u32 %v1479, 2147483648
        %v1580 = vsel %vm1578, %v1579, %v1577
        %v1581 = vrsqrt.pop %v1485
        %v1582 = vmul.f32 %v1485, %v1581
        %vm1583 = vcmp.eq.f32.partialorder %v1485, inf
        %v1584 = vsel %vm1583, %v1485, %v1582
        %vm1585 = vcmp.eq.f32.partialorder %v1485, 0.0
        %v1586 = vand.u32 %v1485, 2147483648
        %v1587 = vsel %vm1585, %v1586, %v1584
        %v1588 = vrsqrt.pop %v1491
        %v1589 = vmul.f32 %v1491, %v1588
        %vm1590 = vcmp.eq.f32.partialorder %v1491, inf
        %v1591 = vsel %vm1590, %v1491, %v1589
        %vm1592 = vcmp.eq.f32.partialorder %v1491, 0.0
        %v1593 = vand.u32 %v1491, 2147483648
        %v1594 = vsel %vm1592, %v1593, %v1591
        %v1595 = vrsqrt.pop %v1497
        %v1596 = vmul.f32 %v1497, %v1595
        %vm1597 = vcmp.eq.f32.partialorder %v1497, inf
        %v1598 = vsel %vm1597, %v1497, %v1596
        %vm1599 = vcmp.eq.f32.partialorder %v1497, 0.0
        %v1600 = vand.u32 %v1497, 2147483648
        %v1601 = vsel %vm1599, %v1600, %v1598
        %v1602 = vrsqrt.pop %v1503
        %v1603 = vmul.f32 %v1503, %v1602
        %vm1604 = vcmp.eq.f32.partialorder %v1503, inf
        %v1605 = vsel %vm1604, %v1503, %v1603
        %vm1606 = vcmp.eq.f32.partialorder %v1503, 0.0
        %v1607 = vand.u32 %v1503, 2147483648
        %v1608 = vsel %vm1606, %v1607, %v1605
        %v1609 = vrsqrt.pop %v1509
        %v1610 = vmul.f32 %v1509, %v1609
        %vm1611 = vcmp.eq.f32.partialorder %v1509, inf
        %v1612 = vsel %vm1611, %v1509, %v1610
        %vm1613 = vcmp.eq.f32.partialorder %v1509, 0.0
        %v1614 = vand.u32 %v1509, 2147483648
        %v1615 = vsel %vm1613, %v1614, %v1612
        %v1616 = vrsqrt.pop %v1515
        %v1617 = vmul.f32 %v1515, %v1616
        %vm1618 = vcmp.eq.f32.partialorder %v1515, inf
        %v1619 = vsel %vm1618, %v1515, %v1617
        %vm1620 = vcmp.eq.f32.partialorder %v1515, 0.0
        %v1621 = vand.u32 %v1515, 2147483648
        %v1622 = vsel %vm1620, %v1621, %v1619
        %v1623 = vrsqrt.pop %v1521
        %v1624 = vmul.f32 %v1521, %v1623
        %vm1625 = vcmp.eq.f32.partialorder %v1521, inf
        %v1626 = vsel %vm1625, %v1521, %v1624
        %vm1627 = vcmp.eq.f32.partialorder %v1521, 0.0
        %v1628 = vand.u32 %v1521, 2147483648
        %v1629 = vsel %vm1627, %v1628, %v1626
        %v1630 = vrsqrt.pop %v1527
        %v1631 = vmul.f32 %v1527, %v1630
        %vm1632 = vcmp.eq.f32.partialorder %v1527, inf
        %v1633 = vsel %vm1632, %v1527, %v1631
        %vm1634 = vcmp.eq.f32.partialorder %v1527, 0.0
        %v1635 = vand.u32 %v1527, 2147483648
        %v1636 = vsel %vm1634, %v1635, %v1633
        %v1637 = vrsqrt.pop %v1533
        %v1638 = vmul.f32 %v1533, %v1637
        %vm1639 = vcmp.eq.f32.partialorder %v1533, inf
        %v1640 = vsel %vm1639, %v1533, %v1638
        %vm1641 = vcmp.eq.f32.partialorder %v1533, 0.0
        %v1642 = vand.u32 %v1533, 2147483648
        %v1643 = vsel %vm1641, %v1642, %v1640
        %v1644 = vrsqrt.pop %v1539
        %v1645 = vmul.f32 %v1539, %v1644
        %vm1646 = vcmp.eq.f32.partialorder %v1539, inf
        %v1647 = vsel %vm1646, %v1539, %v1645
        %vm1648 = vcmp.eq.f32.partialorder %v1539, 0.0
        %v1649 = vand.u32 %v1539, 2147483648
        %v1650 = vsel %vm1648, %v1649, %v1647
        %v1651 = vrsqrt.pop %v1545
        %v1652 = vmul.f32 %v1545, %v1651
        %vm1653 = vcmp.eq.f32.partialorder %v1545, inf
        %v1654 = vsel %vm1653, %v1545, %v1652
        %vm1655 = vcmp.eq.f32.partialorder %v1545, 0.0
        %v1656 = vand.u32 %v1545, 2147483648
        %v1657 = vsel %vm1655, %v1656, %v1654
        %v1658 = vadd.f32 %v1455, 1.0
        %v1659 = vadd.f32 %v1461, 1.0
        %v1660 = vadd.f32 %v1467, 1.0
        %v1661 = vadd.f32 %v1473, 1.0
        %v1662 = vadd.f32 %v1479, 1.0
        %v1663 = vadd.f32 %v1485, 1.0
        %v1664 = vadd.f32 %v1491, 1.0
        %v1665 = vadd.f32 %v1497, 1.0
        %v1666 = vadd.f32 %v1503, 1.0
        %v1667 = vadd.f32 %v1509, 1.0
        %v1668 = vadd.f32 %v1515, 1.0
        %v1669 = vadd.f32 %v1521, 1.0
        %v1670 = vadd.f32 %v1527, 1.0
        %v1671 = vadd.f32 %v1533, 1.0
        %v1672 = vadd.f32 %v1539, 1.0
        %v1673 = vadd.f32 %v1545, 1.0
        %v1674 = vrcp.pop %v1658
        %v1675 = vrcp.pop %v1659
        %v1676 = vrcp.pop %v1660
        %v1677 = vrcp.pop %v1661
        %v1678 = vrcp.pop %v1662
        %v1679 = vrcp.pop %v1663
        %v1680 = vrcp.pop %v1664
        %v1681 = vrcp.pop %v1665
        %v1682 = vrcp.pop %v1666
        %v1683 = vrcp.pop %v1667
        %v1684 = vrcp.pop %v1668
        %v1685 = vrcp.pop %v1669
        %v1686 = vrcp.pop %v1670
        %v1687 = vrcp.pop %v1671
        %v1688 = vrcp.pop %v1672
        %v1689 = vrcp.pop %v1673
        %v1690 = vmul.f32 %v1552, %v1674
        %v1691 = vmul.f32 %v1559, %v1675
        %v1692 = vmul.f32 %v1566, %v1676
        %v1693 = vmul.f32 %v1573, %v1677
        %v1694 = vmul.f32 %v1580, %v1678
        %v1695 = vmul.f32 %v1587, %v1679
        %v1696 = vmul.f32 %v1594, %v1680
        %v1697 = vmul.f32 %v1601, %v1681
        %v1698 = vmul.f32 %v1608, %v1682
        %v1699 = vmul.f32 %v1615, %v1683
        %v1700 = vmul.f32 %v1622, %v1684
        %v1701 = vmul.f32 %v1629, %v1685
        %v1702 = vmul.f32 %v1636, %v1686
        %v1703 = vmul.f32 %v1643, %v1687
        %v1704 = vmul.f32 %v1650, %v1688
        %v1705 = vmul.f32 %v1657, %v1689
        %v1706 = vmul.f32 %v1418, %v1690
        %v1707 = vmul.f32 %v1419, %v1691
        %v1708 = vmul.f32 %v1420, %v1692
        %v1709 = vmul.f32 %v1421, %v1693
        %v1710 = vmul.f32 %v1422, %v1694
        %v1711 = vmul.f32 %v1423, %v1695
        %v1712 = vmul.f32 %v1424, %v1696
        %v1713 = vmul.f32 %v1425, %v1697
        %v1714 = vmul.f32 %v1426, %v1698
        %v1715 = vmul.f32 %v1427, %v1699
        %v1716 = vmul.f32 %v1428, %v1700
        %v1717 = vmul.f32 %v1429, %v1701
        %v1718 = vmul.f32 %v1430, %v1702
        %v1719 = vmul.f32 %v1431, %v1703
        %v1720 = vmul.f32 %v1432, %v1704
        %v1721 = vmul.f32 %v1433, %v1705
        %v1722 = vmul.f32 %v803, %v1706
        %v1723 = vmul.f32 %v805, %v1707
        %v1724 = vmul.f32 %v856, %v1708
        %v1725 = vmul.f32 %v858, %v1709
        %v1726 = vmul.f32 %v807, %v1710
        %v1727 = vmul.f32 %v809, %v1711
        %v1728 = vmul.f32 %v860, %v1712
        %v1729 = vmul.f32 %v862, %v1713
        %v1730 = vmul.f32 %v813, %v1714
        %v1731 = vmul.f32 %v815, %v1715
        %v1732 = vmul.f32 %v866, %v1716
        %v1733 = vmul.f32 %v868, %v1717
        %v1734 = vmul.f32 %v817, %v1718
        %v1735 = vmul.f32 %v819, %v1719
        %v1736 = vmul.f32 %v870, %v1720
        %v1737 = vmul.f32 %v872, %v1721
        %v1738 = vrot.slane %v1722, 4
        %v1739 = vadd.f32 %v1722, %v1738
        %v1740 = vrot.slane %v1739, 2
        %v1741 = vadd.f32 %v1739, %v1740
        %v1742 = vrot.slane %v1741, 1
        %v1743 = vadd.f32 %v1741, %v1742
        %v1744 = vrot.slane %v1723, 4
        %v1745 = vadd.f32 %v1723, %v1744
        %v1746 = vrot.slane %v1745, 2
        %v1747 = vadd.f32 %v1745, %v1746
        %v1748 = vrot.slane %v1747, 1
        %v1749 = vadd.f32 %v1747, %v1748
        %v1750 = vrot.slane %v1724, 4
        %v1751 = vadd.f32 %v1724, %v1750
        %v1752 = vrot.slane %v1751, 2
        %v1753 = vadd.f32 %v1751, %v1752
        %v1754 = vrot.slane %v1753, 1
        %v1755 = vadd.f32 %v1753, %v1754
        %v1756 = vrot.slane %v1725, 4
        %v1757 = vadd.f32 %v1725, %v1756
        %v1758 = vrot.slane %v1757, 2
        %v1759 = vadd.f32 %v1757, %v1758
        %v1760 = vrot.slane %v1759, 1
        %v1761 = vadd.f32 %v1759, %v1760
        %v1762 = vrot.slane %v1726, 4
        %v1763 = vadd.f32 %v1726, %v1762
        %v1764 = vrot.slane %v1763, 2
        %v1765 = vadd.f32 %v1763, %v1764
        %v1766 = vrot.slane %v1765, 1
        %v1767 = vadd.f32 %v1765, %v1766
        %v1768 = vrot.slane %v1727, 4
        %v1769 = vadd.f32 %v1727, %v1768
        %v1770 = vrot.slane %v1769, 2
        %v1771 = vadd.f32 %v1769, %v1770
        %v1772 = vrot.slane %v1771, 1
        %v1773 = vadd.f32 %v1771, %v1772
        %v1774 = vrot.slane %v1728, 4
        %v1775 = vadd.f32 %v1728, %v1774
        %v1776 = vrot.slane %v1775, 2
        %v1777 = vadd.f32 %v1775, %v1776
        %v1778 = vrot.slane %v1777, 1
        %v1779 = vadd.f32 %v1777, %v1778
        %v1780 = vrot.slane %v1729, 4
        %v1781 = vadd.f32 %v1729, %v1780
        %v1782 = vrot.slane %v1781, 2
        %v1783 = vadd.f32 %v1781, %v1782
        %v1784 = vrot.slane %v1783, 1
        %v1785 = vadd.f32 %v1783, %v1784
        %v1786 = vrot.slane %v1730, 4
        %v1787 = vadd.f32 %v1730, %v1786
        %v1788 = vrot.slane %v1787, 2
        %v1789 = vadd.f32 %v1787, %v1788
        %v1790 = vrot.slane %v1789, 1
        %v1791 = vadd.f32 %v1789, %v1790
        %v1792 = vrot.slane %v1731, 4
        %v1793 = vadd.f32 %v1731, %v1792
        %v1794 = vrot.slane %v1793, 2
        %v1795 = vadd.f32 %v1793, %v1794
        %v1796 = vrot.slane %v1795, 1
        %v1797 = vadd.f32 %v1795, %v1796
        %v1798 = vrot.slane %v1732, 4
        %v1799 = vadd.f32 %v1732, %v1798
        %v1800 = vrot.slane %v1799, 2
        %v1801 = vadd.f32 %v1799, %v1800
        %v1802 = vrot.slane %v1801, 1
        %v1803 = vadd.f32 %v1801, %v1802
        %v1804 = vrot.slane %v1733, 4
        %v1805 = vadd.f32 %v1733, %v1804
        %v1806 = vrot.slane %v1805, 2
        %v1807 = vadd.f32 %v1805, %v1806
        %v1808 = vrot.slane %v1807, 1
        %v1809 = vadd.f32 %v1807, %v1808
        %v1810 = vrot.slane %v1734, 4
        %v1811 = vadd.f32 %v1734, %v1810
        %v1812 = vrot.slane %v1811, 2
        %v1813 = vadd.f32 %v1811, %v1812
        %v1814 = vrot.slane %v1813, 1
        %v1815 = vadd.f32 %v1813, %v1814
        %v1816 = vrot.slane %v1735, 4
        %v1817 = vadd.f32 %v1735, %v1816
        %v1818 = vrot.slane %v1817, 2
        %v1819 = vadd.f32 %v1817, %v1818
        %v1820 = vrot.slane %v1819, 1
        %v1821 = vadd.f32 %v1819, %v1820
        %v1822 = vrot.slane %v1736, 4
        %v1823 = vadd.f32 %v1736, %v1822
        %v1824 = vrot.slane %v1823, 2
        %v1825 = vadd.f32 %v1823, %v1824
        %v1826 = vrot.slane %v1825, 1
        %v1827 = vadd.f32 %v1825, %v1826
        %v1828 = vrot.slane %v1737, 4
        %v1829 = vadd.f32 %v1737, %v1828
        %v1830 = vrot.slane %v1829, 2
        %v1831 = vadd.f32 %v1829, %v1830
        %v1832 = vrot.slane %v1831, 1
        %v1833 = vadd.f32 %v1831, %v1832
        %v1834 = vadd.f32 %v1743, 0.0
        %v1835 = vadd.f32 %v1749, 0.0
        %v1836 = vadd.f32 %v1755, 0.0
        %v1837 = vadd.f32 %v1761, 0.0
        %v1838 = vadd.f32 %v1767, 0.0
        %v1839 = vadd.f32 %v1773, 0.0
        %v1840 = vadd.f32 %v1779, 0.0
        %v1841 = vadd.f32 %v1785, 0.0
        %v1842 = vadd.f32 %v1791, 0.0
        %v1843 = vadd.f32 %v1797, 0.0
        %v1844 = vadd.f32 %v1803, 0.0
        %v1845 = vadd.f32 %v1809, 0.0
        %v1846 = vadd.f32 %v1815, 0.0
        %v1847 = vadd.f32 %v1821, 0.0
        %v1848 = vadd.f32 %v1827, 0.0
        %v1849 = vadd.f32 %v1833, 0.0
        %v1850 = vmul.f32 %v1246, %v1706
        %v1851 = vmul.f32 %v1248, %v1707
        %v1852 = vmul.f32 %v1299, %v1708
        %v1853 = vmul.f32 %v1301, %v1709
        %v1854 = vmul.f32 %v1250, %v1710
        %v1855 = vmul.f32 %v1252, %v1711
        %v1856 = vmul.f32 %v1303, %v1712
        %v1857 = vmul.f32 %v1305, %v1713
        %v1858 = vmul.f32 %v1256, %v1714
        %v1859 = vmul.f32 %v1258, %v1715
        %v1860 = vmul.f32 %v1309, %v1716
        %v1861 = vmul.f32 %v1311, %v1717
        %v1862 = vmul.f32 %v1260, %v1718
        %v1863 = vmul.f32 %v1262, %v1719
        %v1864 = vmul.f32 %v1313, %v1720
        %v1865 = vmul.f32 %v1315, %v1721
        %v1866 = vrot.slane %v1850, 4
        %v1867 = vadd.f32 %v1850, %v1866
        %v1868 = vrot.slane %v1867, 2
        %v1869 = vadd.f32 %v1867, %v1868
        %v1870 = vrot.slane %v1869, 1
        %v1871 = vadd.f32 %v1869, %v1870
        %v1872 = vrot.slane %v1851, 4
        %v1873 = vadd.f32 %v1851, %v1872
        %v1874 = vrot.slane %v1873, 2
        %v1875 = vadd.f32 %v1873, %v1874
        %v1876 = vrot.slane %v1875, 1
        %v1877 = vadd.f32 %v1875, %v1876
        %v1878 = vrot.slane %v1852, 4
        %v1879 = vadd.f32 %v1852, %v1878
        %v1880 = vrot.slane %v1879, 2
        %v1881 = vadd.f32 %v1879, %v1880
        %v1882 = vrot.slane %v1881, 1
        %v1883 = vadd.f32 %v1881, %v1882
        %v1884 = vrot.slane %v1853, 4
        %v1885 = vadd.f32 %v1853, %v1884
        %v1886 = vrot.slane %v1885, 2
        %v1887 = vadd.f32 %v1885, %v1886
        %v1888 = vrot.slane %v1887, 1
        %v1889 = vadd.f32 %v1887, %v1888
        %v1890 = vrot.slane %v1854, 4
        %v1891 = vadd.f32 %v1854, %v1890
        %v1892 = vrot.slane %v1891, 2
        %v1893 = vadd.f32 %v1891, %v1892
        %v1894 = vrot.slane %v1893, 1
        %v1895 = vadd.f32 %v1893, %v1894
        %v1896 = vrot.slane %v1855, 4
        %v1897 = vadd.f32 %v1855, %v1896
        %v1898 = vrot.slane %v1897, 2
        %v1899 = vadd.f32 %v1897, %v1898
        %v1900 = vrot.slane %v1899, 1
        %v1901 = vadd.f32 %v1899, %v1900
        %v1902 = vrot.slane %v1856, 4
        %v1903 = vadd.f32 %v1856, %v1902
        %v1904 = vrot.slane %v1903, 2
        %v1905 = vadd.f32 %v1903, %v1904
        %v1906 = vrot.slane %v1905, 1
        %v1907 = vadd.f32 %v1905, %v1906
        %v1908 = vrot.slane %v1857, 4
        %v1909 = vadd.f32 %v1857, %v1908
        %v1910 = vrot.slane %v1909, 2
        %v1911 = vadd.f32 %v1909, %v1910
        %v1912 = vrot.slane %v1911, 1
        %v1913 = vadd.f32 %v1911, %v1912
        %v1914 = vrot.slane %v1858, 4
        %v1915 = vadd.f32 %v1858, %v1914
        %v1916 = vrot.slane %v1915, 2
        %v1917 = vadd.f32 %v1915, %v1916
        %v1918 = vrot.slane %v1917, 1
        %v1919 = vadd.f32 %v1917, %v1918
        %v1920 = vrot.slane %v1859, 4
        %v1921 = vadd.f32 %v1859, %v1920
        %v1922 = vrot.slane %v1921, 2
        %v1923 = vadd.f32 %v1921, %v1922
        %v1924 = vrot.slane %v1923, 1
        %v1925 = vadd.f32 %v1923, %v1924
        %v1926 = vrot.slane %v1860, 4
        %v1927 = vadd.f32 %v1860, %v1926
        %v1928 = vrot.slane %v1927, 2
        %v1929 = vadd.f32 %v1927, %v1928
        %v1930 = vrot.slane %v1929, 1
        %v1931 = vadd.f32 %v1929, %v1930
        %v1932 = vrot.slane %v1861, 4
        %v1933 = vadd.f32 %v1861, %v1932
        %v1934 = vrot.slane %v1933, 2
        %v1935 = vadd.f32 %v1933, %v1934
        %v1936 = vrot.slane %v1935, 1
        %v1937 = vadd.f32 %v1935, %v1936
        %v1938 = vrot.slane %v1862, 4
        %v1939 = vadd.f32 %v1862, %v1938
        %v1940 = vrot.slane %v1939, 2
        %v1941 = vadd.f32 %v1939, %v1940
        %v1942 = vrot.slane %v1941, 1
        %v1943 = vadd.f32 %v1941, %v1942
        %v1944 = vrot.slane %v1863, 4
        %v1945 = vadd.f32 %v1863, %v1944
        %v1946 = vrot.slane %v1945, 2
        %v1947 = vadd.f32 %v1945, %v1946
        %v1948 = vrot.slane %v1947, 1
        %v1949 = vadd.f32 %v1947, %v1948
        %v1950 = vrot.slane %v1864, 4
        %v1951 = vadd.f32 %v1864, %v1950
        %v1952 = vrot.slane %v1951, 2
        %v1953 = vadd.f32 %v1951, %v1952
        %v1954 = vrot.slane %v1953, 1
        %v1955 = vadd.f32 %v1953, %v1954
        %v1956 = vrot.slane %v1865, 4
        %v1957 = vadd.f32 %v1865, %v1956
        %v1958 = vrot.slane %v1957, 2
        %v1959 = vadd.f32 %v1957, %v1958
        %v1960 = vrot.slane %v1959, 1
        %v1961 = vadd.f32 %v1959, %v1960
        %v1962 = vadd.f32 %v1871, 0.0
        %v1963 = vadd.f32 %v1877, 0.0
        %v1964 = vadd.f32 %v1883, 0.0
        %v1965 = vadd.f32 %v1889, 0.0
        %v1966 = vadd.f32 %v1895, 0.0
        %v1967 = vadd.f32 %v1901, 0.0
        %v1968 = vadd.f32 %v1907, 0.0
        %v1969 = vadd.f32 %v1913, 0.0
        %v1970 = vadd.f32 %v1919, 0.0
        %v1971 = vadd.f32 %v1925, 0.0
        %v1972 = vadd.f32 %v1931, 0.0
        %v1973 = vadd.f32 %v1937, 0.0
        %v1974 = vadd.f32 %v1943, 0.0
        %v1975 = vadd.f32 %v1949, 0.0
        %v1976 = vadd.f32 %v1955, 0.0
        %v1977 = vadd.f32 %v1961, 0.0
        %v1978 = vmax.f32 %v1834, %v1838
        %v1979 = vmax.f32 %v1978, %v1842
        %v1980 = vmax.f32 %v1979, %v1846
        %v1981 = vmax.f32 %v1835, %v1839
        %v1982 = vmax.f32 %v1981, %v1843
        %v1983 = vmax.f32 %v1982, %v1847
        %v1984 = vmax.f32 %v1836, %v1840
        %v1985 = vmax.f32 %v1984, %v1844
        %v1986 = vmax.f32 %v1985, %v1848
        %v1987 = vmax.f32 %v1837, %v1841
        %v1988 = vmax.f32 %v1987, %v1845
        %v1989 = vmax.f32 %v1988, %v1849
        %v1990 = vsub.f32 %v1834, %v1980
        %v1991 = vsub.f32 %v1835, %v1983
        %v1992 = vsub.f32 %v1836, %v1986
        %v1993 = vsub.f32 %v1837, %v1989
        %v1994 = vsub.f32 %v1838, %v1980
        %v1995 = vsub.f32 %v1839, %v1983
        %v1996 = vsub.f32 %v1840, %v1986
        %v1997 = vsub.f32 %v1841, %v1989
        %v1998 = vsub.f32 %v1842, %v1980
        %v1999 = vsub.f32 %v1843, %v1983
        %v2000 = vsub.f32 %v1844, %v1986
        %v2001 = vsub.f32 %v1845, %v1989
        %v2002 = vsub.f32 %v1846, %v1980
        %v2003 = vsub.f32 %v1847, %v1983
        %v2004 = vsub.f32 %v1848, %v1986
        %v2005 = vsub.f32 %v1849, %v1989
        %v2006 = vmul.f32 %v1990, 1.442695
        %v2007 = vpow.pop %v2006
        %v2008 = vmul.f32 %v1991, 1.442695
        %v2009 = vpow.pop %v2008
        %v2010 = vmul.f32 %v1992, 1.442695
        %v2011 = vpow.pop %v2010
        %v2012 = vmul.f32 %v1993, 1.442695
        %v2013 = vpow.pop %v2012
        %v2014 = vmul.f32 %v1994, 1.442695
        %v2015 = vpow.pop %v2014
        %v2016 = vmul.f32 %v1995, 1.442695
        %v2017 = vpow.pop %v2016
        %v2018 = vmul.f32 %v1996, 1.442695
        %v2019 = vpow.pop %v2018
        %v2020 = vmul.f32 %v1997, 1.442695
        %v2021 = vpow.pop %v2020
        %v2022 = vmul.f32 %v1998, 1.442695
        %v2023 = vpow.pop %v2022
        %v2024 = vmul.f32 %v1999, 1.442695
        %v2025 = vpow.pop %v2024
        %v2026 = vmul.f32 %v2000, 1.442695
        %v2027 = vpow.pop %v2026
        %v2028 = vmul.f32 %v2001, 1.442695
        %v2029 = vpow.pop %v2028
        %v2030 = vmul.f32 %v2002, 1.442695
        %v2031 = vpow.pop %v2030
        %v2032 = vmul.f32 %v2003, 1.442695
        %v2033 = vpow.pop %v2032
        %v2034 = vmul.f32 %v2004, 1.442695
        %v2035 = vpow.pop %v2034
        %v2036 = vmul.f32 %v2005, 1.442695
        %v2037 = vpow.pop %v2036
        %v2054 = vrot.slane %v2015, 7
        %vm2055 = vcmask 1041409
        %v2056 = vsel %vm2055, %v2054, %v2007
        %v2057 = vrot.slane %v2023, 6
        %vm2058 = vcmask 1042434
        %v2059 = vsel %vm2058, %v2057, %v2056
        %v2060 = vrot.slane %v2031, 5
        %vm2061 = vcmask 1043459
        %v2062 = vsel %vm2061, %v2060, %v2059
        %v2063 = vrot.slane %v2017, 7
        %v2064 = vsel %vm2055, %v2063, %v2009
        %v2065 = vrot.slane %v2025, 6
        %v2066 = vsel %vm2058, %v2065, %v2064
        %v2067 = vrot.slane %v2033, 5
        %v2068 = vsel %vm2061, %v2067, %v2066
        %v2069 = vrot.slane %v2019, 7
        %v2070 = vsel %vm2055, %v2069, %v2011
        %v2071 = vrot.slane %v2027, 6
        %v2072 = vsel %vm2058, %v2071, %v2070
        %v2073 = vrot.slane %v2035, 5
        %v2074 = vsel %vm2061, %v2073, %v2072
        %v2075 = vrot.slane %v2021, 7
        %v2076 = vsel %vm2055, %v2075, %v2013
        %v2077 = vrot.slane %v2029, 6
        %v2078 = vsel %vm2058, %v2077, %v2076
        %v2079 = vrot.slane %v2037, 5
        %v2080 = vsel %vm2061, %v2079, %v2078
        %v2085 = vsel %vm755, %v2062, 0.0
        %v2086 = vrot.slane %v2085, 4
        %v2087 = vadd.f32 %v2085, %v2086
        %v2088 = vrot.slane %v2087, 2
        %v2089 = vadd.f32 %v2087, %v2088
        %v2090 = vrot.slane %v2089, 1
        %v2091 = vadd.f32 %v2089, %v2090
        %v2092 = vsel %vm755, %v2068, 0.0
        %v2093 = vrot.slane %v2092, 4
        %v2094 = vadd.f32 %v2092, %v2093
        %v2095 = vrot.slane %v2094, 2
        %v2096 = vadd.f32 %v2094, %v2095
        %v2097 = vrot.slane %v2096, 1
        %v2098 = vadd.f32 %v2096, %v2097
        %v2099 = vsel %vm755, %v2074, 0.0
        %v2100 = vrot.slane %v2099, 4
        %v2101 = vadd.f32 %v2099, %v2100
        %v2102 = vrot.slane %v2101, 2
        %v2103 = vadd.f32 %v2101, %v2102
        %v2104 = vrot.slane %v2103, 1
        %v2105 = vadd.f32 %v2103, %v2104
        %v2106 = vsel %vm755, %v2080, 0.0
        %v2107 = vrot.slane %v2106, 4
        %v2108 = vadd.f32 %v2106, %v2107
        %v2109 = vrot.slane %v2108, 2
        %v2110 = vadd.f32 %v2108, %v2109
        %v2111 = vrot.slane %v2110, 1
        %v2112 = vadd.f32 %v2110, %v2111
        %v2113 = vrcp.pop %v2091
        %v2114 = vrcp.pop %v2098
        %v2115 = vrcp.pop %v2105
        %v2116 = vrcp.pop %v2112
        %v2117 = vlaneseq
        %v2118 = vshrl.u32 %v2117, 7
        %v2119 = vsub.s32 0, %v2118
        %v2120 = vrot.slane %v2113, %v2119
        %v2121 = vlaneseq
        %v2122 = vshrl.u32 %v2121, 7
        %v2123 = vsub.s32 0, %v2122
        %v2124 = vrot.slane %v2114, %v2123
        %v2125 = vlaneseq
        %v2126 = vshrl.u32 %v2125, 7
        %v2127 = vsub.s32 0, %v2126
        %v2128 = vrot.slane %v2115, %v2127
        %v2129 = vlaneseq
        %v2130 = vshrl.u32 %v2129, 7
        %v2131 = vsub.s32 0, %v2130
        %v2132 = vrot.slane %v2116, %v2131
        %v2133 = vmul.f32 %v2007, %v2120
        %v2134 = vmul.f32 %v2009, %v2124
        %v2135 = vmul.f32 %v2011, %v2128
        %v2136 = vmul.f32 %v2013, %v2132
        %v2137 = vmul.f32 %v2015, %v2120
        %v2138 = vmul.f32 %v2017, %v2124
        %v2139 = vmul.f32 %v2019, %v2128
        %v2140 = vmul.f32 %v2021, %v2132
        %v2141 = vmul.f32 %v2023, %v2120
        %v2142 = vmul.f32 %v2025, %v2124
        %v2143 = vmul.f32 %v2027, %v2128
        %v2144 = vmul.f32 %v2029, %v2132
        %v2145 = vmul.f32 %v2031, %v2120
        %v2146 = vmul.f32 %v2033, %v2124
        %v2147 = vmul.f32 %v2035, %v2128
        %v2148 = vmul.f32 %v2037, %v2132
        %v2149 = vlaneseq
        %v2150 = vshrl.u32 %v2149, 7
        %v2151 = vsub.s32 0, %v2150
        %v2152 = vrot.slane %v2133, %v2151
        %v2153 = vlaneseq
        %v2154 = vshrl.u32 %v2153, 7
        %v2155 = vsub.s32 0, %v2154
        %v2156 = vrot.slane %v2134, %v2155
        %v2157 = vlaneseq
        %v2158 = vshrl.u32 %v2157, 7
        %v2159 = vsub.s32 0, %v2158
        %v2160 = vrot.slane %v2135, %v2159
        %v2161 = vlaneseq
        %v2162 = vshrl.u32 %v2161, 7
        %v2163 = vsub.s32 0, %v2162
        %v2164 = vrot.slane %v2136, %v2163
        %v2165 = vlaneseq
        %v2166 = vshrl.u32 %v2165, 7
        %v2167 = vsub.s32 0, %v2166
        %v2168 = vrot.slane %v2137, %v2167
        %v2169 = vlaneseq
        %v2170 = vshrl.u32 %v2169, 7
        %v2171 = vsub.s32 0, %v2170
        %v2172 = vrot.slane %v2138, %v2171
        %v2173 = vlaneseq
        %v2174 = vshrl.u32 %v2173, 7
        %v2175 = vsub.s32 0, %v2174
        %v2176 = vrot.slane %v2139, %v2175
        %v2177 = vlaneseq
        %v2178 = vshrl.u32 %v2177, 7
        %v2179 = vsub.s32 0, %v2178
        %v2180 = vrot.slane %v2140, %v2179
        %v2181 = vlaneseq
        %v2182 = vshrl.u32 %v2181, 7
        %v2183 = vsub.s32 0, %v2182
        %v2184 = vrot.slane %v2141, %v2183
        %v2185 = vlaneseq
        %v2186 = vshrl.u32 %v2185, 7
        %v2187 = vsub.s32 0, %v2186
        %v2188 = vrot.slane %v2142, %v2187
        %v2189 = vlaneseq
        %v2190 = vshrl.u32 %v2189, 7
        %v2191 = vsub.s32 0, %v2190
        %v2192 = vrot.slane %v2143, %v2191
        %v2193 = vlaneseq
        %v2194 = vshrl.u32 %v2193, 7
        %v2195 = vsub.s32 0, %v2194
        %v2196 = vrot.slane %v2144, %v2195
        %v2197 = vlaneseq
        %v2198 = vshrl.u32 %v2197, 7
        %v2199 = vsub.s32 0, %v2198
        %v2200 = vrot.slane %v2145, %v2199
        %v2201 = vlaneseq
        %v2202 = vshrl.u32 %v2201, 7
        %v2203 = vsub.s32 0, %v2202
        %v2204 = vrot.slane %v2146, %v2203
        %v2205 = vlaneseq
        %v2206 = vshrl.u32 %v2205, 7
        %v2207 = vsub.s32 0, %v2206
        %v2208 = vrot.slane %v2147, %v2207
        %v2209 = vlaneseq
        %v2210 = vshrl.u32 %v2209, 7
        %v2211 = vsub.s32 0, %v2210
        %v2212 = vrot.slane %v2148, %v2211
        %v2213 = vmul.f32 %v2152, %v803
        %v2214 = vmul.f32 %v2156, %v805
        %v2215 = vmul.f32 %v2160, %v856
        %v2216 = vmul.f32 %v2164, %v858
        %v2217 = vmul.f32 %v2168, %v807
        %v2218 = vmul.f32 %v2172, %v809
        %v2219 = vmul.f32 %v2176, %v860
        %v2220 = vmul.f32 %v2180, %v862
        %v2221 = vmul.f32 %v2184, %v813
        %v2222 = vmul.f32 %v2188, %v815
        %v2223 = vmul.f32 %v2192, %v866
        %v2224 = vmul.f32 %v2196, %v868
        %v2225 = vmul.f32 %v2200, %v817
        %v2226 = vmul.f32 %v2204, %v819
        %v2227 = vmul.f32 %v2208, %v870
        %v2228 = vmul.f32 %v2212, %v872
        %v2229 = vadd.f32 %v2213, 0.0
        %v2230 = vadd.f32 %v2214, 0.0
        %v2231 = vadd.f32 %v2215, 0.0
        %v2232 = vadd.f32 %v2216, 0.0
        %v2233 = vadd.f32 %v2217, 0.0
        %v2234 = vadd.f32 %v2218, 0.0
        %v2235 = vadd.f32 %v2219, 0.0
        %v2236 = vadd.f32 %v2220, 0.0
        %v2237 = vadd.f32 %v2221, 0.0
        %v2238 = vadd.f32 %v2222, 0.0
        %v2239 = vadd.f32 %v2223, 0.0
        %v2240 = vadd.f32 %v2224, 0.0
        %v2241 = vadd.f32 %v2225, 0.0
        %v2242 = vadd.f32 %v2226, 0.0
        %v2243 = vadd.f32 %v2227, 0.0
        %v2244 = vadd.f32 %v2228, 0.0
        %v2245 = vmax.f32 %v1962, %v1966
        %v2246 = vmax.f32 %v2245, %v1970
        %v2247 = vmax.f32 %v2246, %v1974
        %v2248 = vmax.f32 %v1963, %v1967
        %v2249 = vmax.f32 %v2248, %v1971
        %v2250 = vmax.f32 %v2249, %v1975
        %v2251 = vmax.f32 %v1964, %v1968
        %v2252 = vmax.f32 %v2251, %v1972
        %v2253 = vmax.f32 %v2252, %v1976
        %v2254 = vmax.f32 %v1965, %v1969
        %v2255 = vmax.f32 %v2254, %v1973
        %v2256 = vmax.f32 %v2255, %v1977
        %v2257 = vsub.f32 %v1962, %v2247
        %v2258 = vsub.f32 %v1963, %v2250
        %v2259 = vsub.f32 %v1964, %v2253
        %v2260 = vsub.f32 %v1965, %v2256
        %v2261 = vsub.f32 %v1966, %v2247
        %v2262 = vsub.f32 %v1967, %v2250
        %v2263 = vsub.f32 %v1968, %v2253
        %v2264 = vsub.f32 %v1969, %v2256
        %v2265 = vsub.f32 %v1970, %v2247
        %v2266 = vsub.f32 %v1971, %v2250
        %v2267 = vsub.f32 %v1972, %v2253
        %v2268 = vsub.f32 %v1973, %v2256
        %v2269 = vsub.f32 %v1974, %v2247
        %v2270 = vsub.f32 %v1975, %v2250
        %v2271 = vsub.f32 %v1976, %v2253
        %v2272 = vsub.f32 %v1977, %v2256
        %v2273 = vmul.f32 %v2257, 1.442695
        %v2274 = vpow.pop %v2273
        %v2275 = vmul.f32 %v2258, 1.442695
        %v2276 = vpow.pop %v2275
        %v2277 = vmul.f32 %v2259, 1.442695
        %v2278 = vpow.pop %v2277
        %v2279 = vmul.f32 %v2260, 1.442695
        %v2280 = vpow.pop %v2279
        %v2281 = vmul.f32 %v2261, 1.442695
        %v2282 = vpow.pop %v2281
        %v2283 = vmul.f32 %v2262, 1.442695
        %v2284 = vpow.pop %v2283
        %v2285 = vmul.f32 %v2263, 1.442695
        %v2286 = vpow.pop %v2285
        %v2287 = vmul.f32 %v2264, 1.442695
        %v2288 = vpow.pop %v2287
        %v2289 = vmul.f32 %v2265, 1.442695
        %v2290 = vpow.pop %v2289
        %v2291 = vmul.f32 %v2266, 1.442695
        %v2292 = vpow.pop %v2291
        %v2293 = vmul.f32 %v2267, 1.442695
        %v2294 = vpow.pop %v2293
        %v2295 = vmul.f32 %v2268, 1.442695
        %v2296 = vpow.pop %v2295
        %v2297 = vmul.f32 %v2269, 1.442695
        %v2298 = vpow.pop %v2297
        %v2299 = vmul.f32 %v2270, 1.442695
        %v2300 = vpow.pop %v2299
        %v2301 = vmul.f32 %v2271, 1.442695
        %v2302 = vpow.pop %v2301
        %v2303 = vmul.f32 %v2272, 1.442695
        %v2304 = vpow.pop %v2303
        %v2321 = vrot.slane %v2282, 7
        %v2322 = vsel %vm2055, %v2321, %v2274
        %v2323 = vrot.slane %v2290, 6
        %v2324 = vsel %vm2058, %v2323, %v2322
        %v2325 = vrot.slane %v2298, 5
        %v2326 = vsel %vm2061, %v2325, %v2324
        %v2327 = vrot.slane %v2284, 7
        %v2328 = vsel %vm2055, %v2327, %v2276
        %v2329 = vrot.slane %v2292, 6
        %v2330 = vsel %vm2058, %v2329, %v2328
        %v2331 = vrot.slane %v2300, 5
        %v2332 = vsel %vm2061, %v2331, %v2330
        %v2333 = vrot.slane %v2286, 7
        %v2334 = vsel %vm2055, %v2333, %v2278
        %v2335 = vrot.slane %v2294, 6
        %v2336 = vsel %vm2058, %v2335, %v2334
        %v2337 = vrot.slane %v2302, 5
        %v2338 = vsel %vm2061, %v2337, %v2336
        %v2339 = vrot.slane %v2288, 7
        %v2340 = vsel %vm2055, %v2339, %v2280
        %v2341 = vrot.slane %v2296, 6
        %v2342 = vsel %vm2058, %v2341, %v2340
        %v2343 = vrot.slane %v2304, 5
        %v2344 = vsel %vm2061, %v2343, %v2342
        %v2349 = vsel %vm755, %v2326, 0.0
        %v2350 = vrot.slane %v2349, 4
        %v2351 = vadd.f32 %v2349, %v2350
        %v2352 = vrot.slane %v2351, 2
        %v2353 = vadd.f32 %v2351, %v2352
        %v2354 = vrot.slane %v2353, 1
        %v2355 = vadd.f32 %v2353, %v2354
        %v2356 = vsel %vm755, %v2332, 0.0
        %v2357 = vrot.slane %v2356, 4
        %v2358 = vadd.f32 %v2356, %v2357
        %v2359 = vrot.slane %v2358, 2
        %v2360 = vadd.f32 %v2358, %v2359
        %v2361 = vrot.slane %v2360, 1
        %v2362 = vadd.f32 %v2360, %v2361
        %v2363 = vsel %vm755, %v2338, 0.0
        %v2364 = vrot.slane %v2363, 4
        %v2365 = vadd.f32 %v2363, %v2364
        %v2366 = vrot.slane %v2365, 2
        %v2367 = vadd.f32 %v2365, %v2366
        %v2368 = vrot.slane %v2367, 1
        %v2369 = vadd.f32 %v2367, %v2368
        %v2370 = vsel %vm755, %v2344, 0.0
        %v2371 = vrot.slane %v2370, 4
        %v2372 = vadd.f32 %v2370, %v2371
        %v2373 = vrot.slane %v2372, 2
        %v2374 = vadd.f32 %v2372, %v2373
        %v2375 = vrot.slane %v2374, 1
        %v2376 = vadd.f32 %v2374, %v2375
        %v2377 = vrcp.pop %v2355
        %v2378 = vrcp.pop %v2362
        %v2379 = vrcp.pop %v2369
        %v2380 = vrcp.pop %v2376
        %v2381 = vlaneseq
        %v2382 = vshrl.u32 %v2381, 7
        %v2383 = vsub.s32 0, %v2382
        %v2384 = vrot.slane %v2377, %v2383
        %v2385 = vlaneseq
        %v2386 = vshrl.u32 %v2385, 7
        %v2387 = vsub.s32 0, %v2386
        %v2388 = vrot.slane %v2378, %v2387
        %v2389 = vlaneseq
        %v2390 = vshrl.u32 %v2389, 7
        %v2391 = vsub.s32 0, %v2390
        %v2392 = vrot.slane %v2379, %v2391
        %v2393 = vlaneseq
        %v2394 = vshrl.u32 %v2393, 7
        %v2395 = vsub.s32 0, %v2394
        %v2396 = vrot.slane %v2380, %v2395
        %v2397 = vmul.f32 %v2274, %v2384
        %v2398 = vmul.f32 %v2276, %v2388
        %v2399 = vmul.f32 %v2278, %v2392
        %v2400 = vmul.f32 %v2280, %v2396
        %v2401 = vmul.f32 %v2282, %v2384
        %v2402 = vmul.f32 %v2284, %v2388
        %v2403 = vmul.f32 %v2286, %v2392
        %v2404 = vmul.f32 %v2288, %v2396
        %v2405 = vmul.f32 %v2290, %v2384
        %v2406 = vmul.f32 %v2292, %v2388
        %v2407 = vmul.f32 %v2294, %v2392
        %v2408 = vmul.f32 %v2296, %v2396
        %v2409 = vmul.f32 %v2298, %v2384
        %v2410 = vmul.f32 %v2300, %v2388
        %v2411 = vmul.f32 %v2302, %v2392
        %v2412 = vmul.f32 %v2304, %v2396
        %v2413 = vlaneseq
        %v2414 = vshrl.u32 %v2413, 7
        %v2415 = vsub.s32 0, %v2414
        %v2416 = vrot.slane %v2397, %v2415
        %v2417 = vlaneseq
        %v2418 = vshrl.u32 %v2417, 7
        %v2419 = vsub.s32 0, %v2418
        %v2420 = vrot.slane %v2398, %v2419
        %v2421 = vlaneseq
        %v2422 = vshrl.u32 %v2421, 7
        %v2423 = vsub.s32 0, %v2422
        %v2424 = vrot.slane %v2399, %v2423
        %v2425 = vlaneseq
        %v2426 = vshrl.u32 %v2425, 7
        %v2427 = vsub.s32 0, %v2426
        %v2428 = vrot.slane %v2400, %v2427
        %v2429 = vlaneseq
        %v2430 = vshrl.u32 %v2429, 7
        %v2431 = vsub.s32 0, %v2430
        %v2432 = vrot.slane %v2401, %v2431
        %v2433 = vlaneseq
        %v2434 = vshrl.u32 %v2433, 7
        %v2435 = vsub.s32 0, %v2434
        %v2436 = vrot.slane %v2402, %v2435
        %v2437 = vlaneseq
        %v2438 = vshrl.u32 %v2437, 7
        %v2439 = vsub.s32 0, %v2438
        %v2440 = vrot.slane %v2403, %v2439
        %v2441 = vlaneseq
        %v2442 = vshrl.u32 %v2441, 7
        %v2443 = vsub.s32 0, %v2442
        %v2444 = vrot.slane %v2404, %v2443
        %v2445 = vlaneseq
        %v2446 = vshrl.u32 %v2445, 7
        %v2447 = vsub.s32 0, %v2446
        %v2448 = vrot.slane %v2405, %v2447
        %v2449 = vlaneseq
        %v2450 = vshrl.u32 %v2449, 7
        %v2451 = vsub.s32 0, %v2450
        %v2452 = vrot.slane %v2406, %v2451
        %v2453 = vlaneseq
        %v2454 = vshrl.u32 %v2453, 7
        %v2455 = vsub.s32 0, %v2454
        %v2456 = vrot.slane %v2407, %v2455
        %v2457 = vlaneseq
        %v2458 = vshrl.u32 %v2457, 7
        %v2459 = vsub.s32 0, %v2458
        %v2460 = vrot.slane %v2408, %v2459
        %v2461 = vlaneseq
        %v2462 = vshrl.u32 %v2461, 7
        %v2463 = vsub.s32 0, %v2462
        %v2464 = vrot.slane %v2409, %v2463
        %v2465 = vlaneseq
        %v2466 = vshrl.u32 %v2465, 7
        %v2467 = vsub.s32 0, %v2466
        %v2468 = vrot.slane %v2410, %v2467
        %v2469 = vlaneseq
        %v2470 = vshrl.u32 %v2469, 7
        %v2471 = vsub.s32 0, %v2470
        %v2472 = vrot.slane %v2411, %v2471
        %v2473 = vlaneseq
        %v2474 = vshrl.u32 %v2473, 7
        %v2475 = vsub.s32 0, %v2474
        %v2476 = vrot.slane %v2412, %v2475
        %v2477 = vmul.f32 %v2416, %v1246
        %v2478 = vmul.f32 %v2420, %v1248
        %v2479 = vmul.f32 %v2424, %v1299
        %v2480 = vmul.f32 %v2428, %v1301
        %v2481 = vmul.f32 %v2432, %v1250
        %v2482 = vmul.f32 %v2436, %v1252
        %v2483 = vmul.f32 %v2440, %v1303
        %v2484 = vmul.f32 %v2444, %v1305
        %v2485 = vmul.f32 %v2448, %v1256
        %v2486 = vmul.f32 %v2452, %v1258
        %v2487 = vmul.f32 %v2456, %v1309
        %v2488 = vmul.f32 %v2460, %v1311
        %v2489 = vmul.f32 %v2464, %v1260
        %v2490 = vmul.f32 %v2468, %v1262
        %v2491 = vmul.f32 %v2472, %v1313
        %v2492 = vmul.f32 %v2476, %v1315
        %v2493 = vadd.f32 %v2229, %v2477
        %v2494 = vadd.f32 %v2230, %v2478
        %v2495 = vadd.f32 %v2231, %v2479
        %v2496 = vadd.f32 %v2232, %v2480
        %v2497 = vadd.f32 %v2233, %v2481
        %v2498 = vadd.f32 %v2234, %v2482
        %v2499 = vadd.f32 %v2235, %v2483
        %v2500 = vadd.f32 %v2236, %v2484
        %v2501 = vadd.f32 %v2237, %v2485
        %v2502 = vadd.f32 %v2238, %v2486
        %v2503 = vadd.f32 %v2239, %v2487
        %v2504 = vadd.f32 %v2240, %v2488
        %v2505 = vadd.f32 %v2241, %v2489
        %v2506 = vadd.f32 %v2242, %v2490
        %v2507 = vadd.f32 %v2243, %v2491
        %v2508 = vadd.f32 %v2244, %v2492
        %v2509 = vadd.f32 %v2493, %v1324
        %v2510 = vadd.f32 %v2494, %v1324
        %v2511 = vadd.f32 %v2495, %v1324
        %v2512 = vadd.f32 %v2496, %v1324
        %v2513 = vadd.f32 %v2497, %v1331
        %v2514 = vadd.f32 %v2498, %v1331
        %v2515 = vadd.f32 %v2499, %v1331
        %v2516 = vadd.f32 %v2500, %v1331
        %v2517 = vadd.f32 %v2501, %v1338
        %v2518 = vadd.f32 %v2502, %v1338
        %v2519 = vadd.f32 %v2503, %v1338
        %v2520 = vadd.f32 %v2504, %v1338
        %v2521 = vadd.f32 %v2505, %v1345
        %v2522 = vadd.f32 %v2506, %v1345
        %v2523 = vadd.f32 %v2507, %v1345
        %v2524 = vadd.f32 %v2508, %v1345
        %v2525 = vmul.f32 %v2509, %v2509
        %v2526 = vmul.f32 %v2510, %v2510
        %v2527 = vmul.f32 %v2511, %v2511
        %v2528 = vmul.f32 %v2512, %v2512
        %v2529 = vmul.f32 %v2513, %v2513
        %v2530 = vmul.f32 %v2514, %v2514
        %v2531 = vmul.f32 %v2515, %v2515
        %v2532 = vmul.f32 %v2516, %v2516
        %v2533 = vmul.f32 %v2517, %v2517
        %v2534 = vmul.f32 %v2518, %v2518
        %v2535 = vmul.f32 %v2519, %v2519
        %v2536 = vmul.f32 %v2520, %v2520
        %v2537 = vmul.f32 %v2521, %v2521
        %v2538 = vmul.f32 %v2522, %v2522
        %v2539 = vmul.f32 %v2523, %v2523
        %v2540 = vmul.f32 %v2524, %v2524
        %v2541 = vrot.slane %v2525, 4
        %v2542 = vadd.f32 %v2525, %v2541
        %v2543 = vrot.slane %v2542, 2
        %v2544 = vadd.f32 %v2542, %v2543
        %v2545 = vrot.slane %v2544, 1
        %v2546 = vadd.f32 %v2544, %v2545
        %v2547 = vrot.slane %v2526, 4
        %v2548 = vadd.f32 %v2526, %v2547
        %v2549 = vrot.slane %v2548, 2
        %v2550 = vadd.f32 %v2548, %v2549
        %v2551 = vrot.slane %v2550, 1
        %v2552 = vadd.f32 %v2550, %v2551
        %v2553 = vrot.slane %v2527, 4
        %v2554 = vadd.f32 %v2527, %v2553
        %v2555 = vrot.slane %v2554, 2
        %v2556 = vadd.f32 %v2554, %v2555
        %v2557 = vrot.slane %v2556, 1
        %v2558 = vadd.f32 %v2556, %v2557
        %v2559 = vrot.slane %v2528, 4
        %v2560 = vadd.f32 %v2528, %v2559
        %v2561 = vrot.slane %v2560, 2
        %v2562 = vadd.f32 %v2560, %v2561
        %v2563 = vrot.slane %v2562, 1
        %v2564 = vadd.f32 %v2562, %v2563
        %v2565 = vrot.slane %v2529, 4
        %v2566 = vadd.f32 %v2529, %v2565
        %v2567 = vrot.slane %v2566, 2
        %v2568 = vadd.f32 %v2566, %v2567
        %v2569 = vrot.slane %v2568, 1
        %v2570 = vadd.f32 %v2568, %v2569
        %v2571 = vrot.slane %v2530, 4
        %v2572 = vadd.f32 %v2530, %v2571
        %v2573 = vrot.slane %v2572, 2
        %v2574 = vadd.f32 %v2572, %v2573
        %v2575 = vrot.slane %v2574, 1
        %v2576 = vadd.f32 %v2574, %v2575
        %v2577 = vrot.slane %v2531, 4
        %v2578 = vadd.f32 %v2531, %v2577
        %v2579 = vrot.slane %v2578, 2
        %v2580 = vadd.f32 %v2578, %v2579
        %v2581 = vrot.slane %v2580, 1
        %v2582 = vadd.f32 %v2580, %v2581
        %v2583 = vrot.slane %v2532, 4
        %v2584 = vadd.f32 %v2532, %v2583
        %v2585 = vrot.slane %v2584, 2
        %v2586 = vadd.f32 %v2584, %v2585
        %v2587 = vrot.slane %v2586, 1
        %v2588 = vadd.f32 %v2586, %v2587
        %v2589 = vrot.slane %v2533, 4
        %v2590 = vadd.f32 %v2533, %v2589
        %v2591 = vrot.slane %v2590, 2
        %v2592 = vadd.f32 %v2590, %v2591
        %v2593 = vrot.slane %v2592, 1
        %v2594 = vadd.f32 %v2592, %v2593
        %v2595 = vrot.slane %v2534, 4
        %v2596 = vadd.f32 %v2534, %v2595
        %v2597 = vrot.slane %v2596, 2
        %v2598 = vadd.f32 %v2596, %v2597
        %v2599 = vrot.slane %v2598, 1
        %v2600 = vadd.f32 %v2598, %v2599
        %v2601 = vrot.slane %v2535, 4
        %v2602 = vadd.f32 %v2535, %v2601
        %v2603 = vrot.slane %v2602, 2
        %v2604 = vadd.f32 %v2602, %v2603
        %v2605 = vrot.slane %v2604, 1
        %v2606 = vadd.f32 %v2604, %v2605
        %v2607 = vrot.slane %v2536, 4
        %v2608 = vadd.f32 %v2536, %v2607
        %v2609 = vrot.slane %v2608, 2
        %v2610 = vadd.f32 %v2608, %v2609
        %v2611 = vrot.slane %v2610, 1
        %v2612 = vadd.f32 %v2610, %v2611
        %v2613 = vrot.slane %v2537, 4
        %v2614 = vadd.f32 %v2537, %v2613
        %v2615 = vrot.slane %v2614, 2
        %v2616 = vadd.f32 %v2614, %v2615
        %v2617 = vrot.slane %v2616, 1
        %v2618 = vadd.f32 %v2616, %v2617
        %v2619 = vrot.slane %v2538, 4
        %v2620 = vadd.f32 %v2538, %v2619
        %v2621 = vrot.slane %v2620, 2
        %v2622 = vadd.f32 %v2620, %v2621
        %v2623 = vrot.slane %v2622, 1
        %v2624 = vadd.f32 %v2622, %v2623
        %v2625 = vrot.slane %v2539, 4
        %v2626 = vadd.f32 %v2539, %v2625
        %v2627 = vrot.slane %v2626, 2
        %v2628 = vadd.f32 %v2626, %v2627
        %v2629 = vrot.slane %v2628, 1
        %v2630 = vadd.f32 %v2628, %v2629
        %v2631 = vrot.slane %v2540, 4
        %v2632 = vadd.f32 %v2540, %v2631
        %v2633 = vrot.slane %v2632, 2
        %v2634 = vadd.f32 %v2632, %v2633
        %v2635 = vrot.slane %v2634, 1
        %v2636 = vadd.f32 %v2634, %v2635
        %v2637 = vrsqrt.pop %v2546
        %v2638 = vmul.f32 %v2546, %v2637
        %vm2639 = vcmp.eq.f32.partialorder %v2546, inf
        %v2640 = vsel %vm2639, %v2546, %v2638
        %vm2641 = vcmp.eq.f32.partialorder %v2546, 0.0
        %v2642 = vand.u32 %v2546, 2147483648
        %v2643 = vsel %vm2641, %v2642, %v2640
        %v2644 = vrsqrt.pop %v2552
        %v2645 = vmul.f32 %v2552, %v2644
        %vm2646 = vcmp.eq.f32.partialorder %v2552, inf
        %v2647 = vsel %vm2646, %v2552, %v2645
        %vm2648 = vcmp.eq.f32.partialorder %v2552, 0.0
        %v2649 = vand.u32 %v2552, 2147483648
        %v2650 = vsel %vm2648, %v2649, %v2647
        %v2651 = vrsqrt.pop %v2558
        %v2652 = vmul.f32 %v2558, %v2651
        %vm2653 = vcmp.eq.f32.partialorder %v2558, inf
        %v2654 = vsel %vm2653, %v2558, %v2652
        %vm2655 = vcmp.eq.f32.partialorder %v2558, 0.0
        %v2656 = vand.u32 %v2558, 2147483648
        %v2657 = vsel %vm2655, %v2656, %v2654
        %v2658 = vrsqrt.pop %v2564
        %v2659 = vmul.f32 %v2564, %v2658
        %vm2660 = vcmp.eq.f32.partialorder %v2564, inf
        %v2661 = vsel %vm2660, %v2564, %v2659
        %vm2662 = vcmp.eq.f32.partialorder %v2564, 0.0
        %v2663 = vand.u32 %v2564, 2147483648
        %v2664 = vsel %vm2662, %v2663, %v2661
        %v2665 = vrsqrt.pop %v2570
        %v2666 = vmul.f32 %v2570, %v2665
        %vm2667 = vcmp.eq.f32.partialorder %v2570, inf
        %v2668 = vsel %vm2667, %v2570, %v2666
        %vm2669 = vcmp.eq.f32.partialorder %v2570, 0.0
        %v2670 = vand.u32 %v2570, 2147483648
        %v2671 = vsel %vm2669, %v2670, %v2668
        %v2672 = vrsqrt.pop %v2576
        %v2673 = vmul.f32 %v2576, %v2672
        %vm2674 = vcmp.eq.f32.partialorder %v2576, inf
        %v2675 = vsel %vm2674, %v2576, %v2673
        %vm2676 = vcmp.eq.f32.partialorder %v2576, 0.0
        %v2677 = vand.u32 %v2576, 2147483648
        %v2678 = vsel %vm2676, %v2677, %v2675
        %v2679 = vrsqrt.pop %v2582
        %v2680 = vmul.f32 %v2582, %v2679
        %vm2681 = vcmp.eq.f32.partialorder %v2582, inf
        %v2682 = vsel %vm2681, %v2582, %v2680
        %vm2683 = vcmp.eq.f32.partialorder %v2582, 0.0
        %v2684 = vand.u32 %v2582, 2147483648
        %v2685 = vsel %vm2683, %v2684, %v2682
        %v2686 = vrsqrt.pop %v2588
        %v2687 = vmul.f32 %v2588, %v2686
        %vm2688 = vcmp.eq.f32.partialorder %v2588, inf
        %v2689 = vsel %vm2688, %v2588, %v2687
        %vm2690 = vcmp.eq.f32.partialorder %v2588, 0.0
        %v2691 = vand.u32 %v2588, 2147483648
        %v2692 = vsel %vm2690, %v2691, %v2689
        %v2693 = vrsqrt.pop %v2594
        %v2694 = vmul.f32 %v2594, %v2693
        %vm2695 = vcmp.eq.f32.partialorder %v2594, inf
        %v2696 = vsel %vm2695, %v2594, %v2694
        %vm2697 = vcmp.eq.f32.partialorder %v2594, 0.0
        %v2698 = vand.u32 %v2594, 2147483648
        %v2699 = vsel %vm2697, %v2698, %v2696
        %v2700 = vrsqrt.pop %v2600
        %v2701 = vmul.f32 %v2600, %v2700
        %vm2702 = vcmp.eq.f32.partialorder %v2600, inf
        %v2703 = vsel %vm2702, %v2600, %v2701
        %vm2704 = vcmp.eq.f32.partialorder %v2600, 0.0
        %v2705 = vand.u32 %v2600, 2147483648
        %v2706 = vsel %vm2704, %v2705, %v2703
        %v2707 = vrsqrt.pop %v2606
        %v2708 = vmul.f32 %v2606, %v2707
        %vm2709 = vcmp.eq.f32.partialorder %v2606, inf
        %v2710 = vsel %vm2709, %v2606, %v2708
        %vm2711 = vcmp.eq.f32.partialorder %v2606, 0.0
        %v2712 = vand.u32 %v2606, 2147483648
        %v2713 = vsel %vm2711, %v2712, %v2710
        %v2714 = vrsqrt.pop %v2612
        %v2715 = vmul.f32 %v2612, %v2714
        %vm2716 = vcmp.eq.f32.partialorder %v2612, inf
        %v2717 = vsel %vm2716, %v2612, %v2715
        %vm2718 = vcmp.eq.f32.partialorder %v2612, 0.0
        %v2719 = vand.u32 %v2612, 2147483648
        %v2720 = vsel %vm2718, %v2719, %v2717
        %v2721 = vrsqrt.pop %v2618
        %v2722 = vmul.f32 %v2618, %v2721
        %vm2723 = vcmp.eq.f32.partialorder %v2618, inf
        %v2724 = vsel %vm2723, %v2618, %v2722
        %vm2725 = vcmp.eq.f32.partialorder %v2618, 0.0
        %v2726 = vand.u32 %v2618, 2147483648
        %v2727 = vsel %vm2725, %v2726, %v2724
        %v2728 = vrsqrt.pop %v2624
        %v2729 = vmul.f32 %v2624, %v2728
        %vm2730 = vcmp.eq.f32.partialorder %v2624, inf
        %v2731 = vsel %vm2730, %v2624, %v2729
        %vm2732 = vcmp.eq.f32.partialorder %v2624, 0.0
        %v2733 = vand.u32 %v2624, 2147483648
        %v2734 = vsel %vm2732, %v2733, %v2731
        %v2735 = vrsqrt.pop %v2630
        %v2736 = vmul.f32 %v2630, %v2735
        %vm2737 = vcmp.eq.f32.partialorder %v2630, inf
        %v2738 = vsel %vm2737, %v2630, %v2736
        %vm2739 = vcmp.eq.f32.partialorder %v2630, 0.0
        %v2740 = vand.u32 %v2630, 2147483648
        %v2741 = vsel %vm2739, %v2740, %v2738
        %v2742 = vrsqrt.pop %v2636
        %v2743 = vmul.f32 %v2636, %v2742
        %vm2744 = vcmp.eq.f32.partialorder %v2636, inf
        %v2745 = vsel %vm2744, %v2636, %v2743
        %vm2746 = vcmp.eq.f32.partialorder %v2636, 0.0
        %v2747 = vand.u32 %v2636, 2147483648
        %v2748 = vsel %vm2746, %v2747, %v2745
        %v2749 = vadd.f32 %v2546, 1.0
        %v2750 = vadd.f32 %v2552, 1.0
        %v2751 = vadd.f32 %v2558, 1.0
        %v2752 = vadd.f32 %v2564, 1.0
        %v2753 = vadd.f32 %v2570, 1.0
        %v2754 = vadd.f32 %v2576, 1.0
        %v2755 = vadd.f32 %v2582, 1.0
        %v2756 = vadd.f32 %v2588, 1.0
        %v2757 = vadd.f32 %v2594, 1.0
        %v2758 = vadd.f32 %v2600, 1.0
        %v2759 = vadd.f32 %v2606, 1.0
        %v2760 = vadd.f32 %v2612, 1.0
        %v2761 = vadd.f32 %v2618, 1.0
        %v2762 = vadd.f32 %v2624, 1.0
        %v2763 = vadd.f32 %v2630, 1.0
        %v2764 = vadd.f32 %v2636, 1.0
        %v2765 = vrcp.pop %v2749
        %v2766 = vrcp.pop %v2750
        %v2767 = vrcp.pop %v2751
        %v2768 = vrcp.pop %v2752
        %v2769 = vrcp.pop %v2753
        %v2770 = vrcp.pop %v2754
        %v2771 = vrcp.pop %v2755
        %v2772 = vrcp.pop %v2756
        %v2773 = vrcp.pop %v2757
        %v2774 = vrcp.pop %v2758
        %v2775 = vrcp.pop %v2759
        %v2776 = vrcp.pop %v2760
        %v2777 = vrcp.pop %v2761
        %v2778 = vrcp.pop %v2762
        %v2779 = vrcp.pop %v2763
        %v2780 = vrcp.pop %v2764
        %v2781 = vmul.f32 %v2643, %v2765
        %v2782 = vmul.f32 %v2650, %v2766
        %v2783 = vmul.f32 %v2657, %v2767
        %v2784 = vmul.f32 %v2664, %v2768
        %v2785 = vmul.f32 %v2671, %v2769
        %v2786 = vmul.f32 %v2678, %v2770
        %v2787 = vmul.f32 %v2685, %v2771
        %v2788 = vmul.f32 %v2692, %v2772
        %v2789 = vmul.f32 %v2699, %v2773
        %v2790 = vmul.f32 %v2706, %v2774
        %v2791 = vmul.f32 %v2713, %v2775
        %v2792 = vmul.f32 %v2720, %v2776
        %v2793 = vmul.f32 %v2727, %v2777
        %v2794 = vmul.f32 %v2734, %v2778
        %v2795 = vmul.f32 %v2741, %v2779
        %v2796 = vmul.f32 %v2748, %v2780
        %v2797 = vmul.f32 %v2509, %v2781
        %v2798 = vmul.f32 %v2510, %v2782
        %v2799 = vmul.f32 %v2511, %v2783
        %v2800 = vmul.f32 %v2512, %v2784
        %v2801 = vmul.f32 %v2513, %v2785
        %v2802 = vmul.f32 %v2514, %v2786
        %v2803 = vmul.f32 %v2515, %v2787
        %v2804 = vmul.f32 %v2516, %v2788
        %v2805 = vmul.f32 %v2517, %v2789
        %v2806 = vmul.f32 %v2518, %v2790
        %v2807 = vmul.f32 %v2519, %v2791
        %v2808 = vmul.f32 %v2520, %v2792
        %v2809 = vmul.f32 %v2521, %v2793
        %v2810 = vmul.f32 %v2522, %v2794
        %v2811 = vmul.f32 %v2523, %v2795
        %v2812 = vmul.f32 %v2524, %v2796
        %v2813 = vmul.f32 %v803, %v2797
        %v2814 = vmul.f32 %v805, %v2798
        %v2815 = vmul.f32 %v856, %v2799
        %v2816 = vmul.f32 %v858, %v2800
        %v2817 = vmul.f32 %v807, %v2801
        %v2818 = vmul.f32 %v809, %v2802
        %v2819 = vmul.f32 %v860, %v2803
        %v2820 = vmul.f32 %v862, %v2804
        %v2821 = vmul.f32 %v813, %v2805
        %v2822 = vmul.f32 %v815, %v2806
        %v2823 = vmul.f32 %v866, %v2807
        %v2824 = vmul.f32 %v868, %v2808
        %v2825 = vmul.f32 %v817, %v2809
        %v2826 = vmul.f32 %v819, %v2810
        %v2827 = vmul.f32 %v870, %v2811
        %v2828 = vmul.f32 %v872, %v2812
        %v2829 = vrot.slane %v2813, 4
        %v2830 = vadd.f32 %v2813, %v2829
        %v2831 = vrot.slane %v2830, 2
        %v2832 = vadd.f32 %v2830, %v2831
        %v2833 = vrot.slane %v2832, 1
        %v2834 = vadd.f32 %v2832, %v2833
        %v2835 = vrot.slane %v2814, 4
        %v2836 = vadd.f32 %v2814, %v2835
        %v2837 = vrot.slane %v2836, 2
        %v2838 = vadd.f32 %v2836, %v2837
        %v2839 = vrot.slane %v2838, 1
        %v2840 = vadd.f32 %v2838, %v2839
        %v2841 = vrot.slane %v2815, 4
        %v2842 = vadd.f32 %v2815, %v2841
        %v2843 = vrot.slane %v2842, 2
        %v2844 = vadd.f32 %v2842, %v2843
        %v2845 = vrot.slane %v2844, 1
        %v2846 = vadd.f32 %v2844, %v2845
        %v2847 = vrot.slane %v2816, 4
        %v2848 = vadd.f32 %v2816, %v2847
        %v2849 = vrot.slane %v2848, 2
        %v2850 = vadd.f32 %v2848, %v2849
        %v2851 = vrot.slane %v2850, 1
        %v2852 = vadd.f32 %v2850, %v2851
        %v2853 = vrot.slane %v2817, 4
        %v2854 = vadd.f32 %v2817, %v2853
        %v2855 = vrot.slane %v2854, 2
        %v2856 = vadd.f32 %v2854, %v2855
        %v2857 = vrot.slane %v2856, 1
        %v2858 = vadd.f32 %v2856, %v2857
        %v2859 = vrot.slane %v2818, 4
        %v2860 = vadd.f32 %v2818, %v2859
        %v2861 = vrot.slane %v2860, 2
        %v2862 = vadd.f32 %v2860, %v2861
        %v2863 = vrot.slane %v2862, 1
        %v2864 = vadd.f32 %v2862, %v2863
        %v2865 = vrot.slane %v2819, 4
        %v2866 = vadd.f32 %v2819, %v2865
        %v2867 = vrot.slane %v2866, 2
        %v2868 = vadd.f32 %v2866, %v2867
        %v2869 = vrot.slane %v2868, 1
        %v2870 = vadd.f32 %v2868, %v2869
        %v2871 = vrot.slane %v2820, 4
        %v2872 = vadd.f32 %v2820, %v2871
        %v2873 = vrot.slane %v2872, 2
        %v2874 = vadd.f32 %v2872, %v2873
        %v2875 = vrot.slane %v2874, 1
        %v2876 = vadd.f32 %v2874, %v2875
        %v2877 = vrot.slane %v2821, 4
        %v2878 = vadd.f32 %v2821, %v2877
        %v2879 = vrot.slane %v2878, 2
        %v2880 = vadd.f32 %v2878, %v2879
        %v2881 = vrot.slane %v2880, 1
        %v2882 = vadd.f32 %v2880, %v2881
        %v2883 = vrot.slane %v2822, 4
        %v2884 = vadd.f32 %v2822, %v2883
        %v2885 = vrot.slane %v2884, 2
        %v2886 = vadd.f32 %v2884, %v2885
        %v2887 = vrot.slane %v2886, 1
        %v2888 = vadd.f32 %v2886, %v2887
        %v2889 = vrot.slane %v2823, 4
        %v2890 = vadd.f32 %v2823, %v2889
        %v2891 = vrot.slane %v2890, 2
        %v2892 = vadd.f32 %v2890, %v2891
        %v2893 = vrot.slane %v2892, 1
        %v2894 = vadd.f32 %v2892, %v2893
        %v2895 = vrot.slane %v2824, 4
        %v2896 = vadd.f32 %v2824, %v2895
        %v2897 = vrot.slane %v2896, 2
        %v2898 = vadd.f32 %v2896, %v2897
        %v2899 = vrot.slane %v2898, 1
        %v2900 = vadd.f32 %v2898, %v2899
        %v2901 = vrot.slane %v2825, 4
        %v2902 = vadd.f32 %v2825, %v2901
        %v2903 = vrot.slane %v2902, 2
        %v2904 = vadd.f32 %v2902, %v2903
        %v2905 = vrot.slane %v2904, 1
        %v2906 = vadd.f32 %v2904, %v2905
        %v2907 = vrot.slane %v2826, 4
        %v2908 = vadd.f32 %v2826, %v2907
        %v2909 = vrot.slane %v2908, 2
        %v2910 = vadd.f32 %v2908, %v2909
        %v2911 = vrot.slane %v2910, 1
        %v2912 = vadd.f32 %v2910, %v2911
        %v2913 = vrot.slane %v2827, 4
        %v2914 = vadd.f32 %v2827, %v2913
        %v2915 = vrot.slane %v2914, 2
        %v2916 = vadd.f32 %v2914, %v2915
        %v2917 = vrot.slane %v2916, 1
        %v2918 = vadd.f32 %v2916, %v2917
        %v2919 = vrot.slane %v2828, 4
        %v2920 = vadd.f32 %v2828, %v2919
        %v2921 = vrot.slane %v2920, 2
        %v2922 = vadd.f32 %v2920, %v2921
        %v2923 = vrot.slane %v2922, 1
        %v2924 = vadd.f32 %v2922, %v2923
        %v2925 = vadd.f32 %v1834, %v2834
        %v2926 = vadd.f32 %v1835, %v2840
        %v2927 = vadd.f32 %v1836, %v2846
        %v2928 = vadd.f32 %v1837, %v2852
        %v2929 = vadd.f32 %v1838, %v2858
        %v2930 = vadd.f32 %v1839, %v2864
        %v2931 = vadd.f32 %v1840, %v2870
        %v2932 = vadd.f32 %v1841, %v2876
        %v2933 = vadd.f32 %v1842, %v2882
        %v2934 = vadd.f32 %v1843, %v2888
        %v2935 = vadd.f32 %v1844, %v2894
        %v2936 = vadd.f32 %v1845, %v2900
        %v2937 = vadd.f32 %v1846, %v2906
        %v2938 = vadd.f32 %v1847, %v2912
        %v2939 = vadd.f32 %v1848, %v2918
        %v2940 = vadd.f32 %v1849, %v2924
        %v2941 = vmul.f32 %v1246, %v2797
        %v2942 = vmul.f32 %v1248, %v2798
        %v2943 = vmul.f32 %v1299, %v2799
        %v2944 = vmul.f32 %v1301, %v2800
        %v2945 = vmul.f32 %v1250, %v2801
        %v2946 = vmul.f32 %v1252, %v2802
        %v2947 = vmul.f32 %v1303, %v2803
        %v2948 = vmul.f32 %v1305, %v2804
        %v2949 = vmul.f32 %v1256, %v2805
        %v2950 = vmul.f32 %v1258, %v2806
        %v2951 = vmul.f32 %v1309, %v2807
        %v2952 = vmul.f32 %v1311, %v2808
        %v2953 = vmul.f32 %v1260, %v2809
        %v2954 = vmul.f32 %v1262, %v2810
        %v2955 = vmul.f32 %v1313, %v2811
        %v2956 = vmul.f32 %v1315, %v2812
        %v2957 = vrot.slane %v2941, 4
        %v2958 = vadd.f32 %v2941, %v2957
        %v2959 = vrot.slane %v2958, 2
        %v2960 = vadd.f32 %v2958, %v2959
        %v2961 = vrot.slane %v2960, 1
        %v2962 = vadd.f32 %v2960, %v2961
        %v2963 = vrot.slane %v2942, 4
        %v2964 = vadd.f32 %v2942, %v2963
        %v2965 = vrot.slane %v2964, 2
        %v2966 = vadd.f32 %v2964, %v2965
        %v2967 = vrot.slane %v2966, 1
        %v2968 = vadd.f32 %v2966, %v2967
        %v2969 = vrot.slane %v2943, 4
        %v2970 = vadd.f32 %v2943, %v2969
        %v2971 = vrot.slane %v2970, 2
        %v2972 = vadd.f32 %v2970, %v2971
        %v2973 = vrot.slane %v2972, 1
        %v2974 = vadd.f32 %v2972, %v2973
        %v2975 = vrot.slane %v2944, 4
        %v2976 = vadd.f32 %v2944, %v2975
        %v2977 = vrot.slane %v2976, 2
        %v2978 = vadd.f32 %v2976, %v2977
        %v2979 = vrot.slane %v2978, 1
        %v2980 = vadd.f32 %v2978, %v2979
        %v2981 = vrot.slane %v2945, 4
        %v2982 = vadd.f32 %v2945, %v2981
        %v2983 = vrot.slane %v2982, 2
        %v2984 = vadd.f32 %v2982, %v2983
        %v2985 = vrot.slane %v2984, 1
        %v2986 = vadd.f32 %v2984, %v2985
        %v2987 = vrot.slane %v2946, 4
        %v2988 = vadd.f32 %v2946, %v2987
        %v2989 = vrot.slane %v2988, 2
        %v2990 = vadd.f32 %v2988, %v2989
        %v2991 = vrot.slane %v2990, 1
        %v2992 = vadd.f32 %v2990, %v2991
        %v2993 = vrot.slane %v2947, 4
        %v2994 = vadd.f32 %v2947, %v2993
        %v2995 = vrot.slane %v2994, 2
        %v2996 = vadd.f32 %v2994, %v2995
        %v2997 = vrot.slane %v2996, 1
        %v2998 = vadd.f32 %v2996, %v2997
        %v2999 = vrot.slane %v2948, 4
        %v3000 = vadd.f32 %v2948, %v2999
        %v3001 = vrot.slane %v3000, 2
        %v3002 = vadd.f32 %v3000, %v3001
        %v3003 = vrot.slane %v3002, 1
        %v3004 = vadd.f32 %v3002, %v3003
        %v3005 = vrot.slane %v2949, 4
        %v3006 = vadd.f32 %v2949, %v3005
        %v3007 = vrot.slane %v3006, 2
        %v3008 = vadd.f32 %v3006, %v3007
        %v3009 = vrot.slane %v3008, 1
        %v3010 = vadd.f32 %v3008, %v3009
        %v3011 = vrot.slane %v2950, 4
        %v3012 = vadd.f32 %v2950, %v3011
        %v3013 = vrot.slane %v3012, 2
        %v3014 = vadd.f32 %v3012, %v3013
        %v3015 = vrot.slane %v3014, 1
        %v3016 = vadd.f32 %v3014, %v3015
        %v3017 = vrot.slane %v2951, 4
        %v3018 = vadd.f32 %v2951, %v3017
        %v3019 = vrot.slane %v3018, 2
        %v3020 = vadd.f32 %v3018, %v3019
        %v3021 = vrot.slane %v3020, 1
        %v3022 = vadd.f32 %v3020, %v3021
        %v3023 = vrot.slane %v2952, 4
        %v3024 = vadd.f32 %v2952, %v3023
        %v3025 = vrot.slane %v3024, 2
        %v3026 = vadd.f32 %v3024, %v3025
        %v3027 = vrot.slane %v3026, 1
        %v3028 = vadd.f32 %v3026, %v3027
        %v3029 = vrot.slane %v2953, 4
        %v3030 = vadd.f32 %v2953, %v3029
        %v3031 = vrot.slane %v3030, 2
        %v3032 = vadd.f32 %v3030, %v3031
        %v3033 = vrot.slane %v3032, 1
        %v3034 = vadd.f32 %v3032, %v3033
        %v3035 = vrot.slane %v2954, 4
        %v3036 = vadd.f32 %v2954, %v3035
        %v3037 = vrot.slane %v3036, 2
        %v3038 = vadd.f32 %v3036, %v3037
        %v3039 = vrot.slane %v3038, 1
        %v3040 = vadd.f32 %v3038, %v3039
        %v3041 = vrot.slane %v2955, 4
        %v3042 = vadd.f32 %v2955, %v3041
        %v3043 = vrot.slane %v3042, 2
        %v3044 = vadd.f32 %v3042, %v3043
        %v3045 = vrot.slane %v3044, 1
        %v3046 = vadd.f32 %v3044, %v3045
        %v3047 = vrot.slane %v2956, 4
        %v3048 = vadd.f32 %v2956, %v3047
        %v3049 = vrot.slane %v3048, 2
        %v3050 = vadd.f32 %v3048, %v3049
        %v3051 = vrot.slane %v3050, 1
        %v3052 = vadd.f32 %v3050, %v3051
        %v3053 = vadd.f32 %v1962, %v2962
        %v3054 = vadd.f32 %v1963, %v2968
        %v3055 = vadd.f32 %v1964, %v2974
        %v3056 = vadd.f32 %v1965, %v2980
        %v3057 = vadd.f32 %v1966, %v2986
        %v3058 = vadd.f32 %v1967, %v2992
        %v3059 = vadd.f32 %v1968, %v2998
        %v3060 = vadd.f32 %v1969, %v3004
        %v3061 = vadd.f32 %v1970, %v3010
        %v3062 = vadd.f32 %v1971, %v3016
        %v3063 = vadd.f32 %v1972, %v3022
        %v3064 = vadd.f32 %v1973, %v3028
        %v3065 = vadd.f32 %v1974, %v3034
        %v3066 = vadd.f32 %v1975, %v3040
        %v3067 = vadd.f32 %v1976, %v3046
        %v3068 = vadd.f32 %v1977, %v3052
        %v3069 = vmax.f32 %v2925, %v2929
        %v3070 = vmax.f32 %v3069, %v2933
        %v3071 = vmax.f32 %v3070, %v2937
        %v3072 = vmax.f32 %v2926, %v2930
        %v3073 = vmax.f32 %v3072, %v2934
        %v3074 = vmax.f32 %v3073, %v2938
        %v3075 = vmax.f32 %v2927, %v2931
        %v3076 = vmax.f32 %v3075, %v2935
        %v3077 = vmax.f32 %v3076, %v2939
        %v3078 = vmax.f32 %v2928, %v2932
        %v3079 = vmax.f32 %v3078, %v2936
        %v3080 = vmax.f32 %v3079, %v2940
        %v3081 = vsub.f32 %v2925, %v3071
        %v3082 = vsub.f32 %v2926, %v3074
        %v3083 = vsub.f32 %v2927, %v3077
        %v3084 = vsub.f32 %v2928, %v3080
        %v3085 = vsub.f32 %v2929, %v3071
        %v3086 = vsub.f32 %v2930, %v3074
        %v3087 = vsub.f32 %v2931, %v3077
        %v3088 = vsub.f32 %v2932, %v3080
        %v3089 = vsub.f32 %v2933, %v3071
        %v3090 = vsub.f32 %v2934, %v3074
        %v3091 = vsub.f32 %v2935, %v3077
        %v3092 = vsub.f32 %v2936, %v3080
        %v3093 = vsub.f32 %v2937, %v3071
        %v3094 = vsub.f32 %v2938, %v3074
        %v3095 = vsub.f32 %v2939, %v3077
        %v3096 = vsub.f32 %v2940, %v3080
        %v3097 = vmul.f32 %v3081, 1.442695
        %v3098 = vpow.pop %v3097
        %v3099 = vmul.f32 %v3082, 1.442695
        %v3100 = vpow.pop %v3099
        %v3101 = vmul.f32 %v3083, 1.442695
        %v3102 = vpow.pop %v3101
        %v3103 = vmul.f32 %v3084, 1.442695
        %v3104 = vpow.pop %v3103
        %v3105 = vmul.f32 %v3085, 1.442695
        %v3106 = vpow.pop %v3105
        %v3107 = vmul.f32 %v3086, 1.442695
        %v3108 = vpow.pop %v3107
        %v3109 = vmul.f32 %v3087, 1.442695
        %v3110 = vpow.pop %v3109
        %v3111 = vmul.f32 %v3088, 1.442695
        %v3112 = vpow.pop %v3111
        %v3113 = vmul.f32 %v3089, 1.442695
        %v3114 = vpow.pop %v3113
        %v3115 = vmul.f32 %v3090, 1.442695
        %v3116 = vpow.pop %v3115
        %v3117 = vmul.f32 %v3091, 1.442695
        %v3118 = vpow.pop %v3117
        %v3119 = vmul.f32 %v3092, 1.442695
        %v3120 = vpow.pop %v3119
        %v3121 = vmul.f32 %v3093, 1.442695
        %v3122 = vpow.pop %v3121
        %v3123 = vmul.f32 %v3094, 1.442695
        %v3124 = vpow.pop %v3123
        %v3125 = vmul.f32 %v3095, 1.442695
        %v3126 = vpow.pop %v3125
        %v3127 = vmul.f32 %v3096, 1.442695
        %v3128 = vpow.pop %v3127
        %v3145 = vrot.slane %v3106, 7
        %v3146 = vsel %vm2055, %v3145, %v3098
        %v3147 = vrot.slane %v3114, 6
        %v3148 = vsel %vm2058, %v3147, %v3146
        %v3149 = vrot.slane %v3122, 5
        %v3150 = vsel %vm2061, %v3149, %v3148
        %v3151 = vrot.slane %v3108, 7
        %v3152 = vsel %vm2055, %v3151, %v3100
        %v3153 = vrot.slane %v3116, 6
        %v3154 = vsel %vm2058, %v3153, %v3152
        %v3155 = vrot.slane %v3124, 5
        %v3156 = vsel %vm2061, %v3155, %v3154
        %v3157 = vrot.slane %v3110, 7
        %v3158 = vsel %vm2055, %v3157, %v3102
        %v3159 = vrot.slane %v3118, 6
        %v3160 = vsel %vm2058, %v3159, %v3158
        %v3161 = vrot.slane %v3126, 5
        %v3162 = vsel %vm2061, %v3161, %v3160
        %v3163 = vrot.slane %v3112, 7
        %v3164 = vsel %vm2055, %v3163, %v3104
        %v3165 = vrot.slane %v3120, 6
        %v3166 = vsel %vm2058, %v3165, %v3164
        %v3167 = vrot.slane %v3128, 5
        %v3168 = vsel %vm2061, %v3167, %v3166
        %v3173 = vsel %vm755, %v3150, 0.0
        %v3174 = vrot.slane %v3173, 4
        %v3175 = vadd.f32 %v3173, %v3174
        %v3176 = vrot.slane %v3175, 2
        %v3177 = vadd.f32 %v3175, %v3176
        %v3178 = vrot.slane %v3177, 1
        %v3179 = vadd.f32 %v3177, %v3178
        %v3180 = vsel %vm755, %v3156, 0.0
        %v3181 = vrot.slane %v3180, 4
        %v3182 = vadd.f32 %v3180, %v3181
        %v3183 = vrot.slane %v3182, 2
        %v3184 = vadd.f32 %v3182, %v3183
        %v3185 = vrot.slane %v3184, 1
        %v3186 = vadd.f32 %v3184, %v3185
        %v3187 = vsel %vm755, %v3162, 0.0
        %v3188 = vrot.slane %v3187, 4
        %v3189 = vadd.f32 %v3187, %v3188
        %v3190 = vrot.slane %v3189, 2
        %v3191 = vadd.f32 %v3189, %v3190
        %v3192 = vrot.slane %v3191, 1
        %v3193 = vadd.f32 %v3191, %v3192
        %v3194 = vsel %vm755, %v3168, 0.0
        %v3195 = vrot.slane %v3194, 4
        %v3196 = vadd.f32 %v3194, %v3195
        %v3197 = vrot.slane %v3196, 2
        %v3198 = vadd.f32 %v3196, %v3197
        %v3199 = vrot.slane %v3198, 1
        %v3200 = vadd.f32 %v3198, %v3199
        %v3201 = vrcp.pop %v3179
        %v3202 = vrcp.pop %v3186
        %v3203 = vrcp.pop %v3193
        %v3204 = vrcp.pop %v3200
        %v3205 = vlaneseq
        %v3206 = vshrl.u32 %v3205, 7
        %v3207 = vsub.s32 0, %v3206
        %v3208 = vrot.slane %v3201, %v3207
        %v3209 = vlaneseq
        %v3210 = vshrl.u32 %v3209, 7
        %v3211 = vsub.s32 0, %v3210
        %v3212 = vrot.slane %v3202, %v3211
        %v3213 = vlaneseq
        %v3214 = vshrl.u32 %v3213, 7
        %v3215 = vsub.s32 0, %v3214
        %v3216 = vrot.slane %v3203, %v3215
        %v3217 = vlaneseq
        %v3218 = vshrl.u32 %v3217, 7
        %v3219 = vsub.s32 0, %v3218
        %v3220 = vrot.slane %v3204, %v3219
        %v3221 = vmul.f32 %v3098, %v3208
        %v3222 = vmul.f32 %v3100, %v3212
        %v3223 = vmul.f32 %v3102, %v3216
        %v3224 = vmul.f32 %v3104, %v3220
        %v3225 = vmul.f32 %v3106, %v3208
        %v3226 = vmul.f32 %v3108, %v3212
        %v3227 = vmul.f32 %v3110, %v3216
        %v3228 = vmul.f32 %v3112, %v3220
        %v3229 = vmul.f32 %v3114, %v3208
        %v3230 = vmul.f32 %v3116, %v3212
        %v3231 = vmul.f32 %v3118, %v3216
        %v3232 = vmul.f32 %v3120, %v3220
        %v3233 = vmul.f32 %v3122, %v3208
        %v3234 = vmul.f32 %v3124, %v3212
        %v3235 = vmul.f32 %v3126, %v3216
        %v3236 = vmul.f32 %v3128, %v3220
        %v3237 = vlaneseq
        %v3238 = vshrl.u32 %v3237, 7
        %v3239 = vsub.s32 0, %v3238
        %v3240 = vrot.slane %v3221, %v3239
        %v3241 = vlaneseq
        %v3242 = vshrl.u32 %v3241, 7
        %v3243 = vsub.s32 0, %v3242
        %v3244 = vrot.slane %v3222, %v3243
        %v3245 = vlaneseq
        %v3246 = vshrl.u32 %v3245, 7
        %v3247 = vsub.s32 0, %v3246
        %v3248 = vrot.slane %v3223, %v3247
        %v3249 = vlaneseq
        %v3250 = vshrl.u32 %v3249, 7
        %v3251 = vsub.s32 0, %v3250
        %v3252 = vrot.slane %v3224, %v3251
        %v3253 = vlaneseq
        %v3254 = vshrl.u32 %v3253, 7
        %v3255 = vsub.s32 0, %v3254
        %v3256 = vrot.slane %v3225, %v3255
        %v3257 = vlaneseq
        %v3258 = vshrl.u32 %v3257, 7
        %v3259 = vsub.s32 0, %v3258
        %v3260 = vrot.slane %v3226, %v3259
        %v3261 = vlaneseq
        %v3262 = vshrl.u32 %v3261, 7
        %v3263 = vsub.s32 0, %v3262
        %v3264 = vrot.slane %v3227, %v3263
        %v3265 = vlaneseq
        %v3266 = vshrl.u32 %v3265, 7
        %v3267 = vsub.s32 0, %v3266
        %v3268 = vrot.slane %v3228, %v3267
        %v3269 = vlaneseq
        %v3270 = vshrl.u32 %v3269, 7
        %v3271 = vsub.s32 0, %v3270
        %v3272 = vrot.slane %v3229, %v3271
        %v3273 = vlaneseq
        %v3274 = vshrl.u32 %v3273, 7
        %v3275 = vsub.s32 0, %v3274
        %v3276 = vrot.slane %v3230, %v3275
        %v3277 = vlaneseq
        %v3278 = vshrl.u32 %v3277, 7
        %v3279 = vsub.s32 0, %v3278
        %v3280 = vrot.slane %v3231, %v3279
        %v3281 = vlaneseq
        %v3282 = vshrl.u32 %v3281, 7
        %v3283 = vsub.s32 0, %v3282
        %v3284 = vrot.slane %v3232, %v3283
        %v3285 = vlaneseq
        %v3286 = vshrl.u32 %v3285, 7
        %v3287 = vsub.s32 0, %v3286
        %v3288 = vrot.slane %v3233, %v3287
        %v3289 = vlaneseq
        %v3290 = vshrl.u32 %v3289, 7
        %v3291 = vsub.s32 0, %v3290
        %v3292 = vrot.slane %v3234, %v3291
        %v3293 = vlaneseq
        %v3294 = vshrl.u32 %v3293, 7
        %v3295 = vsub.s32 0, %v3294
        %v3296 = vrot.slane %v3235, %v3295
        %v3297 = vlaneseq
        %v3298 = vshrl.u32 %v3297, 7
        %v3299 = vsub.s32 0, %v3298
        %v3300 = vrot.slane %v3236, %v3299
        %v3301 = vmul.f32 %v3240, %v803
        %v3302 = vmul.f32 %v3244, %v805
        %v3303 = vmul.f32 %v3248, %v856
        %v3304 = vmul.f32 %v3252, %v858
        %v3305 = vmul.f32 %v3256, %v807
        %v3306 = vmul.f32 %v3260, %v809
        %v3307 = vmul.f32 %v3264, %v860
        %v3308 = vmul.f32 %v3268, %v862
        %v3309 = vmul.f32 %v3272, %v813
        %v3310 = vmul.f32 %v3276, %v815
        %v3311 = vmul.f32 %v3280, %v866
        %v3312 = vmul.f32 %v3284, %v868
        %v3313 = vmul.f32 %v3288, %v817
        %v3314 = vmul.f32 %v3292, %v819
        %v3315 = vmul.f32 %v3296, %v870
        %v3316 = vmul.f32 %v3300, %v872
        %v3317 = vadd.f32 %v3301, 0.0
        %v3318 = vadd.f32 %v3302, 0.0
        %v3319 = vadd.f32 %v3303, 0.0
        %v3320 = vadd.f32 %v3304, 0.0
        %v3321 = vadd.f32 %v3305, 0.0
        %v3322 = vadd.f32 %v3306, 0.0
        %v3323 = vadd.f32 %v3307, 0.0
        %v3324 = vadd.f32 %v3308, 0.0
        %v3325 = vadd.f32 %v3309, 0.0
        %v3326 = vadd.f32 %v3310, 0.0
        %v3327 = vadd.f32 %v3311, 0.0
        %v3328 = vadd.f32 %v3312, 0.0
        %v3329 = vadd.f32 %v3313, 0.0
        %v3330 = vadd.f32 %v3314, 0.0
        %v3331 = vadd.f32 %v3315, 0.0
        %v3332 = vadd.f32 %v3316, 0.0
        %v3333 = vmax.f32 %v3053, %v3057
        %v3334 = vmax.f32 %v3333, %v3061
        %v3335 = vmax.f32 %v3334, %v3065
        %v3336 = vmax.f32 %v3054, %v3058
        %v3337 = vmax.f32 %v3336, %v3062
        %v3338 = vmax.f32 %v3337, %v3066
        %v3339 = vmax.f32 %v3055, %v3059
        %v3340 = vmax.f32 %v3339, %v3063
        %v3341 = vmax.f32 %v3340, %v3067
        %v3342 = vmax.f32 %v3056, %v3060
        %v3343 = vmax.f32 %v3342, %v3064
        %v3344 = vmax.f32 %v3343, %v3068
        %v3345 = vsub.f32 %v3053, %v3335
        %v3346 = vsub.f32 %v3054, %v3338
        %v3347 = vsub.f32 %v3055, %v3341
        %v3348 = vsub.f32 %v3056, %v3344
        %v3349 = vsub.f32 %v3057, %v3335
        %v3350 = vsub.f32 %v3058, %v3338
        %v3351 = vsub.f32 %v3059, %v3341
        %v3352 = vsub.f32 %v3060, %v3344
        %v3353 = vsub.f32 %v3061, %v3335
        %v3354 = vsub.f32 %v3062, %v3338
        %v3355 = vsub.f32 %v3063, %v3341
        %v3356 = vsub.f32 %v3064, %v3344
        %v3357 = vsub.f32 %v3065, %v3335
        %v3358 = vsub.f32 %v3066, %v3338
        %v3359 = vsub.f32 %v3067, %v3341
        %v3360 = vsub.f32 %v3068, %v3344
        %v3361 = vmul.f32 %v3345, 1.442695
        %v3362 = vpow.pop %v3361
        %v3363 = vmul.f32 %v3346, 1.442695
        %v3364 = vpow.pop %v3363
        %v3365 = vmul.f32 %v3347, 1.442695
        %v3366 = vpow.pop %v3365
        %v3367 = vmul.f32 %v3348, 1.442695
        %v3368 = vpow.pop %v3367
        %v3369 = vmul.f32 %v3349, 1.442695
        %v3370 = vpow.pop %v3369
        %v3371 = vmul.f32 %v3350, 1.442695
        %v3372 = vpow.pop %v3371
        %v3373 = vmul.f32 %v3351, 1.442695
        %v3374 = vpow.pop %v3373
        %v3375 = vmul.f32 %v3352, 1.442695
        %v3376 = vpow.pop %v3375
        %v3377 = vmul.f32 %v3353, 1.442695
        %v3378 = vpow.pop %v3377
        %v3379 = vmul.f32 %v3354, 1.442695
        %v3380 = vpow.pop %v3379
        %v3381 = vmul.f32 %v3355, 1.442695
        %v3382 = vpow.pop %v3381
        %v3383 = vmul.f32 %v3356, 1.442695
        %v3384 = vpow.pop %v3383
        %v3385 = vmul.f32 %v3357, 1.442695
        %v3386 = vpow.pop %v3385
        %v3387 = vmul.f32 %v3358, 1.442695
        %v3388 = vpow.pop %v3387
        %v3389 = vmul.f32 %v3359, 1.442695
        %v3390 = vpow.pop %v3389
        %v3391 = vmul.f32 %v3360, 1.442695
        %v3392 = vpow.pop %v3391
        %v3409 = vrot.slane %v3370, 7
        %v3410 = vsel %vm2055, %v3409, %v3362
        %v3411 = vrot.slane %v3378, 6
        %v3412 = vsel %vm2058, %v3411, %v3410
        %v3413 = vrot.slane %v3386, 5
        %v3414 = vsel %vm2061, %v3413, %v3412
        %v3415 = vrot.slane %v3372, 7
        %v3416 = vsel %vm2055, %v3415, %v3364
        %v3417 = vrot.slane %v3380, 6
        %v3418 = vsel %vm2058, %v3417, %v3416
        %v3419 = vrot.slane %v3388, 5
        %v3420 = vsel %vm2061, %v3419, %v3418
        %v3421 = vrot.slane %v3374, 7
        %v3422 = vsel %vm2055, %v3421, %v3366
        %v3423 = vrot.slane %v3382, 6
        %v3424 = vsel %vm2058, %v3423, %v3422
        %v3425 = vrot.slane %v3390, 5
        %v3426 = vsel %vm2061, %v3425, %v3424
        %v3427 = vrot.slane %v3376, 7
        %v3428 = vsel %vm2055, %v3427, %v3368
        %v3429 = vrot.slane %v3384, 6
        %v3430 = vsel %vm2058, %v3429, %v3428
        %v3431 = vrot.slane %v3392, 5
        %v3432 = vsel %vm2061, %v3431, %v3430
        %v3437 = vsel %vm755, %v3414, 0.0
        %v3438 = vrot.slane %v3437, 4
        %v3439 = vadd.f32 %v3437, %v3438
        %v3440 = vrot.slane %v3439, 2
        %v3441 = vadd.f32 %v3439, %v3440
        %v3442 = vrot.slane %v3441, 1
        %v3443 = vadd.f32 %v3441, %v3442
        %v3444 = vsel %vm755, %v3420, 0.0
        %v3445 = vrot.slane %v3444, 4
        %v3446 = vadd.f32 %v3444, %v3445
        %v3447 = vrot.slane %v3446, 2
        %v3448 = vadd.f32 %v3446, %v3447
        %v3449 = vrot.slane %v3448, 1
        %v3450 = vadd.f32 %v3448, %v3449
        %v3451 = vsel %vm755, %v3426, 0.0
        %v3452 = vrot.slane %v3451, 4
        %v3453 = vadd.f32 %v3451, %v3452
        %v3454 = vrot.slane %v3453, 2
        %v3455 = vadd.f32 %v3453, %v3454
        %v3456 = vrot.slane %v3455, 1
        %v3457 = vadd.f32 %v3455, %v3456
        %v3458 = vsel %vm755, %v3432, 0.0
        %v3459 = vrot.slane %v3458, 4
        %v3460 = vadd.f32 %v3458, %v3459
        %v3461 = vrot.slane %v3460, 2
        %v3462 = vadd.f32 %v3460, %v3461
        %v3463 = vrot.slane %v3462, 1
        %v3464 = vadd.f32 %v3462, %v3463
        %v3465 = vrcp.pop %v3443
        %v3466 = vrcp.pop %v3450
        %v3467 = vrcp.pop %v3457
        %v3468 = vrcp.pop %v3464
        %v3469 = vlaneseq
        %v3470 = vshrl.u32 %v3469, 7
        %v3471 = vsub.s32 0, %v3470
        %v3472 = vrot.slane %v3465, %v3471
        %v3473 = vlaneseq
        %v3474 = vshrl.u32 %v3473, 7
        %v3475 = vsub.s32 0, %v3474
        %v3476 = vrot.slane %v3466, %v3475
        %v3477 = vlaneseq
        %v3478 = vshrl.u32 %v3477, 7
        %v3479 = vsub.s32 0, %v3478
        %v3480 = vrot.slane %v3467, %v3479
        %v3481 = vlaneseq
        %v3482 = vshrl.u32 %v3481, 7
        %v3483 = vsub.s32 0, %v3482
        %v3484 = vrot.slane %v3468, %v3483
        %v3485 = vmul.f32 %v3362, %v3472
        %v3486 = vmul.f32 %v3364, %v3476
        %v3487 = vmul.f32 %v3366, %v3480
        %v3488 = vmul.f32 %v3368, %v3484
        %v3489 = vmul.f32 %v3370, %v3472
        %v3490 = vmul.f32 %v3372, %v3476
        %v3491 = vmul.f32 %v3374, %v3480
        %v3492 = vmul.f32 %v3376, %v3484
        %v3493 = vmul.f32 %v3378, %v3472
        %v3494 = vmul.f32 %v3380, %v3476
        %v3495 = vmul.f32 %v3382, %v3480
        %v3496 = vmul.f32 %v3384, %v3484
        %v3497 = vmul.f32 %v3386, %v3472
        %v3498 = vmul.f32 %v3388, %v3476
        %v3499 = vmul.f32 %v3390, %v3480
        %v3500 = vmul.f32 %v3392, %v3484
        %v3501 = vlaneseq
        %v3502 = vshrl.u32 %v3501, 7
        %v3503 = vsub.s32 0, %v3502
        %v3504 = vrot.slane %v3485, %v3503
        %v3505 = vlaneseq
        %v3506 = vshrl.u32 %v3505, 7
        %v3507 = vsub.s32 0, %v3506
        %v3508 = vrot.slane %v3486, %v3507
        %v3509 = vlaneseq
        %v3510 = vshrl.u32 %v3509, 7
        %v3511 = vsub.s32 0, %v3510
        %v3512 = vrot.slane %v3487, %v3511
        %v3513 = vlaneseq
        %v3514 = vshrl.u32 %v3513, 7
        %v3515 = vsub.s32 0, %v3514
        %v3516 = vrot.slane %v3488, %v3515
        %v3517 = vlaneseq
        %v3518 = vshrl.u32 %v3517, 7
        %v3519 = vsub.s32 0, %v3518
        %v3520 = vrot.slane %v3489, %v3519
        %v3521 = vlaneseq
        %v3522 = vshrl.u32 %v3521, 7
        %v3523 = vsub.s32 0, %v3522
        %v3524 = vrot.slane %v3490, %v3523
        %v3525 = vlaneseq
        %v3526 = vshrl.u32 %v3525, 7
        %v3527 = vsub.s32 0, %v3526
        %v3528 = vrot.slane %v3491, %v3527
        %v3529 = vlaneseq
        %v3530 = vshrl.u32 %v3529, 7
        %v3531 = vsub.s32 0, %v3530
        %v3532 = vrot.slane %v3492, %v3531
        %v3533 = vlaneseq
        %v3534 = vshrl.u32 %v3533, 7
        %v3535 = vsub.s32 0, %v3534
        %v3536 = vrot.slane %v3493, %v3535
        %v3537 = vlaneseq
        %v3538 = vshrl.u32 %v3537, 7
        %v3539 = vsub.s32 0, %v3538
        %v3540 = vrot.slane %v3494, %v3539
        %v3541 = vlaneseq
        %v3542 = vshrl.u32 %v3541, 7
        %v3543 = vsub.s32 0, %v3542
        %v3544 = vrot.slane %v3495, %v3543
        %v3545 = vlaneseq
        %v3546 = vshrl.u32 %v3545, 7
        %v3547 = vsub.s32 0, %v3546
        %v3548 = vrot.slane %v3496, %v3547
        %v3549 = vlaneseq
        %v3550 = vshrl.u32 %v3549, 7
        %v3551 = vsub.s32 0, %v3550
        %v3552 = vrot.slane %v3497, %v3551
        %v3553 = vlaneseq
        %v3554 = vshrl.u32 %v3553, 7
        %v3555 = vsub.s32 0, %v3554
        %v3556 = vrot.slane %v3498, %v3555
        %v3557 = vlaneseq
        %v3558 = vshrl.u32 %v3557, 7
        %v3559 = vsub.s32 0, %v3558
        %v3560 = vrot.slane %v3499, %v3559
        %v3561 = vlaneseq
        %v3562 = vshrl.u32 %v3561, 7
        %v3563 = vsub.s32 0, %v3562
        %v3564 = vrot.slane %v3500, %v3563
        %v3565 = vmul.f32 %v3504, %v1246
        %v3566 = vmul.f32 %v3508, %v1248
        %v3567 = vmul.f32 %v3512, %v1299
        %v3568 = vmul.f32 %v3516, %v1301
        %v3569 = vmul.f32 %v3520, %v1250
        %v3570 = vmul.f32 %v3524, %v1252
        %v3571 = vmul.f32 %v3528, %v1303
        %v3572 = vmul.f32 %v3532, %v1305
        %v3573 = vmul.f32 %v3536, %v1256
        %v3574 = vmul.f32 %v3540, %v1258
        %v3575 = vmul.f32 %v3544, %v1309
        %v3576 = vmul.f32 %v3548, %v1311
        %v3577 = vmul.f32 %v3552, %v1260
        %v3578 = vmul.f32 %v3556, %v1262
        %v3579 = vmul.f32 %v3560, %v1313
        %v3580 = vmul.f32 %v3564, %v1315
        %v3581 = vadd.f32 %v3317, %v3565
        %v3582 = vadd.f32 %v3318, %v3566
        %v3583 = vadd.f32 %v3319, %v3567
        %v3584 = vadd.f32 %v3320, %v3568
        %v3585 = vadd.f32 %v3321, %v3569
        %v3586 = vadd.f32 %v3322, %v3570
        %v3587 = vadd.f32 %v3323, %v3571
        %v3588 = vadd.f32 %v3324, %v3572
        %v3589 = vadd.f32 %v3325, %v3573
        %v3590 = vadd.f32 %v3326, %v3574
        %v3591 = vadd.f32 %v3327, %v3575
        %v3592 = vadd.f32 %v3328, %v3576
        %v3593 = vadd.f32 %v3329, %v3577
        %v3594 = vadd.f32 %v3330, %v3578
        %v3595 = vadd.f32 %v3331, %v3579
        %v3596 = vadd.f32 %v3332, %v3580
        %v3597 = vadd.f32 %v3581, %v1324
        %v3598 = vadd.f32 %v3582, %v1324
        %v3599 = vadd.f32 %v3583, %v1324
        %v3600 = vadd.f32 %v3584, %v1324
        %v3601 = vadd.f32 %v3585, %v1331
        %v3602 = vadd.f32 %v3586, %v1331
        %v3603 = vadd.f32 %v3587, %v1331
        %v3604 = vadd.f32 %v3588, %v1331
        %v3605 = vadd.f32 %v3589, %v1338
        %v3606 = vadd.f32 %v3590, %v1338
        %v3607 = vadd.f32 %v3591, %v1338
        %v3608 = vadd.f32 %v3592, %v1338
        %v3609 = vadd.f32 %v3593, %v1345
        %v3610 = vadd.f32 %v3594, %v1345
        %v3611 = vadd.f32 %v3595, %v1345
        %v3612 = vadd.f32 %v3596, %v1345
        %v3613 = vmul.f32 %v3597, %v3597
        %v3614 = vmul.f32 %v3598, %v3598
        %v3615 = vmul.f32 %v3599, %v3599
        %v3616 = vmul.f32 %v3600, %v3600
        %v3617 = vmul.f32 %v3601, %v3601
        %v3618 = vmul.f32 %v3602, %v3602
        %v3619 = vmul.f32 %v3603, %v3603
        %v3620 = vmul.f32 %v3604, %v3604
        %v3621 = vmul.f32 %v3605, %v3605
        %v3622 = vmul.f32 %v3606, %v3606
        %v3623 = vmul.f32 %v3607, %v3607
        %v3624 = vmul.f32 %v3608, %v3608
        %v3625 = vmul.f32 %v3609, %v3609
        %v3626 = vmul.f32 %v3610, %v3610
        %v3627 = vmul.f32 %v3611, %v3611
        %v3628 = vmul.f32 %v3612, %v3612
        %v3629 = vrot.slane %v3613, 4
        %v3630 = vadd.f32 %v3613, %v3629
        %v3631 = vrot.slane %v3630, 2
        %v3632 = vadd.f32 %v3630, %v3631
        %v3633 = vrot.slane %v3632, 1
        %v3634 = vadd.f32 %v3632, %v3633
        %v3635 = vrot.slane %v3614, 4
        %v3636 = vadd.f32 %v3614, %v3635
        %v3637 = vrot.slane %v3636, 2
        %v3638 = vadd.f32 %v3636, %v3637
        %v3639 = vrot.slane %v3638, 1
        %v3640 = vadd.f32 %v3638, %v3639
        %v3641 = vrot.slane %v3615, 4
        %v3642 = vadd.f32 %v3615, %v3641
        %v3643 = vrot.slane %v3642, 2
        %v3644 = vadd.f32 %v3642, %v3643
        %v3645 = vrot.slane %v3644, 1
        %v3646 = vadd.f32 %v3644, %v3645
        %v3647 = vrot.slane %v3616, 4
        %v3648 = vadd.f32 %v3616, %v3647
        %v3649 = vrot.slane %v3648, 2
        %v3650 = vadd.f32 %v3648, %v3649
        %v3651 = vrot.slane %v3650, 1
        %v3652 = vadd.f32 %v3650, %v3651
        %v3653 = vrot.slane %v3617, 4
        %v3654 = vadd.f32 %v3617, %v3653
        %v3655 = vrot.slane %v3654, 2
        %v3656 = vadd.f32 %v3654, %v3655
        %v3657 = vrot.slane %v3656, 1
        %v3658 = vadd.f32 %v3656, %v3657
        %v3659 = vrot.slane %v3618, 4
        %v3660 = vadd.f32 %v3618, %v3659
        %v3661 = vrot.slane %v3660, 2
        %v3662 = vadd.f32 %v3660, %v3661
        %v3663 = vrot.slane %v3662, 1
        %v3664 = vadd.f32 %v3662, %v3663
        %v3665 = vrot.slane %v3619, 4
        %v3666 = vadd.f32 %v3619, %v3665
        %v3667 = vrot.slane %v3666, 2
        %v3668 = vadd.f32 %v3666, %v3667
        %v3669 = vrot.slane %v3668, 1
        %v3670 = vadd.f32 %v3668, %v3669
        %v3671 = vrot.slane %v3620, 4
        %v3672 = vadd.f32 %v3620, %v3671
        %v3673 = vrot.slane %v3672, 2
        %v3674 = vadd.f32 %v3672, %v3673
        %v3675 = vrot.slane %v3674, 1
        %v3676 = vadd.f32 %v3674, %v3675
        %v3677 = vrot.slane %v3621, 4
        %v3678 = vadd.f32 %v3621, %v3677
        %v3679 = vrot.slane %v3678, 2
        %v3680 = vadd.f32 %v3678, %v3679
        %v3681 = vrot.slane %v3680, 1
        %v3682 = vadd.f32 %v3680, %v3681
        %v3683 = vrot.slane %v3622, 4
        %v3684 = vadd.f32 %v3622, %v3683
        %v3685 = vrot.slane %v3684, 2
        %v3686 = vadd.f32 %v3684, %v3685
        %v3687 = vrot.slane %v3686, 1
        %v3688 = vadd.f32 %v3686, %v3687
        %v3689 = vrot.slane %v3623, 4
        %v3690 = vadd.f32 %v3623, %v3689
        %v3691 = vrot.slane %v3690, 2
        %v3692 = vadd.f32 %v3690, %v3691
        %v3693 = vrot.slane %v3692, 1
        %v3694 = vadd.f32 %v3692, %v3693
        %v3695 = vrot.slane %v3624, 4
        %v3696 = vadd.f32 %v3624, %v3695
        %v3697 = vrot.slane %v3696, 2
        %v3698 = vadd.f32 %v3696, %v3697
        %v3699 = vrot.slane %v3698, 1
        %v3700 = vadd.f32 %v3698, %v3699
        %v3701 = vrot.slane %v3625, 4
        %v3702 = vadd.f32 %v3625, %v3701
        %v3703 = vrot.slane %v3702, 2
        %v3704 = vadd.f32 %v3702, %v3703
        %v3705 = vrot.slane %v3704, 1
        %v3706 = vadd.f32 %v3704, %v3705
        %v3707 = vrot.slane %v3626, 4
        %v3708 = vadd.f32 %v3626, %v3707
        %v3709 = vrot.slane %v3708, 2
        %v3710 = vadd.f32 %v3708, %v3709
        %v3711 = vrot.slane %v3710, 1
        %v3712 = vadd.f32 %v3710, %v3711
        %v3713 = vrot.slane %v3627, 4
        %v3714 = vadd.f32 %v3627, %v3713
        %v3715 = vrot.slane %v3714, 2
        %v3716 = vadd.f32 %v3714, %v3715
        %v3717 = vrot.slane %v3716, 1
        %v3718 = vadd.f32 %v3716, %v3717
        %v3719 = vrot.slane %v3628, 4
        %v3720 = vadd.f32 %v3628, %v3719
        %v3721 = vrot.slane %v3720, 2
        %v3722 = vadd.f32 %v3720, %v3721
        %v3723 = vrot.slane %v3722, 1
        %v3724 = vadd.f32 %v3722, %v3723
        %v3725 = vrsqrt.pop %v3634
        %v3726 = vmul.f32 %v3634, %v3725
        %vm3727 = vcmp.eq.f32.partialorder %v3634, inf
        %v3728 = vsel %vm3727, %v3634, %v3726
        %vm3729 = vcmp.eq.f32.partialorder %v3634, 0.0
        %v3730 = vand.u32 %v3634, 2147483648
        %v3731 = vsel %vm3729, %v3730, %v3728
        %v3732 = vrsqrt.pop %v3640
        %v3733 = vmul.f32 %v3640, %v3732
        %vm3734 = vcmp.eq.f32.partialorder %v3640, inf
        %v3735 = vsel %vm3734, %v3640, %v3733
        %vm3736 = vcmp.eq.f32.partialorder %v3640, 0.0
        %v3737 = vand.u32 %v3640, 2147483648
        %v3738 = vsel %vm3736, %v3737, %v3735
        %v3739 = vrsqrt.pop %v3646
        %v3740 = vmul.f32 %v3646, %v3739
        %vm3741 = vcmp.eq.f32.partialorder %v3646, inf
        %v3742 = vsel %vm3741, %v3646, %v3740
        %vm3743 = vcmp.eq.f32.partialorder %v3646, 0.0
        %v3744 = vand.u32 %v3646, 2147483648
        %v3745 = vsel %vm3743, %v3744, %v3742
        %v3746 = vrsqrt.pop %v3652
        %v3747 = vmul.f32 %v3652, %v3746
        %vm3748 = vcmp.eq.f32.partialorder %v3652, inf
        %v3749 = vsel %vm3748, %v3652, %v3747
        %vm3750 = vcmp.eq.f32.partialorder %v3652, 0.0
        %v3751 = vand.u32 %v3652, 2147483648
        %v3752 = vsel %vm3750, %v3751, %v3749
        %v3753 = vrsqrt.pop %v3658
        %v3754 = vmul.f32 %v3658, %v3753
        %vm3755 = vcmp.eq.f32.partialorder %v3658, inf
        %v3756 = vsel %vm3755, %v3658, %v3754
        %vm3757 = vcmp.eq.f32.partialorder %v3658, 0.0
        %v3758 = vand.u32 %v3658, 2147483648
        %v3759 = vsel %vm3757, %v3758, %v3756
        %v3760 = vrsqrt.pop %v3664
        %v3761 = vmul.f32 %v3664, %v3760
        %vm3762 = vcmp.eq.f32.partialorder %v3664, inf
        %v3763 = vsel %vm3762, %v3664, %v3761
        %vm3764 = vcmp.eq.f32.partialorder %v3664, 0.0
        %v3765 = vand.u32 %v3664, 2147483648
        %v3766 = vsel %vm3764, %v3765, %v3763
        %v3767 = vrsqrt.pop %v3670
        %v3768 = vmul.f32 %v3670, %v3767
        %vm3769 = vcmp.eq.f32.partialorder %v3670, inf
        %v3770 = vsel %vm3769, %v3670, %v3768
        %vm3771 = vcmp.eq.f32.partialorder %v3670, 0.0
        %v3772 = vand.u32 %v3670, 2147483648
        %v3773 = vsel %vm3771, %v3772, %v3770
        %v3774 = vrsqrt.pop %v3676
        %v3775 = vmul.f32 %v3676, %v3774
        %vm3776 = vcmp.eq.f32.partialorder %v3676, inf
        %v3777 = vsel %vm3776, %v3676, %v3775
        %vm3778 = vcmp.eq.f32.partialorder %v3676, 0.0
        %v3779 = vand.u32 %v3676, 2147483648
        %v3780 = vsel %vm3778, %v3779, %v3777
        %v3781 = vrsqrt.pop %v3682
        %v3782 = vmul.f32 %v3682, %v3781
        %vm3783 = vcmp.eq.f32.partialorder %v3682, inf
        %v3784 = vsel %vm3783, %v3682, %v3782
        %vm3785 = vcmp.eq.f32.partialorder %v3682, 0.0
        %v3786 = vand.u32 %v3682, 2147483648
        %v3787 = vsel %vm3785, %v3786, %v3784
        %v3788 = vrsqrt.pop %v3688
        %v3789 = vmul.f32 %v3688, %v3788
        %vm3790 = vcmp.eq.f32.partialorder %v3688, inf
        %v3791 = vsel %vm3790, %v3688, %v3789
        %vm3792 = vcmp.eq.f32.partialorder %v3688, 0.0
        %v3793 = vand.u32 %v3688, 2147483648
        %v3794 = vsel %vm3792, %v3793, %v3791
        %v3795 = vrsqrt.pop %v3694
        %v3796 = vmul.f32 %v3694, %v3795
        %vm3797 = vcmp.eq.f32.partialorder %v3694, inf
        %v3798 = vsel %vm3797, %v3694, %v3796
        %vm3799 = vcmp.eq.f32.partialorder %v3694, 0.0
        %v3800 = vand.u32 %v3694, 2147483648
        %v3801 = vsel %vm3799, %v3800, %v3798
        %v3802 = vrsqrt.pop %v3700
        %v3803 = vmul.f32 %v3700, %v3802
        %vm3804 = vcmp.eq.f32.partialorder %v3700, inf
        %v3805 = vsel %vm3804, %v3700, %v3803
        %vm3806 = vcmp.eq.f32.partialorder %v3700, 0.0
        %v3807 = vand.u32 %v3700, 2147483648
        %v3808 = vsel %vm3806, %v3807, %v3805
        %v3809 = vrsqrt.pop %v3706
        %v3810 = vmul.f32 %v3706, %v3809
        %vm3811 = vcmp.eq.f32.partialorder %v3706, inf
        %v3812 = vsel %vm3811, %v3706, %v3810
        %vm3813 = vcmp.eq.f32.partialorder %v3706, 0.0
        %v3814 = vand.u32 %v3706, 2147483648
        %v3815 = vsel %vm3813, %v3814, %v3812
        %v3816 = vrsqrt.pop %v3712
        %v3817 = vmul.f32 %v3712, %v3816
        %vm3818 = vcmp.eq.f32.partialorder %v3712, inf
        %v3819 = vsel %vm3818, %v3712, %v3817
        %vm3820 = vcmp.eq.f32.partialorder %v3712, 0.0
        %v3821 = vand.u32 %v3712, 2147483648
        %v3822 = vsel %vm3820, %v3821, %v3819
        %v3823 = vrsqrt.pop %v3718
        %v3824 = vmul.f32 %v3718, %v3823
        %vm3825 = vcmp.eq.f32.partialorder %v3718, inf
        %v3826 = vsel %vm3825, %v3718, %v3824
        %vm3827 = vcmp.eq.f32.partialorder %v3718, 0.0
        %v3828 = vand.u32 %v3718, 2147483648
        %v3829 = vsel %vm3827, %v3828, %v3826
        %v3830 = vrsqrt.pop %v3724
        %v3831 = vmul.f32 %v3724, %v3830
        %vm3832 = vcmp.eq.f32.partialorder %v3724, inf
        %v3833 = vsel %vm3832, %v3724, %v3831
        %vm3834 = vcmp.eq.f32.partialorder %v3724, 0.0
        %v3835 = vand.u32 %v3724, 2147483648
        %v3836 = vsel %vm3834, %v3835, %v3833
        %v3837 = vadd.f32 %v3634, 1.0
        %v3838 = vadd.f32 %v3640, 1.0
        %v3839 = vadd.f32 %v3646, 1.0
        %v3840 = vadd.f32 %v3652, 1.0
        %v3841 = vadd.f32 %v3658, 1.0
        %v3842 = vadd.f32 %v3664, 1.0
        %v3843 = vadd.f32 %v3670, 1.0
        %v3844 = vadd.f32 %v3676, 1.0
        %v3845 = vadd.f32 %v3682, 1.0
        %v3846 = vadd.f32 %v3688, 1.0
        %v3847 = vadd.f32 %v3694, 1.0
        %v3848 = vadd.f32 %v3700, 1.0
        %v3849 = vadd.f32 %v3706, 1.0
        %v3850 = vadd.f32 %v3712, 1.0
        %v3851 = vadd.f32 %v3718, 1.0
        %v3852 = vadd.f32 %v3724, 1.0
        %v3853 = vrcp.pop %v3837
        %v3854 = vrcp.pop %v3838
        %v3855 = vrcp.pop %v3839
        %v3856 = vrcp.pop %v3840
        %v3857 = vrcp.pop %v3841
        %v3858 = vrcp.pop %v3842
        %v3859 = vrcp.pop %v3843
        %v3860 = vrcp.pop %v3844
        %v3861 = vrcp.pop %v3845
        %v3862 = vrcp.pop %v3846
        %v3863 = vrcp.pop %v3847
        %v3864 = vrcp.pop %v3848
        %v3865 = vrcp.pop %v3849
        %v3866 = vrcp.pop %v3850
        %v3867 = vrcp.pop %v3851
        %v3868 = vrcp.pop %v3852
        %v3869 = vmul.f32 %v3731, %v3853
        %v3870 = vmul.f32 %v3738, %v3854
        %v3871 = vmul.f32 %v3745, %v3855
        %v3872 = vmul.f32 %v3752, %v3856
        %v3873 = vmul.f32 %v3759, %v3857
        %v3874 = vmul.f32 %v3766, %v3858
        %v3875 = vmul.f32 %v3773, %v3859
        %v3876 = vmul.f32 %v3780, %v3860
        %v3877 = vmul.f32 %v3787, %v3861
        %v3878 = vmul.f32 %v3794, %v3862
        %v3879 = vmul.f32 %v3801, %v3863
        %v3880 = vmul.f32 %v3808, %v3864
        %v3881 = vmul.f32 %v3815, %v3865
        %v3882 = vmul.f32 %v3822, %v3866
        %v3883 = vmul.f32 %v3829, %v3867
        %v3884 = vmul.f32 %v3836, %v3868
        %v3885 = vmul.f32 %v3597, %v3869
        %v3886 = vmul.f32 %v3598, %v3870
        %v3887 = vmul.f32 %v3599, %v3871
        %v3888 = vmul.f32 %v3600, %v3872
        %v3889 = vmul.f32 %v3601, %v3873
        %v3890 = vmul.f32 %v3602, %v3874
        %v3891 = vmul.f32 %v3603, %v3875
        %v3892 = vmul.f32 %v3604, %v3876
        %v3893 = vmul.f32 %v3605, %v3877
        %v3894 = vmul.f32 %v3606, %v3878
        %v3895 = vmul.f32 %v3607, %v3879
        %v3896 = vmul.f32 %v3608, %v3880
        %v3897 = vmul.f32 %v3609, %v3881
        %v3898 = vmul.f32 %v3610, %v3882
        %v3899 = vmul.f32 %v3611, %v3883
        %v3900 = vmul.f32 %v3612, %v3884
        %3901 = vst [vmem:[%s398] sm:$0xff] %v3885
        %3902 = vst [vmem:[%s398 + $0x8] sm:$0xff] %v3886
        %3903 = vst [vmem:[%s398 + $0x10] sm:$0xff] %v3887
        %3904 = vst [vmem:[%s398 + $0x18] sm:$0xff] %v3888
        %3905 = vst [vmem:[%s398 + $0x20] sm:$0xff] %v3889
        %3906 = vst [vmem:[%s398 + $0x28] sm:$0xff] %v3890
        %3907 = vst [vmem:[%s398 + $0x30] sm:$0xff] %v3891
        %3908 = vst [vmem:[%s398 + $0x38] sm:$0xff] %v3892
        %3909 = vst [vmem:[%s398 + $0x40] sm:$0xff] %v3893
        %3910 = vst [vmem:[%s398 + $0x48] sm:$0xff] %v3894
        %3911 = vst [vmem:[%s398 + $0x50] sm:$0xff] %v3895
        %3912 = vst [vmem:[%s398 + $0x58] sm:$0xff] %v3896
        %3913 = vst [vmem:[%s398 + $0x60] sm:$0xff] %v3897
        %3914 = vst [vmem:[%s398 + $0x68] sm:$0xff] %v3898
        %3915 = vst [vmem:[%s398 + $0x70] sm:$0xff] %v3899
        %3916 = vst [vmem:[%s398 + $0x78] sm:$0xff] %v3900
        %s3917 = sand.u32 %s90, 1
        %s3918 = sand.u32 %s90, 1
        %s3919 = smul.addr %s3918, 128
        %s3920 = scalar_lea.vmem [#allocation3], %s3919
        // Predicated region
        $region56: #{conv_capsule_layer_forward.1} parent=50 // pred_check
          %p3921 = pneg %p100
        $region57: #{conv_capsule_layer_forward.1} parent=50 // pred_check_branch
          %3923 = sbr.rel (%p3921) target = $region59
        $region58: #{conv_capsule_layer_forward.1} parent=50 // pred_region
          %s3924 = smul.u32 4, %s14
          %s3925 = smul.addr %s3924, 8
          %s3926 = scalar_lea.vmem %s3, %s3925
          // Predicated region
          $region60: #{conv_capsule_layer_forward.1} parent=58 // pred_check
            _
          $region61: #{conv_capsule_layer_forward.1} parent=58 // pred_check_branch
            %3928 = sbr.rel (0) target = $region63
          $region62: #{conv_capsule_layer_forward.1} parent=58 // pred_region
            // Predicated region
            $region64: #{conv_capsule_layer_forward.1} parent=62 // pred_check
              _
            $region65: #{conv_capsule_layer_forward.1} parent=62 // pred_check_branch
              %3930 = sbr.rel (0) target = $region67
            $region66: #{conv_capsule_layer_forward.1} parent=62 // pred_region
              loop: start=0, step=1, limit=1
              $region68: #{conv_capsule_layer_forward.1} parent=66 // loop_pre_header
                _
              $region69: #{conv_capsule_layer_forward.1} parent=66 // loop_header
                %s3932 = sphi 0, %s3936
                %p3933 = scmp.ge.s32.totalorder %s3932, 1
                %s3937 = sphi %s3920, %s3920
                %s3938 = sphi %s3926, %s3926
              $region70: #{conv_capsule_layer_forward.1} parent=66 // loop_header_branch
                %3935 = sbr.rel (%p3933) target = $region74
              $region71: #{conv_capsule_layer_forward.1} parent=66 // loop_body
                %v3939 = vld [vmem:[%s3937] sm:$0xff]
                %3940 = vst [vmem:[%s3938] sm:$0xff] %v3939
                %v3941 = vld [vmem:[%s3937 + $0x8] sm:$0xff]
                %3942 = vst [vmem:[%s3938 + $0x8] sm:$0xff] %v3941
                %v3943 = vld [vmem:[%s3937 + $0x10] sm:$0xff]
                %3944 = vst [vmem:[%s3938 + $0x10] sm:$0xff] %v3943
                %v3945 = vld [vmem:[%s3937 + $0x18] sm:$0xff]
                %3946 = vst [vmem:[%s3938 + $0x18] sm:$0xff] %v3945
                %v3947 = vld [vmem:[%s3937 + $0x20] sm:$0xff]
                %3948 = vst [vmem:[%s3938 + $0x40] sm:$0xff] %v3947
                %v3949 = vld [vmem:[%s3937 + $0x28] sm:$0xff]
                %3950 = vst [vmem:[%s3938 + $0x48] sm:$0xff] %v3949
                %v3951 = vld [vmem:[%s3937 + $0x30] sm:$0xff]
                %3952 = vst [vmem:[%s3938 + $0x50] sm:$0xff] %v3951
                %v3953 = vld [vmem:[%s3937 + $0x38] sm:$0xff]
                %3954 = vst [vmem:[%s3938 + $0x58] sm:$0xff] %v3953
                %v3955 = vld [vmem:[%s3937 + $0x40] sm:$0xff]
                %3956 = vst [vmem:[%s3938 + $0x80] sm:$0xff] %v3955
                %v3957 = vld [vmem:[%s3937 + $0x48] sm:$0xff]
                %3958 = vst [vmem:[%s3938 + $0x88] sm:$0xff] %v3957
                %v3959 = vld [vmem:[%s3937 + $0x50] sm:$0xff]
                %3960 = vst [vmem:[%s3938 + $0x90] sm:$0xff] %v3959
                %v3961 = vld [vmem:[%s3937 + $0x58] sm:$0xff]
                %3962 = vst [vmem:[%s3938 + $0x98] sm:$0xff] %v3961
                %v3963 = vld [vmem:[%s3937 + $0x60] sm:$0xff]
                %3964 = vst [vmem:[%s3938 + $0xc0] sm:$0xff] %v3963
                %v3965 = vld [vmem:[%s3937 + $0x68] sm:$0xff]
                %3966 = vst [vmem:[%s3938 + $0xc8] sm:$0xff] %v3965
                %v3967 = vld [vmem:[%s3937 + $0x70] sm:$0xff]
                %3968 = vst [vmem:[%s3938 + $0xd0] sm:$0xff] %v3967
                %v3969 = vld [vmem:[%s3937 + $0x78] sm:$0xff]
                %3970 = vst [vmem:[%s3938 + $0xd8] sm:$0xff] %v3969
              $region72: #{conv_capsule_layer_forward.1} parent=66 // loop_footer
                %s3936 = sadd.s32 1, %s3932
              $region73: #{conv_capsule_layer_forward.1} parent=66 // loop_footer_branch
                %3931 = sbr.rel target = $region69
              $region74: #{conv_capsule_layer_forward.1} parent=66 // loop_exit
                _
            $region67: #{conv_capsule_layer_forward.1} parent=62 // pred_fallthru
              _
            // Predicated region
            $region75: #{conv_capsule_layer_forward.1} parent=62 // pred_check
              _
            $region76: #{conv_capsule_layer_forward.1} parent=62 // pred_check_branch
              %3972 = sbr.rel target = $region78
            $region77: #{conv_capsule_layer_forward.1} parent=62 // pred_region
              _
            $region78: #{conv_capsule_layer_forward.1} parent=62 // pred_fallthru
              _
          $region63: #{conv_capsule_layer_forward.1} parent=58 // pred_fallthru
            _
          %3973 = vnop
        $region59: #{conv_capsule_layer_forward.1} parent=50 // pred_fallthru
          _
      $region51: #{conv_capsule_layer_forward.1} parent=5 // pred_fallthru
        _
      %p3974 = scmp.le.s32.totalorder 2, %s9
      // Predicated region
      $region79: #{conv_capsule_layer_forward.1} parent=5 // pred_check
        %p3975 = pneg %p3974
      $region80: #{conv_capsule_layer_forward.1} parent=5 // pred_check_branch
        %3977 = sbr.rel (%p3975) target = $region82
      $region81: #{conv_capsule_layer_forward.1} parent=5 // pred_region
        %s3978 = ssub.s32 %s9, 2
        // Predicated region
        $region83: #{conv_capsule_layer_forward.1} parent=81 // pred_check
          %p3979 = pneg %p106
        $region84: #{conv_capsule_layer_forward.1} parent=81 // pred_check_branch
          %3981 = sbr.rel (%p3979) target = $region86
        $region85: #{conv_capsule_layer_forward.1} parent=81 // pred_region
          %s3982 = sand.u32 %s91, 1
          %s3983 = sand.u32 %s91, 1
          %s3984 = smul.addr %s3983, 128
          %s3985 = scalar_lea.vmem [#allocation3], %s3984
        $region86: #{conv_capsule_layer_forward.1} parent=81 // pred_fallthru
          _
      $region82: #{conv_capsule_layer_forward.1} parent=5 // pred_fallthru
        _
    $region6: #{conv_capsule_layer_forward.1} parent=1 // loop_footer
      %s13 = sadd.s32 1, %s9
    $region7: #{conv_capsule_layer_forward.1} parent=1 // loop_footer_branch
      %8 = sbr.rel target = $region3
    $region8: #{conv_capsule_layer_forward.1} parent=1 // loop_exit
      _

</llo_original>
